<compile_context>
chip_gen: v7x
topology: tpu7x:2x2x1
jax: 0.10.0
libtpu: 0.0.40
codegen_flags: <defaults>
</compile_context>

<pallas_src>
import functools

import jax
import jax.numpy as jnp
from jax.experimental import pallas as pl
from jax.experimental.pallas import tpu as pltpu

LANE = 128
TM_MAX = 512        # row tile (points per grid step); VMEM use stays < ~4 MB even at 512


def _round_up(n, m):
    return (n + m - 1) // m * m


# ----------------------------------------------------------------------------
# Kernel 1: fused chain of 1x1 convs (+folded BN, optional ReLU) + global max over points.
#   refs = (x, w_1, t_1, ..., w_L, t_L, out, max_scratch)
#   Per-batch weights have a 3-D block (1, K, C); shared weights a 2-D block (K, C).
# ----------------------------------------------------------------------------
def _chain_maxpool_kernel(*refs, n_layers, relus, n_valid, tm):
    x_ref = refs[0]
    o_ref = refs[1 + 2 * n_layers]
    max_sc = refs[2 + 2 * n_layers]

    n = pl.program_id(1)
    n_last = pl.num_programs(1) - 1

    @pl.when(n == 0)
    def _():
        max_sc[...] = jnp.full_like(max_sc, -jnp.inf)

    y = x_ref[0]                                           # (tm, K) bf16
    for l in range(n_layers):
        w_ref = refs[1 + 2 * l]
        t_ref = refs[2 + 2 * l]
        w = w_ref[0] if len(w_ref.shape) == 3 else w_ref[...]
        y = jnp.dot(y, w, preferred_element_type=jnp.float32) + t_ref[...]
        if relus[l]:
            y = jnp.maximum(y, 0.0)
        if l + 1 < n_layers:
            y = y.astype(jnp.bfloat16)                     # back to MXU dtype

    def rowchunk_max(v):                                   # (tm, C) -> (8, C), VPU only
        m = v[0:8, :]
        for i in range(1, tm // 8):
            m = jnp.maximum(m, v[i * 8:(i + 1) * 8, :])
        return m

    if n_valid % tm != 0:
        # Padded point rows exist only in the last tile; mask them with -inf there.
        @pl.when(n != n_last)
        def _():
            max_sc[...] = jnp.maximum(max_sc[...], rowchunk_max(y))

        @pl.when(n == n_last)
        def _():
            row = jax.lax.broadcasted_iota(jnp.int32, y.shape, 0) + n * tm
            ym = jnp.where(row < n_valid, y, -jnp.inf)
            max_sc[...] = jnp.maximum(max_sc[...], rowchunk_max(ym))
    else:
        max_sc[...] = jnp.maximum(max_sc[...], rowchunk_max(y))

    @pl.when(n == n_last)
    def _():
        o_ref[0] = jnp.max(max_sc[...], axis=0, keepdims=True)   # single sublane collapse


def conv_chain_maxpool(x, layers, relus, n_valid):
    """x: (B, Np, K) bf16 (K, Np pre-padded).  layers: dicts with 'w' ((K,C) shared or
    (B,K,C) per-batch) and 't'.  Returns (B, C_last) f32 global-max-pooled features."""
    B, Np, K = x.shape
    tm = min(TM_MAX, Np)
    assert Np % tm == 0 and tm % 8 == 0
    n_layers = len(layers)

    args = [x.astype(jnp.bfloat16)]
    in_specs = [pl.BlockSpec((1, tm, K), lambda b, n: (b, n, 0))]
    prev = K
    flops = 0
    bytes_acc = B * Np * K * 2
    for layer in layers:
        w, t = layer["w"], layer["t"]
        if w.ndim == 3:
            Kw, C = w.shape[1], w.shape[2]
        else:
            Kw, C = w.shape
        Cp = _round_up(C, LANE)
        if w.ndim == 3:                                   # per-batch folded weight
            w = jnp.pad(w, ((0, 0), (0, prev - Kw), (0, Cp - C)))
            in_specs.append(pl.BlockSpec((1, prev, Cp), lambda b, n: (b, 0, 0)))
            bytes_acc += B * prev * Cp * 2
        else:                                             # shared weight, resident in VMEM
            w = jnp.pad(w, ((0, prev - Kw), (0, Cp - C)))
            in_specs.append(pl.BlockSpec((prev, Cp), lambda b, n: (0, 0)))
            bytes_acc += prev * Cp * 2
        t = jnp.pad(t, (0, Cp - C)).reshape(1, Cp)
        args += [w.astype(jnp.bfloat16), t.astype(jnp.float32)]
        in_specs.append(pl.BlockSpec((1, Cp), lambda b, n: (0, 0)))
        flops += 2 * B * Np * prev * Cp
        prev = Cp
    c_out = prev
    bytes_acc += B * c_out * 4

    out = pl.pallas_call(
        functools.partial(_chain_maxpool_kernel, n_layers=n_layers,
                          relus=tuple(relus), n_valid=n_valid, tm=tm),
        out_shape=jax.ShapeDtypeStruct((B, 1, c_out), jnp.float32),
        grid=(B, Np // tm),
        in_specs=in_specs,
        out_specs=pl.BlockSpec((1, 1, c_out), lambda b, n: (b, 0, 0)),
        scratch_shapes=[pltpu.VMEM((8, c_out), jnp.float32)],
        compiler_params=pltpu.CompilerParams(
            dimension_semantics=("parallel", "arbitrary")),
        cost_estimate=pl.CostEstimate(flops=flops, transcendentals=0,
                                      bytes_accessed=bytes_acc),
    )(*args)
    return out.reshape(B, c_out)


# ----------------------------------------------------------------------------
# Kernel 2: per-batch-weight 1x1 conv (learned input transform folded into the weight).
#   Output must materialize (feature-STN consumes it), so this stays a standalone kernel.
# ----------------------------------------------------------------------------
def _batched_affine_kernel(x_ref, w_ref, b_ref, o_ref, *, relu):
    y = jnp.dot(x_ref[0], w_ref[0], preferred_element_type=jnp.float32)
    y = y + b_ref[...]
    if relu:
        y = jnp.maximum(y, 0.0)
    o_ref[0] = y.astype(o_ref.dtype)


def batched_pointwise_conv(x, w_b, shift, relu):
    """x: (B, Np, Kx), w_b: (B, Kw, C) per-batch folded weight -> (B, Np, Cp) bf16."""
    B, Np, Kx = x.shape
    _, Kw, C = w_b.shape
    if Kx > Kw:
        w_b = jnp.pad(w_b, ((0, 0), (0, Kx - Kw), (0, 0)))
    Cp = _round_up(C, LANE)
    if Cp > C:
        w_b = jnp.pad(w_b, ((0, 0), (0, 0), (0, Cp - C)))
        shift = jnp.pad(shift, (0, Cp - C))
    tm = min(TM_MAX, Np)
    assert Np % tm == 0
    cost = pl.CostEstimate(flops=2 * B * Np * Kx * Cp, transcendentals=0,
                           bytes_accessed=B * Np * Kx * 2 + B * Kx * Cp * 2
                           + B * Np * Cp * 2 + 4 * Cp)
    return pl.pallas_call(
        functools.partial(_batched_affine_kernel, relu=relu),
        out_shape=jax.ShapeDtypeStruct((B, Np, Cp), jnp.bfloat16),
        grid=(B, Np // tm),
        in_specs=[
            pl.BlockSpec((1, tm, Kx), lambda b, n: (b, n, 0)),
            pl.BlockSpec((1, Kx, Cp), lambda b, n: (b, 0, 0)),
            pl.BlockSpec((1, Cp), lambda b, n: (0, 0)),
        ],
        out_specs=pl.BlockSpec((1, tm, Cp), lambda b, n: (b, n, 0)),
        compiler_params=pltpu.CompilerParams(
            dimension_semantics=("parallel", "parallel")),
        cost_estimate=cost,
    )(x.astype(jnp.bfloat16), w_b.astype(jnp.bfloat16),
      shift.reshape(1, Cp).astype(jnp.float32))


# ----------------------------------------------------------------------------
# Model glue (tiny FC layers + transform folds run as plain JAX per perf review)
# ----------------------------------------------------------------------------
def _fc(x, layer, relu):
    y = x @ layer["w"] + layer["t"]
    return jnp.maximum(y, 0.0) if relu else y


def stn_forward(x, p, k, n_valid):
    """STN3d (k=3) / STNkd (k=64): (B, Np, C_pad) -> (B, k, k). Conv chain fully fused."""
    B = x.shape[0]
    g = conv_chain_maxpool(x, [p["conv1"], p["conv2"], p["conv3"]],
                           relus=(True, True, True), n_valid=n_valid)   # (B, 1024)
    g = _fc(g, p["fc1"], relu=True)                      # -> 512 (+BN)
    g = _fc(g, p["fc2"], relu=True)                      # -> 256 (+BN)
    g = _fc(g, p["fc3"], relu=False)                     # -> k*k
    return g.reshape(B, k, k) + jnp.eye(k, dtype=g.dtype)


def encoder_forward(x_bcn, p):
    """PointNetEncoder(global_feat=True, feature_transform=True)."""
    B, D, N = x_bcn.shape
    tm = min(TM_MAX, _round_up(N, 8))
    Np = _round_up(N, tm)
    Dp = _round_up(D, 8)                                  # sublane-align the raw channels
    x_bnc = jnp.transpose(x_bcn, (0, 2, 1)).astype(jnp.bfloat16)       # (B, N, D)
    x_bnc = jnp.pad(x_bnc, ((0, 0), (0, Np - N), (0, Dp - D)))         # (B, Np, Dp)

    trans = stn_forward(x_bnc, p["stn"], 3, n_valid=N)                 # (B, 3, 3)

    # Fold the 3x3 input transform (acts on xyz only) into conv1's weight.
    w1, t1 = p["conv1"]["w"], p["conv1"]["t"]                          # (D, 64), (64,)
    w1_pts = jnp.einsum("bij,jc->bic", trans, w1[:3])                  # (B, 3, 64)
    if D > 3:
        w1_b = jnp.concatenate(
            [w1_pts, jnp.broadcast_to(w1[3:], (B, D - 3, w1.shape[1]))], axis=1)
    else:
        w1_b = w1_pts
    h = batched_pointwise_conv(x_bnc, w1_b, t1, relu=True)             # (B, Np, 128)

    trans_feat = stn_forward(h, p["fstn"], 64, n_valid=N)              # (B, 64, 64)

    # Fold the 64x64 feature transform into conv2's weight; fuse conv2->conv3->maxpool.
    w2, t2 = p["conv2"]["w"], p["conv2"]["t"]                          # (64, 128), (128,)
    w2_b = jnp.einsum("bij,jc->bic", trans_feat, w2)                   # (B, 64, 128)
    g = conv_chain_maxpool(h, [dict(w=w2_b, t=t2), p["conv3"]],
                           relus=(True, False), n_valid=N)             # (B, 1024)
    return g, trans, trans_feat


def cls_head_forward(g, p):
    h = _fc(g, p["fc1"], relu=True)          # 1024 -> 512 (+BN)
    # dropout is identity in eval mode
    h = _fc(h, p["fc2"], relu=True)          # 512 -> 256 (+BN)
    logits = _fc(h, p["fc3"], relu=False)    # 256 -> k
    # TODO(synk): ClsHead definition not provided; standard PointNet applies log_softmax.
    return jax.nn.log_softmax(logits, axis=1)


@jax.jit
def get_model_forward(x, params):
    g, trans, trans_feat = encoder_forward(x, params["feat"])
    logits = cls_head_forward(g, params["head"])
    return logits, trans, trans_feat


# ----------------------------------------------------------------------------
# Deterministic parameter init (eval-mode BN folded: scale into w, shift kept)
# ----------------------------------------------------------------------------
def build_params(key, channel=6, k=40):
    keys = iter(jax.random.split(key, 64))

    def nk():
        return next(keys)

    def init_affine(kk, cin, cout):
        kw, kb = jax.random.split(kk)
        w = jax.random.normal(kw, (cin, cout), jnp.float32) / jnp.sqrt(cin * 1.0)
        b = jax.random.normal(kb, (cout,), jnp.float32) * 0.02
        return w, b

    def init_bn(kk, c):
        k1, k2, k3, k4 = jax.random.split(kk, 4)
        gamma = 1.0 + 0.1 * jax.random.normal(k1, (c,), jnp.float32)
        beta = 0.1 * jax.random.normal(k2, (c,), jnp.float32)
        mean = 0.05 * jax.random.normal(k3, (c,), jnp.float32)
        var = 1.0 + 0.1 * jnp.abs(jax.random.normal(k4, (c,), jnp.float32))
        return gamma, beta, mean, var

    def conv_bn(cin, cout):
        w, b = init_affine(nk(), cin, cout)
        gamma, beta, mean, var = init_bn(nk(), cout)
        s = gamma / jnp.sqrt(var + 1e-5)
        return dict(w=w * s[None, :], t=(b - mean) * s + beta)   # scale folded into w

    def lin(cin, cout):
        w, b = init_affine(nk(), cin, cout)
        return dict(w=w, t=b)

    def stn_params(cin, kk):
        return dict(
            conv1=conv_bn(cin, 64), conv2=conv_bn(64, 128), conv3=conv_bn(128, 1024),
            fc1=conv_bn(1024, 512), fc2=conv_bn(512, 256), fc3=lin(256, kk * kk),
        )

    feat = dict(
        stn=stn_params(channel, 3),
        fstn=stn_params(64, 64),
        conv1=conv_bn(channel, 64),
        conv2=conv_bn(64, 128),
        conv3=conv_bn(128, 1024),
    )
    head = dict(fc1=conv_bn(1024, 512), fc2=conv_bn(512, 256), fc3=lin(256, k))
    return dict(feat=feat, head=head)


# ----------------------------------------------------------------------------

if __name__ == "__main__":
    key = jax.random.PRNGKey(0)
    k_param, k_data = jax.random.split(key)

    # normal_channel=True -> 6 input channels; N=30 also exercises the padded-row mask path.
    B, C, N, K_CLS = 2, 6, 30, 40
    params = build_params(k_param, channel=C, k=K_CLS)
    x = jax.random.normal(k_data, (B, C, N), jnp.float32)   # PyTorch NCW layout

    logits, trans, trans_feat = get_model_forward(x, params)
    jax.block_until_ready((logits, trans, trans_feat))

    assert logits.shape == (B, K_CLS)
    assert trans.shape == (B, 3, 3)
    assert trans_feat.shape == (B, 64, 64)
    assert bool(jnp.all(jnp.isfinite(logits)))
    assert bool(jnp.all(jnp.isfinite(trans)))
    assert bool(jnp.all(jnp.isfinite(trans_feat)))
    print("KERNEL_OK")
</pallas_src>

<mosaic_0001>
module attributes {stable_mosaic.version = 11 : i64} {
  func.func @_chain_maxpool_kernel(%arg0: i32, %arg1: i32, %arg2: memref<1x32x8xbf16, #tpu.memory_space<vmem>>, %arg3: memref<8x128xbf16, #tpu.memory_space<vmem>>, %arg4: memref<1x128xf32, #tpu.memory_space<vmem>>, %arg5: memref<128x128xbf16, #tpu.memory_space<vmem>>, %arg6: memref<1x128xf32, #tpu.memory_space<vmem>>, %arg7: memref<128x1024xbf16, #tpu.memory_space<vmem>>, %arg8: memref<1x1024xf32, #tpu.memory_space<vmem>>, %arg9: memref<1x1x1024xf32, #tpu.memory_space<vmem>>, %arg10: memref<8x1024xf32, #tpu.memory_space<vmem>>) attributes {dimension_semantics = [#tpu.dimension_semantics<parallel>, #tpu.dimension_semantics<arbitrary>], iteration_bounds = array<i64: 2, 1>, scalar_prefetch = 0 : i64, scratch_operands = 1 : i64, tpu.core_type = #tpu.core_type<tc>, window_params = [{transform_indices = @transform_0, window_bounds = array<i64: 1, 32, 8>}, {pipeline_mode = #tpu.pipeline_mode<synchronous>, transform_indices = @transform_1, window_bounds = array<i64: 8, 128>}, {pipeline_mode = #tpu.pipeline_mode<synchronous>, transform_indices = @transform_2, window_bounds = array<i64: 1, 128>}, {pipeline_mode = #tpu.pipeline_mode<synchronous>, transform_indices = @transform_3, window_bounds = array<i64: 128, 128>}, {pipeline_mode = #tpu.pipeline_mode<synchronous>, transform_indices = @transform_4, window_bounds = array<i64: 1, 128>}, {pipeline_mode = #tpu.pipeline_mode<synchronous>, transform_indices = @transform_5, window_bounds = array<i64: 128, 1024>}, {pipeline_mode = #tpu.pipeline_mode<synchronous>, transform_indices = @transform_6, window_bounds = array<i64: 1, 1024>}, {transform_indices = @transform_7, window_bounds = array<i64: 1, 1, 1024>}]} {
    %c0_i32 = arith.constant 0 : i32
    %0 = arith.cmpi eq, %arg1, %c0_i32 : i32
    %1 = arith.extui %0 : i1 to i32
    %c0_i32_0 = arith.constant 0 : i32
    %2 = arith.cmpi ne, %1, %c0_i32_0 : i32
    scf.if %2 {
      %cst_26 = arith.constant 0xFF800000 : f32
      %37 = vector.broadcast %cst_26 : f32 to vector<8x1024xf32>
      %c0_27 = arith.constant 0 : index
      %c0_28 = arith.constant 0 : index
      %38 = vector.load %arg10[%c0_27, %c0_28] : memref<8x1024xf32, #tpu.memory_space<vmem>>, vector<8x1024xf32>
      tpu.vector_store %arg10[%c0_27, %c0_28], %37 {strides = array<i32>} : memref<8x1024xf32, #tpu.memory_space<vmem>>, vector<8x1024xf32>,
    } else {
    }
    %c0 = arith.constant 0 : index
    %c0_1 = arith.constant 0 : index
    %c0_2 = arith.constant 0 : index
    %3 = vector.load %arg2[%c0, %c0_1, %c0_2] : memref<1x32x8xbf16, #tpu.memory_space<vmem>>, vector<1x32x8xbf16>
    %4 = vector.shape_cast %3 : vector<1x32x8xbf16> to vector<32x8xbf16>
    %c0_3 = arith.constant 0 : index
    %c0_4 = arith.constant 0 : index
    %5 = vector.load %arg3[%c0_3, %c0_4] : memref<8x128xbf16, #tpu.memory_space<vmem>>, vector<8x128xbf16>
    %cst = arith.constant dense<0.000000e+00> : vector<32x128xf32>
    %6 = tpu.matmul %4, %5, %cst {dimension_numbers = #tpu.dot_dimension_numbers<[1], [0], [0], [1], [0, 0, 1, 1], [], []>} : vector<32x8xbf16>, vector<8x128xbf16>, vector<32x128xf32> -> vector<32x128xf32>
    %c0_5 = arith.constant 0 : index
    %c0_6 = arith.constant 0 : index
    %7 = vector.load %arg4[%c0_5, %c0_6] : memref<1x128xf32, #tpu.memory_space<vmem>>, vector<1x128xf32>
    %8 = vector.broadcast %7 : vector<1x128xf32> to vector<32x128xf32>
    %9 = arith.addf %6, %8 : vector<32x128xf32>
    %cst_7 = arith.constant 0.000000e+00 : f32
    %10 = vector.broadcast %cst_7 : f32 to vector<32x128xf32>
    %11 = arith.maximumf %9, %10 : vector<32x128xf32>
    %12 = arith.truncf %11 : vector<32x128xf32> to vector<32x128xbf16>
    %c0_8 = arith.constant 0 : index
    %c0_9 = arith.constant 0 : index
    %13 = vector.load %arg5[%c0_8, %c0_9] : memref<128x128xbf16, #tpu.memory_space<vmem>>, vector<128x128xbf16>
    %cst_10 = arith.constant dense<0.000000e+00> : vector<32x128xf32>
    %14 = tpu.matmul %12, %13, %cst_10 {dimension_numbers = #tpu.dot_dimension_numbers<[1], [0], [0], [1], [0, 0, 1, 1], [], []>} : vector<32x128xbf16>, vector<128x128xbf16>, vector<32x128xf32> -> vector<32x128xf32>
    %c0_11 = arith.constant 0 : index
    %c0_12 = arith.constant 0 : index
    %15 = vector.load %arg6[%c0_11, %c0_12] : memref<1x128xf32, #tpu.memory_space<vmem>>, vector<1x128xf32>
    %16 = vector.broadcast %15 : vector<1x128xf32> to vector<32x128xf32>
    %17 = arith.addf %14, %16 : vector<32x128xf32>
    %cst_13 = arith.constant 0.000000e+00 : f32
    %18 = vector.broadcast %cst_13 : f32 to vector<32x128xf32>
    %19 = arith.maximumf %17, %18 : vector<32x128xf32>
    %20 = arith.truncf %19 : vector<32x128xf32> to vector<32x128xbf16>
    %c0_14 = arith.constant 0 : index
    %c0_15 = arith.constant 0 : index
    %21 = vector.load %arg7[%c0_14, %c0_15] : memref<128x1024xbf16, #tpu.memory_space<vmem>>, vector<128x1024xbf16>
    %cst_16 = arith.constant dense<0.000000e+00> : vector<32x1024xf32>
    %22 = tpu.matmul %20, %21, %cst_16 {dimension_numbers = #tpu.dot_dimension_numbers<[1], [0], [0], [1], [0, 0, 1, 1], [], []>} : vector<32x128xbf16>, vector<128x1024xbf16>, vector<32x1024xf32> -> vector<32x1024xf32>
    %c0_17 = arith.constant 0 : index
    %c0_18 = arith.constant 0 : index
    %23 = vector.load %arg8[%c0_17, %c0_18] : memref<1x1024xf32, #tpu.memory_space<vmem>>, vector<1x1024xf32>
    %24 = vector.broadcast %23 : vector<1x1024xf32> to vector<32x1024xf32>
    %25 = arith.addf %22, %24 : vector<32x1024xf32>
    %cst_19 = arith.constant 0.000000e+00 : f32
    %26 = vector.broadcast %cst_19 : f32 to vector<32x1024xf32>
    %27 = arith.maximumf %25, %26 : vector<32x1024xf32>
    %c0_i32_20 = arith.constant 0 : i32
    %28 = arith.cmpi ne, %arg1, %c0_i32_20 : i32
    %29 = arith.extui %28 : i1 to i32
    %c0_i32_21 = arith.constant 0 : i32
    %30 = arith.cmpi ne, %29, %c0_i32_21 : i32
    scf.if %30 {
      %c0_26 = arith.constant 0 : index
      %c0_27 = arith.constant 0 : index
      %37 = vector.load %arg10[%c0_26, %c0_27] : memref<8x1024xf32, #tpu.memory_space<vmem>>, vector<8x1024xf32>
      %38 = vector.extract_strided_slice %27 {offsets = [0, 0], sizes = [8, 1024], strides = [1, 1]} : vector<32x1024xf32> to vector<8x1024xf32>
      %39 = vector.extract_strided_slice %27 {offsets = [8, 0], sizes = [8, 1024], strides = [1, 1]} : vector<32x1024xf32> to vector<8x1024xf32>
      %40 = arith.maximumf %38, %39 : vector<8x1024xf32>
      %41 = vector.extract_strided_slice %27 {offsets = [16, 0], sizes = [8, 1024], strides = [1, 1]} : vector<32x1024xf32> to vector<8x1024xf32>
      %42 = arith.maximumf %40, %41 : vector<8x1024xf32>
      %43 = vector.extract_strided_slice %27 {offsets = [24, 0], sizes = [8, 1024], strides = [1, 1]} : vector<32x1024xf32> to vector<8x1024xf32>
      %44 = arith.maximumf %42, %43 : vector<8x1024xf32>
      %45 = arith.maximumf %37, %44 : vector<8x1024xf32>
      %c0_28 = arith.constant 0 : index
      %c0_29 = arith.constant 0 : index
      %46 = vector.load %arg10[%c0_28, %c0_29] : memref<8x1024xf32, #tpu.memory_space<vmem>>, vector<8x1024xf32>
      tpu.vector_store %arg10[%c0_28, %c0_29], %45 {strides = array<i32>} : memref<8x1024xf32, #tpu.memory_space<vmem>>, vector<8x1024xf32>,
    } else {
    }
    %c0_i32_22 = arith.constant 0 : i32
    %31 = arith.cmpi eq, %arg1, %c0_i32_22 : i32
    %32 = arith.extui %31 : i1 to i32
    %c0_i32_23 = arith.constant 0 : i32
    %33 = arith.cmpi ne, %32, %c0_i32_23 : i32
    scf.if %33 {
      %37 = tpu.iota {dimensions = array<i32: 0>} : vector<32x1024xi32>
      %c32_i32 = arith.constant 32 : i32
      %38 = arith.muli %arg1, %c32_i32 : i32
      %39 = vector.broadcast %38 : i32 to vector<32x1024xi32>
      %40 = arith.addi %37, %39 : vector<32x1024xi32>
      %c30_i32 = arith.constant 30 : i32
      %41 = vector.broadcast %c30_i32 : i32 to vector<32x1024xi32>
      %42 = arith.cmpi slt, %40, %41 : vector<32x1024xi32>
      %cst_26 = arith.constant 0xFF800000 : f32
      %43 = vector.broadcast %cst_26 : f32 to vector<32x1024xf32>
      %44 = arith.select %42, %27, %43 : vector<32x1024xi1>, vector<32x1024xf32>
      %c0_27 = arith.constant 0 : index
      %c0_28 = arith.constant 0 : index
      %45 = vector.load %arg10[%c0_27, %c0_28] : memref<8x1024xf32, #tpu.memory_space<vmem>>, vector<8x1024xf32>
      %46 = vector.extract_strided_slice %44 {offsets = [0, 0], sizes = [8, 1024], strides = [1, 1]} : vector<32x1024xf32> to vector<8x1024xf32>
      %47 = vector.extract_strided_slice %44 {offsets = [8, 0], sizes = [8, 1024], strides = [1, 1]} : vector<32x1024xf32> to vector<8x1024xf32>
      %48 = arith.maximumf %46, %47 : vector<8x1024xf32>
      %49 = vector.extract_strided_slice %44 {offsets = [16, 0], sizes = [8, 1024], strides = [1, 1]} : vector<32x1024xf32> to vector<8x1024xf32>
      %50 = arith.maximumf %48, %49 : vector<8x1024xf32>
      %51 = vector.extract_strided_slice %44 {offsets = [24, 0], sizes = [8, 1024], strides = [1, 1]} : vector<32x1024xf32> to vector<8x1024xf32>
      %52 = arith.maximumf %50, %51 : vector<8x1024xf32>
      %53 = arith.maximumf %45, %52 : vector<8x1024xf32>
      %c0_29 = arith.constant 0 : index
      %c0_30 = arith.constant 0 : index
      %54 = vector.load %arg10[%c0_29, %c0_30] : memref<8x1024xf32, #tpu.memory_space<vmem>>, vector<8x1024xf32>
      tpu.vector_store %arg10[%c0_29, %c0_30], %53 {strides = array<i32>} : memref<8x1024xf32, #tpu.memory_space<vmem>>, vector<8x1024xf32>,
    } else {
    }
    %c0_i32_24 = arith.constant 0 : i32
    %34 = arith.cmpi eq, %arg1, %c0_i32_24 : i32
    %35 = arith.extui %34 : i1 to i32
    %c0_i32_25 = arith.constant 0 : i32
    %36 = arith.cmpi ne, %35, %c0_i32_25 : i32
    scf.if %36 {
      %c0_26 = arith.constant 0 : index
      %c0_27 = arith.constant 0 : index
      %37 = vector.load %arg10[%c0_26, %c0_27] : memref<8x1024xf32, #tpu.memory_space<vmem>>, vector<8x1024xf32>
      %cst_28 = arith.constant dense<0xFF800000> : vector<1024xf32>
      %38 = vector.multi_reduction <maximumf>, %37, %cst_28 [0] : vector<8x1024xf32> to vector<1024xf32>
      %39 = vector.shape_cast %38 : vector<1024xf32> to vector<1x1024xf32>
      %c0_29 = arith.constant 0 : index
      %c0_30 = arith.constant 0 : index
      %c0_31 = arith.constant 0 : index
      %40 = vector.load %arg9[%c0_29, %c0_30, %c0_31] : memref<1x1x1024xf32, #tpu.memory_space<vmem>>, vector<1x1x1024xf32>
      %41 = vector.shape_cast %40 : vector<1x1x1024xf32> to vector<1x1024xf32>
      %42 = vector.shape_cast %39 : vector<1x1024xf32> to vector<1x1x1024xf32>
      tpu.vector_store %arg9[%c0_29, %c0_30, %c0_31], %42 {strides = array<i32>} : memref<1x1x1024xf32, #tpu.memory_space<vmem>>, vector<1x1x1024xf32>,
    } else {
    }
    return
  }
  func.func @transform_0(%arg0: i32, %arg1: i32) -> (i32, i32, i32) {
    %c0_i32 = arith.constant 0 : i32
    %c0_i32_0 = arith.constant 0 : i32
    return %arg0, %arg1, %c0_i32 : i32, i32, i32
  }
  func.func @transform_1(%arg0: i32, %arg1: i32) -> (i32, i32) {
    %c0_i32 = arith.constant 0 : i32
    %c0_i32_0 = arith.constant 0 : i32
    %c0_i32_1 = arith.constant 0 : i32
    return %c0_i32, %c0_i32_0 : i32, i32
  }
  func.func @transform_2(%arg0: i32, %arg1: i32) -> (i32, i32) {
    %c0_i32 = arith.constant 0 : i32
    %c0_i32_0 = arith.constant 0 : i32
    %c0_i32_1 = arith.constant 0 : i32
    return %c0_i32, %c0_i32_0 : i32, i32
  }
  func.func @transform_3(%arg0: i32, %arg1: i32) -> (i32, i32) {
    %c0_i32 = arith.constant 0 : i32
    %c0_i32_0 = arith.constant 0 : i32
    %c0_i32_1 = arith.constant 0 : i32
    return %c0_i32, %c0_i32_0 : i32, i32
  }
  func.func @transform_4(%arg0: i32, %arg1: i32) -> (i32, i32) {
    %c0_i32 = arith.constant 0 : i32
    %c0_i32_0 = arith.constant 0 : i32
    %c0_i32_1 = arith.constant 0 : i32
    return %c0_i32, %c0_i32_0 : i32, i32
  }
  func.func @transform_5(%arg0: i32, %arg1: i32) -> (i32, i32) {
    %c0_i32 = arith.constant 0 : i32
    %c0_i32_0 = arith.constant 0 : i32
    %c0_i32_1 = arith.constant 0 : i32
    return %c0_i32, %c0_i32_0 : i32, i32
  }
  func.func @transform_6(%arg0: i32, %arg1: i32) -> (i32, i32) {
    %c0_i32 = arith.constant 0 : i32
    %c0_i32_0 = arith.constant 0 : i32
    %c0_i32_1 = arith.constant 0 : i32
    return %c0_i32, %c0_i32_0 : i32, i32
  }
  func.func @transform_7(%arg0: i32, %arg1: i32) -> (i32, i32, i32) {
    %c0_i32 = arith.constant 0 : i32
    %c0_i32_0 = arith.constant 0 : i32
    %c0_i32_1 = arith.constant 0 : i32
    return %arg0, %c0_i32, %c0_i32_0 : i32, i32, i32
  }
}

module attributes {stable_mosaic.version = 11 : i64} {
  func.func @_batched_affine_kernel(%arg0: i32, %arg1: i32, %arg2: memref<1x32x8xbf16, #tpu.memory_space<vmem>>, %arg3: memref<1x8x128xbf16, #tpu.memory_space<vmem>>, %arg4: memref<1x128xf32, #tpu.memory_space<vmem>>, %arg5: memref<1x32x128xbf16, #tpu.memory_space<vmem>>) attributes {dimension_semantics = [#tpu.dimension_semantics<parallel>, #tpu.dimension_semantics<parallel>], iteration_bounds = array<i64: 2, 1>, scalar_prefetch = 0 : i64, scratch_operands = 0 : i64, tpu.core_type = #tpu.core_type<tc>, window_params = [{transform_indices = @transform_0, window_bounds = array<i64: 1, 32, 8>}, {transform_indices = @transform_1, window_bounds = array<i64: 1, 8, 128>}, {pipeline_mode = #tpu.pipeline_mode<synchronous>, transform_indices = @transform_2, window_bounds = array<i64: 1, 128>}, {transform_indices = @transform_3, window_bounds = array<i64: 1, 32, 128>}]} {
    %c0 = arith.constant 0 : index
    %c0_0 = arith.constant 0 : index
    %c0_1 = arith.constant 0 : index
    %0 = vector.load %arg2[%c0, %c0_0, %c0_1] : memref<1x32x8xbf16, #tpu.memory_space<vmem>>, vector<1x32x8xbf16>
    %1 = vector.shape_cast %0 : vector<1x32x8xbf16> to vector<32x8xbf16>
    %c0_2 = arith.constant 0 : index
    %c0_3 = arith.constant 0 : index
    %c0_4 = arith.constant 0 : index
    %2 = vector.load %arg3[%c0_2, %c0_3, %c0_4] : memref<1x8x128xbf16, #tpu.memory_space<vmem>>, vector<1x8x128xbf16>
    %3 = vector.shape_cast %2 : vector<1x8x128xbf16> to vector<8x128xbf16>
    %cst = arith.constant dense<0.000000e+00> : vector<32x128xf32>
    %4 = tpu.matmul %1, %3, %cst {dimension_numbers = #tpu.dot_dimension_numbers<[1], [0], [0], [1], [0, 0, 1, 1], [], []>} : vector<32x8xbf16>, vector<8x128xbf16>, vector<32x128xf32> -> vector<32x128xf32>
    %c0_5 = arith.constant 0 : index
    %c0_6 = arith.constant 0 : index
    %5 = vector.load %arg4[%c0_5, %c0_6] : memref<1x128xf32, #tpu.memory_space<vmem>>, vector<1x128xf32>
    %6 = vector.broadcast %5 : vector<1x128xf32> to vector<32x128xf32>
    %7 = arith.addf %4, %6 : vector<32x128xf32>
    %cst_7 = arith.constant 0.000000e+00 : f32
    %8 = vector.broadcast %cst_7 : f32 to vector<32x128xf32>
    %9 = arith.maximumf %7, %8 : vector<32x128xf32>
    %10 = arith.truncf %9 : vector<32x128xf32> to vector<32x128xbf16>
    %c0_8 = arith.constant 0 : index
    %c0_9 = arith.constant 0 : index
    %c0_10 = arith.constant 0 : index
    %11 = vector.load %arg5[%c0_8, %c0_9, %c0_10] : memref<1x32x128xbf16, #tpu.memory_space<vmem>>, vector<1x32x128xbf16>
    %12 = vector.shape_cast %11 : vector<1x32x128xbf16> to vector<32x128xbf16>
    %13 = vector.shape_cast %10 : vector<32x128xbf16> to vector<1x32x128xbf16>
    tpu.vector_store %arg5[%c0_8, %c0_9, %c0_10], %13 {strides = array<i32>} : memref<1x32x128xbf16, #tpu.memory_space<vmem>>, vector<1x32x128xbf16>,
    return
  }
  func.func @transform_0(%arg0: i32, %arg1: i32) -> (i32, i32, i32) {
    %c0_i32 = arith.constant 0 : i32
    %c0_i32_0 = arith.constant 0 : i32
    return %arg0, %arg1, %c0_i32 : i32, i32, i32
  }
  func.func @transform_1(%arg0: i32, %arg1: i32) -> (i32, i32, i32) {
    %c0_i32 = arith.constant 0 : i32
    %c0_i32_0 = arith.constant 0 : i32
    %c0_i32_1 = arith.constant 0 : i32
    return %arg0, %c0_i32, %c0_i32_0 : i32, i32, i32
  }
  func.func @transform_2(%arg0: i32, %arg1: i32) -> (i32, i32) {
    %c0_i32 = arith.constant 0 : i32
    %c0_i32_0 = arith.constant 0 : i32
    %c0_i32_1 = arith.constant 0 : i32
    return %c0_i32, %c0_i32_0 : i32, i32
  }
  func.func @transform_3(%arg0: i32, %arg1: i32) -> (i32, i32, i32) {
    %c0_i32 = arith.constant 0 : i32
    %c0_i32_0 = arith.constant 0 : i32
    return %arg0, %arg1, %c0_i32 : i32, i32, i32
  }
}

module attributes {stable_mosaic.version = 11 : i64} {
  func.func @_chain_maxpool_kernel(%arg0: i32, %arg1: i32, %arg2: memref<1x32x128xbf16, #tpu.memory_space<vmem>>, %arg3: memref<128x128xbf16, #tpu.memory_space<vmem>>, %arg4: memref<1x128xf32, #tpu.memory_space<vmem>>, %arg5: memref<128x128xbf16, #tpu.memory_space<vmem>>, %arg6: memref<1x128xf32, #tpu.memory_space<vmem>>, %arg7: memref<128x1024xbf16, #tpu.memory_space<vmem>>, %arg8: memref<1x1024xf32, #tpu.memory_space<vmem>>, %arg9: memref<1x1x1024xf32, #tpu.memory_space<vmem>>, %arg10: memref<8x1024xf32, #tpu.memory_space<vmem>>) attributes {dimension_semantics = [#tpu.dimension_semantics<parallel>, #tpu.dimension_semantics<arbitrary>], iteration_bounds = array<i64: 2, 1>, scalar_prefetch = 0 : i64, scratch_operands = 1 : i64, tpu.core_type = #tpu.core_type<tc>, window_params = [{transform_indices = @transform_0, window_bounds = array<i64: 1, 32, 128>}, {pipeline_mode = #tpu.pipeline_mode<synchronous>, transform_indices = @transform_1, window_bounds = array<i64: 128, 128>}, {pipeline_mode = #tpu.pipeline_mode<synchronous>, transform_indices = @transform_2, window_bounds = array<i64: 1, 128>}, {pipeline_mode = #tpu.pipeline_mode<synchronous>, transform_indices = @transform_3, window_bounds = array<i64: 128, 128>}, {pipeline_mode = #tpu.pipeline_mode<synchronous>, transform_indices = @transform_4, window_bounds = array<i64: 1, 128>}, {pipeline_mode = #tpu.pipeline_mode<synchronous>, transform_indices = @transform_5, window_bounds = array<i64: 128, 1024>}, {pipeline_mode = #tpu.pipeline_mode<synchronous>, transform_indices = @transform_6, window_bounds = array<i64: 1, 1024>}, {transform_indices = @transform_7, window_bounds = array<i64: 1, 1, 1024>}]} {
    %c0_i32 = arith.constant 0 : i32
    %0 = arith.cmpi eq, %arg1, %c0_i32 : i32
    %1 = arith.extui %0 : i1 to i32
    %c0_i32_0 = arith.constant 0 : i32
    %2 = arith.cmpi ne, %1, %c0_i32_0 : i32
    scf.if %2 {
      %cst_26 = arith.constant 0xFF800000 : f32
      %37 = vector.broadcast %cst_26 : f32 to vector<8x1024xf32>
      %c0_27 = arith.constant 0 : index
      %c0_28 = arith.constant 0 : index
      %38 = vector.load %arg10[%c0_27, %c0_28] : memref<8x1024xf32, #tpu.memory_space<vmem>>, vector<8x1024xf32>
      tpu.vector_store %arg10[%c0_27, %c0_28], %37 {strides = array<i32>} : memref<8x1024xf32, #tpu.memory_space<vmem>>, vector<8x1024xf32>,
    } else {
    }
    %c0 = arith.constant 0 : index
    %c0_1 = arith.constant 0 : index
    %c0_2 = arith.constant 0 : index
    %3 = vector.load %arg2[%c0, %c0_1, %c0_2] : memref<1x32x128xbf16, #tpu.memory_space<vmem>>, vector<1x32x128xbf16>
    %4 = vector.shape_cast %3 : vector<1x32x128xbf16> to vector<32x128xbf16>
    %c0_3 = arith.constant 0 : index
    %c0_4 = arith.constant 0 : index
    %5 = vector.load %arg3[%c0_3, %c0_4] : memref<128x128xbf16, #tpu.memory_space<vmem>>, vector<128x128xbf16>
    %cst = arith.constant dense<0.000000e+00> : vector<32x128xf32>
    %6 = tpu.matmul %4, %5, %cst {dimension_numbers = #tpu.dot_dimension_numbers<[1], [0], [0], [1], [0, 0, 1, 1], [], []>} : vector<32x128xbf16>, vector<128x128xbf16>, vector<32x128xf32> -> vector<32x128xf32>
    %c0_5 = arith.constant 0 : index
    %c0_6 = arith.constant 0 : index
    %7 = vector.load %arg4[%c0_5, %c0_6] : memref<1x128xf32, #tpu.memory_space<vmem>>, vector<1x128xf32>
    %8 = vector.broadcast %7 : vector<1x128xf32> to vector<32x128xf32>
    %9 = arith.addf %6, %8 : vector<32x128xf32>
    %cst_7 = arith.constant 0.000000e+00 : f32
    %10 = vector.broadcast %cst_7 : f32 to vector<32x128xf32>
    %11 = arith.maximumf %9, %10 : vector<32x128xf32>
    %12 = arith.truncf %11 : vector<32x128xf32> to vector<32x128xbf16>
    %c0_8 = arith.constant 0 : index
    %c0_9 = arith.constant 0 : index
    %13 = vector.load %arg5[%c0_8, %c0_9] : memref<128x128xbf16, #tpu.memory_space<vmem>>, vector<128x128xbf16>
    %cst_10 = arith.constant dense<0.000000e+00> : vector<32x128xf32>
    %14 = tpu.matmul %12, %13, %cst_10 {dimension_numbers = #tpu.dot_dimension_numbers<[1], [0], [0], [1], [0, 0, 1, 1], [], []>} : vector<32x128xbf16>, vector<128x128xbf16>, vector<32x128xf32> -> vector<32x128xf32>
    %c0_11 = arith.constant 0 : index
    %c0_12 = arith.constant 0 : index
    %15 = vector.load %arg6[%c0_11, %c0_12] : memref<1x128xf32, #tpu.memory_space<vmem>>, vector<1x128xf32>
    %16 = vector.broadcast %15 : vector<1x128xf32> to vector<32x128xf32>
    %17 = arith.addf %14, %16 : vector<32x128xf32>
    %cst_13 = arith.constant 0.000000e+00 : f32
    %18 = vector.broadcast %cst_13 : f32 to vector<32x128xf32>
    %19 = arith.maximumf %17, %18 : vector<32x128xf32>
    %20 = arith.truncf %19 : vector<32x128xf32> to vector<32x128xbf16>
    %c0_14 = arith.constant 0 : index
    %c0_15 = arith.constant 0 : index
    %21 = vector.load %arg7[%c0_14, %c0_15] : memref<128x1024xbf16, #tpu.memory_space<vmem>>, vector<128x1024xbf16>
    %cst_16 = arith.constant dense<0.000000e+00> : vector<32x1024xf32>
    %22 = tpu.matmul %20, %21, %cst_16 {dimension_numbers = #tpu.dot_dimension_numbers<[1], [0], [0], [1], [0, 0, 1, 1], [], []>} : vector<32x128xbf16>, vector<128x1024xbf16>, vector<32x1024xf32> -> vector<32x1024xf32>
    %c0_17 = arith.constant 0 : index
    %c0_18 = arith.constant 0 : index
    %23 = vector.load %arg8[%c0_17, %c0_18] : memref<1x1024xf32, #tpu.memory_space<vmem>>, vector<1x1024xf32>
    %24 = vector.broadcast %23 : vector<1x1024xf32> to vector<32x1024xf32>
    %25 = arith.addf %22, %24 : vector<32x1024xf32>
    %cst_19 = arith.constant 0.000000e+00 : f32
    %26 = vector.broadcast %cst_19 : f32 to vector<32x1024xf32>
    %27 = arith.maximumf %25, %26 : vector<32x1024xf32>
    %c0_i32_20 = arith.constant 0 : i32
    %28 = arith.cmpi ne, %arg1, %c0_i32_20 : i32
    %29 = arith.extui %28 : i1 to i32
    %c0_i32_21 = arith.constant 0 : i32
    %30 = arith.cmpi ne, %29, %c0_i32_21 : i32
    scf.if %30 {
      %c0_26 = arith.constant 0 : index
      %c0_27 = arith.constant 0 : index
      %37 = vector.load %arg10[%c0_26, %c0_27] : memref<8x1024xf32, #tpu.memory_space<vmem>>, vector<8x1024xf32>
      %38 = vector.extract_strided_slice %27 {offsets = [0, 0], sizes = [8, 1024], strides = [1, 1]} : vector<32x1024xf32> to vector<8x1024xf32>
      %39 = vector.extract_strided_slice %27 {offsets = [8, 0], sizes = [8, 1024], strides = [1, 1]} : vector<32x1024xf32> to vector<8x1024xf32>
      %40 = arith.maximumf %38, %39 : vector<8x1024xf32>
      %41 = vector.extract_strided_slice %27 {offsets = [16, 0], sizes = [8, 1024], strides = [1, 1]} : vector<32x1024xf32> to vector<8x1024xf32>
      %42 = arith.maximumf %40, %41 : vector<8x1024xf32>
      %43 = vector.extract_strided_slice %27 {offsets = [24, 0], sizes = [8, 1024], strides = [1, 1]} : vector<32x1024xf32> to vector<8x1024xf32>
      %44 = arith.maximumf %42, %43 : vector<8x1024xf32>
      %45 = arith.maximumf %37, %44 : vector<8x1024xf32>
      %c0_28 = arith.constant 0 : index
      %c0_29 = arith.constant 0 : index
      %46 = vector.load %arg10[%c0_28, %c0_29] : memref<8x1024xf32, #tpu.memory_space<vmem>>, vector<8x1024xf32>
      tpu.vector_store %arg10[%c0_28, %c0_29], %45 {strides = array<i32>} : memref<8x1024xf32, #tpu.memory_space<vmem>>, vector<8x1024xf32>,
    } else {
    }
    %c0_i32_22 = arith.constant 0 : i32
    %31 = arith.cmpi eq, %arg1, %c0_i32_22 : i32
    %32 = arith.extui %31 : i1 to i32
    %c0_i32_23 = arith.constant 0 : i32
    %33 = arith.cmpi ne, %32, %c0_i32_23 : i32
    scf.if %33 {
      %37 = tpu.iota {dimensions = array<i32: 0>} : vector<32x1024xi32>
      %c32_i32 = arith.constant 32 : i32
      %38 = arith.muli %arg1, %c32_i32 : i32
      %39 = vector.broadcast %38 : i32 to vector<32x1024xi32>
      %40 = arith.addi %37, %39 : vector<32x1024xi32>
      %c30_i32 = arith.constant 30 : i32
      %41 = vector.broadcast %c30_i32 : i32 to vector<32x1024xi32>
      %42 = arith.cmpi slt, %40, %41 : vector<32x1024xi32>
      %cst_26 = arith.constant 0xFF800000 : f32
      %43 = vector.broadcast %cst_26 : f32 to vector<32x1024xf32>
      %44 = arith.select %42, %27, %43 : vector<32x1024xi1>, vector<32x1024xf32>
      %c0_27 = arith.constant 0 : index
      %c0_28 = arith.constant 0 : index
      %45 = vector.load %arg10[%c0_27, %c0_28] : memref<8x1024xf32, #tpu.memory_space<vmem>>, vector<8x1024xf32>
      %46 = vector.extract_strided_slice %44 {offsets = [0, 0], sizes = [8, 1024], strides = [1, 1]} : vector<32x1024xf32> to vector<8x1024xf32>
      %47 = vector.extract_strided_slice %44 {offsets = [8, 0], sizes = [8, 1024], strides = [1, 1]} : vector<32x1024xf32> to vector<8x1024xf32>
      %48 = arith.maximumf %46, %47 : vector<8x1024xf32>
      %49 = vector.extract_strided_slice %44 {offsets = [16, 0], sizes = [8, 1024], strides = [1, 1]} : vector<32x1024xf32> to vector<8x1024xf32>
      %50 = arith.maximumf %48, %49 : vector<8x1024xf32>
      %51 = vector.extract_strided_slice %44 {offsets = [24, 0], sizes = [8, 1024], strides = [1, 1]} : vector<32x1024xf32> to vector<8x1024xf32>
      %52 = arith.maximumf %50, %51 : vector<8x1024xf32>
      %53 = arith.maximumf %45, %52 : vector<8x1024xf32>
      %c0_29 = arith.constant 0 : index
      %c0_30 = arith.constant 0 : index
      %54 = vector.load %arg10[%c0_29, %c0_30] : memref<8x1024xf32, #tpu.memory_space<vmem>>, vector<8x1024xf32>
      tpu.vector_store %arg10[%c0_29, %c0_30], %53 {strides = array<i32>} : memref<8x1024xf32, #tpu.memory_space<vmem>>, vector<8x1024xf32>,
    } else {
    }
    %c0_i32_24 = arith.constant 0 : i32
    %34 = arith.cmpi eq, %arg1, %c0_i32_24 : i32
    %35 = arith.extui %34 : i1 to i32
    %c0_i32_25 = arith.constant 0 : i32
    %36 = arith.cmpi ne, %35, %c0_i32_25 : i32
    scf.if %36 {
      %c0_26 = arith.constant 0 : index
      %c0_27 = arith.constant 0 : index
      %37 = vector.load %arg10[%c0_26, %c0_27] : memref<8x1024xf32, #tpu.memory_space<vmem>>, vector<8x1024xf32>
      %cst_28 = arith.constant dense<0xFF800000> : vector<1024xf32>
      %38 = vector.multi_reduction <maximumf>, %37, %cst_28 [0] : vector<8x1024xf32> to vector<1024xf32>
      %39 = vector.shape_cast %38 : vector<1024xf32> to vector<1x1024xf32>
      %c0_29 = arith.constant 0 : index
      %c0_30 = arith.constant 0 : index
      %c0_31 = arith.constant 0 : index
      %40 = vector.load %arg9[%c0_29, %c0_30, %c0_31] : memref<1x1x1024xf32, #tpu.memory_space<vmem>>, vector<1x1x1024xf32>
      %41 = vector.shape_cast %40 : vector<1x1x1024xf32> to vector<1x1024xf32>
      %42 = vector.shape_cast %39 : vector<1x1024xf32> to vector<1x1x1024xf32>
      tpu.vector_store %arg9[%c0_29, %c0_30, %c0_31], %42 {strides = array<i32>} : memref<1x1x1024xf32, #tpu.memory_space<vmem>>, vector<1x1x1024xf32>,
    } else {
    }
    return
  }
  func.func @transform_0(%arg0: i32, %arg1: i32) -> (i32, i32, i32) {
    %c0_i32 = arith.constant 0 : i32
    %c0_i32_0 = arith.constant 0 : i32
    return %arg0, %arg1, %c0_i32 : i32, i32, i32
  }
  func.func @transform_1(%arg0: i32, %arg1: i32) -> (i32, i32) {
    %c0_i32 = arith.constant 0 : i32
    %c0_i32_0 = arith.constant 0 : i32
    %c0_i32_1 = arith.constant 0 : i32
    return %c0_i32, %c0_i32_0 : i32, i32
  }
  func.func @transform_2(%arg0: i32, %arg1: i32) -> (i32, i32) {
    %c0_i32 = arith.constant 0 : i32
    %c0_i32_0 = arith.constant 0 : i32
    %c0_i32_1 = arith.constant 0 : i32
    return %c0_i32, %c0_i32_0 : i32, i32
  }
  func.func @transform_3(%arg0: i32, %arg1: i32) -> (i32, i32) {
    %c0_i32 = arith.constant 0 : i32
    %c0_i32_0 = arith.constant 0 : i32
    %c0_i32_1 = arith.constant 0 : i32
    return %c0_i32, %c0_i32_0 : i32, i32
  }
  func.func @transform_4(%arg0: i32, %arg1: i32) -> (i32, i32) {
    %c0_i32 = arith.constant 0 : i32
    %c0_i32_0 = arith.constant 0 : i32
    %c0_i32_1 = arith.constant 0 : i32
    return %c0_i32, %c0_i32_0 : i32, i32
  }
  func.func @transform_5(%arg0: i32, %arg1: i32) -> (i32, i32) {
    %c0_i32 = arith.constant 0 : i32
    %c0_i32_0 = arith.constant 0 : i32
    %c0_i32_1 = arith.constant 0 : i32
    return %c0_i32, %c0_i32_0 : i32, i32
  }
  func.func @transform_6(%arg0: i32, %arg1: i32) -> (i32, i32) {
    %c0_i32 = arith.constant 0 : i32
    %c0_i32_0 = arith.constant 0 : i32
    %c0_i32_1 = arith.constant 0 : i32
    return %c0_i32, %c0_i32_0 : i32, i32
  }
  func.func @transform_7(%arg0: i32, %arg1: i32) -> (i32, i32, i32) {
    %c0_i32 = arith.constant 0 : i32
    %c0_i32_0 = arith.constant 0 : i32
    %c0_i32_1 = arith.constant 0 : i32
    return %arg0, %c0_i32, %c0_i32_0 : i32, i32, i32
  }
}

module attributes {stable_mosaic.version = 11 : i64} {
  func.func @_chain_maxpool_kernel(%arg0: i32, %arg1: i32, %arg2: memref<1x32x128xbf16, #tpu.memory_space<vmem>>, %arg3: memref<1x128x128xbf16, #tpu.memory_space<vmem>>, %arg4: memref<1x128xf32, #tpu.memory_space<vmem>>, %arg5: memref<128x1024xbf16, #tpu.memory_space<vmem>>, %arg6: memref<1x1024xf32, #tpu.memory_space<vmem>>, %arg7: memref<1x1x1024xf32, #tpu.memory_space<vmem>>, %arg8: memref<8x1024xf32, #tpu.memory_space<vmem>>) attributes {dimension_semantics = [#tpu.dimension_semantics<parallel>, #tpu.dimension_semantics<arbitrary>], iteration_bounds = array<i64: 2, 1>, scalar_prefetch = 0 : i64, scratch_operands = 1 : i64, tpu.core_type = #tpu.core_type<tc>, window_params = [{transform_indices = @transform_0, window_bounds = array<i64: 1, 32, 128>}, {transform_indices = @transform_1, window_bounds = array<i64: 1, 128, 128>}, {pipeline_mode = #tpu.pipeline_mode<synchronous>, transform_indices = @transform_2, window_bounds = array<i64: 1, 128>}, {pipeline_mode = #tpu.pipeline_mode<synchronous>, transform_indices = @transform_3, window_bounds = array<i64: 128, 1024>}, {pipeline_mode = #tpu.pipeline_mode<synchronous>, transform_indices = @transform_4, window_bounds = array<i64: 1, 1024>}, {transform_indices = @transform_5, window_bounds = array<i64: 1, 1, 1024>}]} {
    %c0_i32 = arith.constant 0 : i32
    %0 = arith.cmpi eq, %arg1, %c0_i32 : i32
    %1 = arith.extui %0 : i1 to i32
    %c0_i32_0 = arith.constant 0 : i32
    %2 = arith.cmpi ne, %1, %c0_i32_0 : i32
    scf.if %2 {
      %cst_20 = arith.constant 0xFF800000 : f32
      %28 = vector.broadcast %cst_20 : f32 to vector<8x1024xf32>
      %c0_21 = arith.constant 0 : index
      %c0_22 = arith.constant 0 : index
      %29 = vector.load %arg8[%c0_21, %c0_22] : memref<8x1024xf32, #tpu.memory_space<vmem>>, vector<8x1024xf32>
      tpu.vector_store %arg8[%c0_21, %c0_22], %28 {strides = array<i32>} : memref<8x1024xf32, #tpu.memory_space<vmem>>, vector<8x1024xf32>,
    } else {
    }
    %c0 = arith.constant 0 : index
    %c0_1 = arith.constant 0 : index
    %c0_2 = arith.constant 0 : index
    %3 = vector.load %arg2[%c0, %c0_1, %c0_2] : memref<1x32x128xbf16, #tpu.memory_space<vmem>>, vector<1x32x128xbf16>
    %4 = vector.shape_cast %3 : vector<1x32x128xbf16> to vector<32x128xbf16>
    %c0_3 = arith.constant 0 : index
    %c0_4 = arith.constant 0 : index
    %c0_5 = arith.constant 0 : index
    %5 = vector.load %arg3[%c0_3, %c0_4, %c0_5] : memref<1x128x128xbf16, #tpu.memory_space<vmem>>, vector<1x128x128xbf16>
    %6 = vector.shape_cast %5 : vector<1x128x128xbf16> to vector<128x128xbf16>
    %cst = arith.constant dense<0.000000e+00> : vector<32x128xf32>
    %7 = tpu.matmul %4, %6, %cst {dimension_numbers = #tpu.dot_dimension_numbers<[1], [0], [0], [1], [0, 0, 1, 1], [], []>} : vector<32x128xbf16>, vector<128x128xbf16>, vector<32x128xf32> -> vector<32x128xf32>
    %c0_6 = arith.constant 0 : index
    %c0_7 = arith.constant 0 : index
    %8 = vector.load %arg4[%c0_6, %c0_7] : memref<1x128xf32, #tpu.memory_space<vmem>>, vector<1x128xf32>
    %9 = vector.broadcast %8 : vector<1x128xf32> to vector<32x128xf32>
    %10 = arith.addf %7, %9 : vector<32x128xf32>
    %cst_8 = arith.constant 0.000000e+00 : f32
    %11 = vector.broadcast %cst_8 : f32 to vector<32x128xf32>
    %12 = arith.maximumf %10, %11 : vector<32x128xf32>
    %13 = arith.truncf %12 : vector<32x128xf32> to vector<32x128xbf16>
    %c0_9 = arith.constant 0 : index
    %c0_10 = arith.constant 0 : index
    %14 = vector.load %arg5[%c0_9, %c0_10] : memref<128x1024xbf16, #tpu.memory_space<vmem>>, vector<128x1024xbf16>
    %cst_11 = arith.constant dense<0.000000e+00> : vector<32x1024xf32>
    %15 = tpu.matmul %13, %14, %cst_11 {dimension_numbers = #tpu.dot_dimension_numbers<[1], [0], [0], [1], [0, 0, 1, 1], [], []>} : vector<32x128xbf16>, vector<128x1024xbf16>, vector<32x1024xf32> -> vector<32x1024xf32>
    %c0_12 = arith.constant 0 : index
    %c0_13 = arith.constant 0 : index
    %16 = vector.load %arg6[%c0_12, %c0_13] : memref<1x1024xf32, #tpu.memory_space<vmem>>, vector<1x1024xf32>
    %17 = vector.broadcast %16 : vector<1x1024xf32> to vector<32x1024xf32>
    %18 = arith.addf %15, %17 : vector<32x1024xf32>
    %c0_i32_14 = arith.constant 0 : i32
    %19 = arith.cmpi ne, %arg1, %c0_i32_14 : i32
    %20 = arith.extui %19 : i1 to i32
    %c0_i32_15 = arith.constant 0 : i32
    %21 = arith.cmpi ne, %20, %c0_i32_15 : i32
    scf.if %21 {
      %c0_20 = arith.constant 0 : index
      %c0_21 = arith.constant 0 : index
      %28 = vector.load %arg8[%c0_20, %c0_21] : memref<8x1024xf32, #tpu.memory_space<vmem>>, vector<8x1024xf32>
      %29 = vector.extract_strided_slice %18 {offsets = [0, 0], sizes = [8, 1024], strides = [1, 1]} : vector<32x1024xf32> to vector<8x1024xf32>
      %30 = vector.extract_strided_slice %18 {offsets = [8, 0], sizes = [8, 1024], strides = [1, 1]} : vector<32x1024xf32> to vector<8x1024xf32>
      %31 = arith.maximumf %29, %30 : vector<8x1024xf32>
      %32 = vector.extract_strided_slice %18 {offsets = [16, 0], sizes = [8, 1024], strides = [1, 1]} : vector<32x1024xf32> to vector<8x1024xf32>
      %33 = arith.maximumf %31, %32 : vector<8x1024xf32>
      %34 = vector.extract_strided_slice %18 {offsets = [24, 0], sizes = [8, 1024], strides = [1, 1]} : vector<32x1024xf32> to vector<8x1024xf32>
      %35 = arith.maximumf %33, %34 : vector<8x1024xf32>
      %36 = arith.maximumf %28, %35 : vector<8x1024xf32>
      %c0_22 = arith.constant 0 : index
      %c0_23 = arith.constant 0 : index
      %37 = vector.load %arg8[%c0_22, %c0_23] : memref<8x1024xf32, #tpu.memory_space<vmem>>, vector<8x1024xf32>
      tpu.vector_store %arg8[%c0_22, %c0_23], %36 {strides = array<i32>} : memref<8x1024xf32, #tpu.memory_space<vmem>>, vector<8x1024xf32>,
    } else {
    }
    %c0_i32_16 = arith.constant 0 : i32
    %22 = arith.cmpi eq, %arg1, %c0_i32_16 : i32
    %23 = arith.extui %22 : i1 to i32
    %c0_i32_17 = arith.constant 0 : i32
    %24 = arith.cmpi ne, %23, %c0_i32_17 : i32
    scf.if %24 {
      %28 = tpu.iota {dimensions = array<i32: 0>} : vector<32x1024xi32>
      %c32_i32 = arith.constant 32 : i32
      %29 = arith.muli %arg1, %c32_i32 : i32
      %30 = vector.broadcast %29 : i32 to vector<32x1024xi32>
      %31 = arith.addi %28, %30 : vector<32x1024xi32>
      %c30_i32 = arith.constant 30 : i32
      %32 = vector.broadcast %c30_i32 : i32 to vector<32x1024xi32>
      %33 = arith.cmpi slt, %31, %32 : vector<32x1024xi32>
      %cst_20 = arith.constant 0xFF800000 : f32
      %34 = vector.broadcast %cst_20 : f32 to vector<32x1024xf32>
      %35 = arith.select %33, %18, %34 : vector<32x1024xi1>, vector<32x1024xf32>
      %c0_21 = arith.constant 0 : index
      %c0_22 = arith.constant 0 : index
      %36 = vector.load %arg8[%c0_21, %c0_22] : memref<8x1024xf32, #tpu.memory_space<vmem>>, vector<8x1024xf32>
      %37 = vector.extract_strided_slice %35 {offsets = [0, 0], sizes = [8, 1024], strides = [1, 1]} : vector<32x1024xf32> to vector<8x1024xf32>
      %38 = vector.extract_strided_slice %35 {offsets = [8, 0], sizes = [8, 1024], strides = [1, 1]} : vector<32x1024xf32> to vector<8x1024xf32>
      %39 = arith.maximumf %37, %38 : vector<8x1024xf32>
      %40 = vector.extract_strided_slice %35 {offsets = [16, 0], sizes = [8, 1024], strides = [1, 1]} : vector<32x1024xf32> to vector<8x1024xf32>
      %41 = arith.maximumf %39, %40 : vector<8x1024xf32>
      %42 = vector.extract_strided_slice %35 {offsets = [24, 0], sizes = [8, 1024], strides = [1, 1]} : vector<32x1024xf32> to vector<8x1024xf32>
      %43 = arith.maximumf %41, %42 : vector<8x1024xf32>
      %44 = arith.maximumf %36, %43 : vector<8x1024xf32>
      %c0_23 = arith.constant 0 : index
      %c0_24 = arith.constant 0 : index
      %45 = vector.load %arg8[%c0_23, %c0_24] : memref<8x1024xf32, #tpu.memory_space<vmem>>, vector<8x1024xf32>
      tpu.vector_store %arg8[%c0_23, %c0_24], %44 {strides = array<i32>} : memref<8x1024xf32, #tpu.memory_space<vmem>>, vector<8x1024xf32>,
    } else {
    }
    %c0_i32_18 = arith.constant 0 : i32
    %25 = arith.cmpi eq, %arg1, %c0_i32_18 : i32
    %26 = arith.extui %25 : i1 to i32
    %c0_i32_19 = arith.constant 0 : i32
    %27 = arith.cmpi ne, %26, %c0_i32_19 : i32
    scf.if %27 {
      %c0_20 = arith.constant 0 : index
      %c0_21 = arith.constant 0 : index
      %28 = vector.load %arg8[%c0_20, %c0_21] : memref<8x1024xf32, #tpu.memory_space<vmem>>, vector<8x1024xf32>
      %cst_22 = arith.constant dense<0xFF800000> : vector<1024xf32>
      %29 = vector.multi_reduction <maximumf>, %28, %cst_22 [0] : vector<8x1024xf32> to vector<1024xf32>
      %30 = vector.shape_cast %29 : vector<1024xf32> to vector<1x1024xf32>
      %c0_23 = arith.constant 0 : index
      %c0_24 = arith.constant 0 : index
      %c0_25 = arith.constant 0 : index
      %31 = vector.load %arg7[%c0_23, %c0_24, %c0_25] : memref<1x1x1024xf32, #tpu.memory_space<vmem>>, vector<1x1x1024xf32>
      %32 = vector.shape_cast %31 : vector<1x1x1024xf32> to vector<1x1024xf32>
      %33 = vector.shape_cast %30 : vector<1x1024xf32> to vector<1x1x1024xf32>
      tpu.vector_store %arg7[%c0_23, %c0_24, %c0_25], %33 {strides = array<i32>} : memref<1x1x1024xf32, #tpu.memory_space<vmem>>, vector<1x1x1024xf32>,
    } else {
    }
    return
  }
  func.func @transform_0(%arg0: i32, %arg1: i32) -> (i32, i32, i32) {
    %c0_i32 = arith.constant 0 : i32
    %c0_i32_0 = arith.constant 0 : i32
    return %arg0, %arg1, %c0_i32 : i32, i32, i32
  }
  func.func @transform_1(%arg0: i32, %arg1: i32) -> (i32, i32, i32) {
    %c0_i32 = arith.constant 0 : i32
    %c0_i32_0 = arith.constant 0 : i32
    %c0_i32_1 = arith.constant 0 : i32
    return %arg0, %c0_i32, %c0_i32_0 : i32, i32, i32
  }
  func.func @transform_2(%arg0: i32, %arg1: i32) -> (i32, i32) {
    %c0_i32 = arith.constant 0 : i32
    %c0_i32_0 = arith.constant 0 : i32
    %c0_i32_1 = arith.constant 0 : i32
    return %c0_i32, %c0_i32_0 : i32, i32
  }
  func.func @transform_3(%arg0: i32, %arg1: i32) -> (i32, i32) {
    %c0_i32 = arith.constant 0 : i32
    %c0_i32_0 = arith.constant 0 : i32
    %c0_i32_1 = arith.constant 0 : i32
    return %c0_i32, %c0_i32_0 : i32, i32
  }
  func.func @transform_4(%arg0: i32, %arg1: i32) -> (i32, i32) {
    %c0_i32 = arith.constant 0 : i32
    %c0_i32_0 = arith.constant 0 : i32
    %c0_i32_1 = arith.constant 0 : i32
    return %c0_i32, %c0_i32_0 : i32, i32
  }
  func.func @transform_5(%arg0: i32, %arg1: i32) -> (i32, i32, i32) {
    %c0_i32 = arith.constant 0 : i32
    %c0_i32_0 = arith.constant 0 : i32
    %c0_i32_1 = arith.constant 0 : i32
    return %arg0, %c0_i32, %c0_i32_0 : i32, i32, i32
  }
}

</mosaic_0001>

<llo_original>
// kernel: get_model_forward.5
$region0: #{get_model_forward.5}
  #allocation0 [shape = 'u32[]', space=smem, size = 0x4, offset = 0x4, fixed_abs, tag = 'smem constant byte address 0x4 - core index']
  #allocation1 [shape = 'u32[144,128]{1,0:T(1,128)}', space=vmem, size = 0x12000, scoped, tag = 'internal scratch']
  %s0 = inlined_call_operand.vmem [shape: bf16[2,32,8], index: 0, kind: input, shape index: {}]
  %s1 = inlined_call_operand.vmem [shape: bf16[2,8,128], index: 1, kind: input, shape index: {}]
  %s2 = inlined_call_operand.vmem [shape: f32[1,128], index: 2, kind: input, shape index: {}]
  %s3 = inlined_call_operand.vmem [shape: bf16[2,32,128], index: 3, kind: output, shape index: {}]
  %s4 = sld [smem:[#allocation0]]
  $region45: #{get_model_forward.5} parent=0
    _
  %s6 = ssub.s32 1, %s4
  %s7 = scalar_select 0, %s6, %s4
  loop: start=0, step=1, limit=4
  $region2: #{get_model_forward.5} parent=0 // loop_pre_header
    _
  $region3: #{get_model_forward.5} parent=0 // loop_header
    %s9 = sphi 0, %s13
    %p10 = scmp.ge.s32.totalorder %s9, 4
    %s16 = sphi 0, %s28
    %s17 = sphi 0, %s24
    %s18 = sphi 0, %s16
    %s19 = sphi 0, %s17
    %s20 = sphi 0, %s18
    %s21 = sphi 0, %s19
    %s33 = sphi 0, %s35
    %s36 = sphi 0, %s33
    %s37 = sphi 0, %s36
    %s53 = sphi 0, %s37
    %s59 = sphi 0, %s61
    %s62 = sphi 0, %s59
    %s63 = sphi 0, %s62
    %s79 = sphi 0, %s63
    %s83 = sphi 0, %s83
    %s85 = sphi 0, %s83
    %s86 = sphi 0, %s85
    %s100 = sphi 0, %s86
    %s108 = sphi 0, %s110
    %s111 = sphi 0, %s108
    %s112 = sphi 0, %s111
    %s128 = sphi 0, %s112
  $region4: #{get_model_forward.5} parent=0 // loop_header_branch
    %12 = sbr.rel (%p10) target = $region8
  $region5: #{get_model_forward.5} parent=0 // loop_body
    %s14 = ssub.s32 %s9, 1
    %s15 = ssub.s32 %s9, 2
    %s22 = sadd.s32 1, %s17
    %p23 = scmp.ge.s32.totalorder %s22, 1
    %s24 = scalar_select %p23, 0, %s22
    %s25 = sadd.s32 1, %s16
    %s26 = scalar_select %p23, %s25, %s16
    %p27 = scmp.ge.s32.totalorder %s26, 2
    %s28 = scalar_select %p27, 0, %s26
    %s29 = ssub.s32 %s16, %s28
    %s30 = ssub.s32 %s17, %s24
    %s31 = sor.u32 %s29, %s30
    %p32 = scmp.eq.s32.totalorder %s31, 0
    %s34 = sadd.s32 %s33, 1
    %s35 = scalar_select %p32, %s33, %s34
    %p38 = pneg %p32
    %p39 = scmp.eq.s32.totalorder %s9, 1
    %p40 = por %p38, %p39
    %p41 = scmp.ne.s32.totalorder %s33, %s36
    %p42 = scmp.eq.s32.totalorder %s9, 0
    %p43 = por %p41, %p42
    %p44 = scmp.ne.s32.totalorder %s33, %s36
    %p45 = scmp.eq.s32.totalorder %s14, 1
    %p46 = por %p44, %p45
    %p47 = scmp.ne.s32.totalorder %s36, %s37
    %p48 = scmp.eq.s32.totalorder %s14, 0
    %p49 = por %p47, %p48
    %p50 = scmp.ne.s32.totalorder %s36, %s37
    %p51 = scmp.eq.s32.totalorder %s15, 1
    %p52 = por %p50, %p51
    %p54 = scmp.ne.s32.totalorder %s37, %s53
    %p55 = scmp.eq.s32.totalorder %s15, 0
    %p56 = por %p54, %p55
    %s57 = ssub.s32 %s16, %s28
    %p58 = scmp.eq.s32.totalorder %s57, 0
    %s60 = sadd.s32 %s59, 1
    %s61 = scalar_select %p58, %s59, %s60
    %p64 = pneg %p58
    %p65 = scmp.eq.s32.totalorder %s9, 1
    %p66 = por %p64, %p65
    %p67 = scmp.ne.s32.totalorder %s59, %s62
    %p68 = scmp.eq.s32.totalorder %s9, 0
    %p69 = por %p67, %p68
    %p70 = scmp.ne.s32.totalorder %s59, %s62
    %p71 = scmp.eq.s32.totalorder %s14, 1
    %p72 = por %p70, %p71
    %p73 = scmp.ne.s32.totalorder %s62, %s63
    %p74 = scmp.eq.s32.totalorder %s14, 0
    %p75 = por %p73, %p74
    %p76 = scmp.ne.s32.totalorder %s62, %s63
    %p77 = scmp.eq.s32.totalorder %s15, 1
    %p78 = por %p76, %p77
    %p80 = scmp.ne.s32.totalorder %s63, %s79
    %p81 = scmp.eq.s32.totalorder %s15, 0
    %p82 = por %p80, %p81
    %s84 = sadd.s32 %s83, 1
    %p87 = scmp.eq.s32.totalorder %s9, 1
    %p88 = scmp.ne.s32.totalorder %s83, %s85
    %p89 = scmp.eq.s32.totalorder %s9, 0
    %p90 = por %p88, %p89
    %p91 = scmp.ne.s32.totalorder %s83, %s85
    %p92 = scmp.eq.s32.totalorder %s14, 1
    %p93 = por %p91, %p92
    %p94 = scmp.ne.s32.totalorder %s85, %s86
    %p95 = scmp.eq.s32.totalorder %s14, 0
    %p96 = por %p94, %p95
    %p97 = scmp.ne.s32.totalorder %s85, %s86
    %p98 = scmp.eq.s32.totalorder %s15, 1
    %p99 = por %p97, %p98
    %p101 = scmp.ne.s32.totalorder %s86, %s100
    %p102 = scmp.eq.s32.totalorder %s15, 0
    %p103 = por %p101, %p102
    %s104 = ssub.s32 %s16, %s28
    %s105 = ssub.s32 %s17, %s24
    %s106 = sor.u32 %s104, %s105
    %p107 = scmp.eq.s32.totalorder %s106, 0
    %s109 = sadd.s32 %s108, 1
    %s110 = scalar_select %p107, %s108, %s109
    %p113 = pneg %p107
    %p114 = scmp.eq.s32.totalorder %s9, 1
    %p115 = por %p113, %p114
    %p116 = scmp.ne.s32.totalorder %s108, %s111
    %p117 = scmp.eq.s32.totalorder %s9, 0
    %p118 = por %p116, %p117
    %p119 = scmp.ne.s32.totalorder %s108, %s111
    %p120 = scmp.eq.s32.totalorder %s14, 1
    %p121 = por %p119, %p120
    %p122 = scmp.ne.s32.totalorder %s111, %s112
    %p123 = scmp.eq.s32.totalorder %s14, 0
    %p124 = por %p122, %p123
    %p125 = scmp.ne.s32.totalorder %s111, %s112
    %p126 = scmp.eq.s32.totalorder %s15, 1
    %p127 = por %p125, %p126
    %p129 = scmp.ne.s32.totalorder %s112, %s128
    %p130 = scmp.eq.s32.totalorder %s15, 0
    %p131 = por %p129, %p130
    %p132 = scmp.le.s32.totalorder 1, %s9
    %p133 = scmp.lt.s32.totalorder %s9, 3
    %p134 = pnand %p132, %p133
    %p135 = pneg %p134
    // Predicated region
    $region9: #{get_model_forward.5} parent=5 // pred_check
      _
    $region10: #{get_model_forward.5} parent=5 // pred_check_branch
      %137 = sbr.rel (%p134) target = $region12
    $region11: #{get_model_forward.5} parent=5 // pred_region
      %s138 = ssub.s32 %s9, 1
      // Predicated region
      $region13: #{get_model_forward.5} parent=11 // pred_check
        %p139 = pneg %p96
      $region14: #{get_model_forward.5} parent=11 // pred_check_branch
        %141 = sbr.rel (%p139) target = $region16
      $region15: #{get_model_forward.5} parent=11 // pred_region
        _
      $region16: #{get_model_forward.5} parent=11 // pred_fallthru
        _
    $region12: #{get_model_forward.5} parent=5 // pred_fallthru
      _
    %p142 = scmp.lt.s32.totalorder %s9, 2
    // Predicated region
    $region17: #{get_model_forward.5} parent=5 // pred_check
      %p143 = pneg %p142
    $region18: #{get_model_forward.5} parent=5 // pred_check_branch
      %145 = sbr.rel (%p143) target = $region20
    $region19: #{get_model_forward.5} parent=5 // pred_region
      // Predicated region
      $region21: #{get_model_forward.5} parent=19 // pred_check
        %p146 = pneg %p43
      $region22: #{get_model_forward.5} parent=19 // pred_check_branch
        %148 = sbr.rel (%p146) target = $region24
      $region23: #{get_model_forward.5} parent=19 // pred_region
        %s149 = smul.u32 4, %s17
        %p150 = scmp.lt.s32.totalorder %s16, 1
        %s151 = scalar_select %p150, %s16, 1
        %p152 = scmp.lt.s32.totalorder %s149, 3
        %s153 = scalar_select %p152, %s149, 3
        %s154 = smul.addr %s151, 4
        %s155 = sadd.s32 %s153, %s154
        %s156 = smul.addr %s155, 4
        %s157 = scalar_lea.vmem %s0, %s156
        %s158 = smul.u32 4, %s17
      $region24: #{get_model_forward.5} parent=19 // pred_fallthru
        _
      // Predicated region
      $region25: #{get_model_forward.5} parent=19 // pred_check
        %p159 = pneg %p69
      $region26: #{get_model_forward.5} parent=19 // pred_check_branch
        %161 = sbr.rel (%p159) target = $region28
      $region27: #{get_model_forward.5} parent=19 // pred_region
        %p162 = scmp.lt.s32.totalorder %s16, 1
        %s163 = scalar_select %p162, %s16, 1
        %s164 = smul.addr %s163, 4
        %s165 = scalar_lea.vmem %s1, %s164
      $region28: #{get_model_forward.5} parent=19 // pred_fallthru
        _
    $region20: #{get_model_forward.5} parent=5 // pred_fallthru
      _
    %p166 = scmp.le.s32.totalorder 1, %s9
    %p167 = scmp.lt.s32.totalorder %s9, 3
    %p168 = pnand %p166, %p167
    %p169 = pneg %p168
    // Predicated region
    $region29: #{get_model_forward.5} parent=5 // pred_check
      _
    $region30: #{get_model_forward.5} parent=5 // pred_check_branch
      %171 = sbr.rel (%p168) target = $region32
    $region31: #{get_model_forward.5} parent=5 // pred_region
      %s172 = ssub.s32 %s9, 1
      %s173 = smul.u32 4, %s19
      %p174 = scmp.lt.s32.totalorder %s18, 1
      %s175 = scalar_select %p174, %s18, 1
      %p176 = scmp.lt.s32.totalorder %s173, 3
      %s177 = scalar_select %p176, %s173, 3
      %s178 = smul.addr %s175, 4
      %s179 = sadd.s32 %s177, %s178
      %s180 = smul.addr %s179, 4
      %s181 = scalar_lea.vmem %s0, %s180
      %p182 = pneg %p49
      %p183 = pneg %p46
      %p184 = scmp.lt.s32.totalorder %s18, 1
      %s185 = scalar_select %p184, %s18, 1
      %s186 = smul.addr %s185, 4
      %s187 = scalar_lea.vmem %s1, %s186
      %p188 = pneg %p75
      %p189 = pneg %p72
      %p190 = pneg %p96
      %p191 = pneg %p93
      %p192 = pneg %p124
      %p193 = pneg %p121
      %s194 = smul.u32 4, %s19
      %p195 = scmp.lt.s32.totalorder %s18, 1
      %s196 = scalar_select %p195, %s18, 1
      %p197 = scmp.lt.s32.totalorder %s194, 3
      %s198 = scalar_select %p197, %s194, 3
      %s199 = smul.addr %s196, 4
      %s200 = sadd.s32 %s198, %s199
      %s201 = smul.addr %s200, 4
      %s202 = scalar_lea.vmem %s3, %s201
      %s203 = smul.u32 4, %s19
      %p204 = scmp.lt.s32.totalorder %s18, 1
      %s205 = scalar_select %p204, %s18, 1
      %p206 = scmp.lt.s32.totalorder %s203, 3
      %s207 = scalar_select %p206, %s203, 3
      %s208 = smul.addr %s205, 4
      %s209 = sadd.s32 %s207, %s208
      %s210 = smul.addr %s209, 4
      %s211 = scalar_lea.vmem %s0, %s210
      %s212 = smul.u32 4, %s19
      %p213 = scmp.lt.s32.totalorder %s18, 1
      %s214 = scalar_select %p213, %s18, 1
      %s215 = smul.addr %s214, 4
      %s216 = scalar_lea.vmem %s1, %s215
      %s217 = smul.u32 4, %s19
      %p218 = scmp.lt.s32.totalorder %s18, 1
      %s219 = scalar_select %p218, %s18, 1
      %p220 = scmp.lt.s32.totalorder %s217, 3
      %s221 = scalar_select %p220, %s217, 3
      %s222 = smul.addr %s219, 4
      %s223 = sadd.s32 %s221, %s222
      %s224 = smul.addr %s223, 4
      %s225 = scalar_lea.vmem %s3, %s224
      %s226 = smul.u32 4, %s19
      %v228 = vld [vmem:[%s211] sm:$0xf]
      %v229 = vld [vmem:[%s211 + $0x4] sm:$0xf]
      %v230 = vld [vmem:[%s211 + $0x8] sm:$0xf]
      %v231 = vld [vmem:[%s211 + $0xc] sm:$0xf]
      %v232 = vld [vmem:[%s216] sm:$0xf]
      %v233 = vld [vmem:[%s2] sm:$0x1]
      %v235 = vlaneseq
      %v236 = vshrl.u32 %v235, 7
      %v237 = vsub.s32 0, %v236
      %v238 = vrot.slane %v233, %v237
      %v244 = vunpack.c.l.b16 %v228
      %v245 = vunpack.c.l.b16 %v229
      %v246 = vunpack.c.l.b16 %v230
      %v247 = vunpack.c.l.b16 %v231
      %v248 = vpack.c.b16 %v245, %v244
      %v249 = vpack.c.b16 %v247, %v246
      %vm250 = vcmask 64512
      %v252 = vsel %vm250, %v248, 0
      %v255 = vsel %vm250, %v249, 0
      %vm257 = vcmask 1043456
      %v259 = vsel %vm257, %v232, 0
      %261 = vmatprep.subr.bf16.mxu0 0
      %262 = vmatpush1.bf16.msra.mxu0 %v259
      %263 = vmatprep.subr.bf16.mxu0 0
      %264 = vmatpush1.bf16.msra.mxu0 0
      %265 = vmatprep.subr.bf16.mxu0 0
      %266 = vmatpush1.bf16.msra.mxu0 0
      %267 = vmatprep.subr.bf16.mxu0 0
      %268 = vmatpush1.bf16.msra.mxu0 0
      %269 = vmatprep.subr.bf16.mxu0 0
      %270 = vmatpush1.bf16.msra.mxu0 0
      %271 = vmatprep.subr.bf16.mxu0 0
      %272 = vmatpush1.bf16.msra.mxu0 0
      %273 = vmatprep.subr.bf16.mxu0 0
      %274 = vmatpush1.bf16.msra.mxu0 0
      %275 = vmatprep.subr.bf16.mxu0 0
      %276 = vmatpush1.bf16.msra.mxu0 0
      %277 = vmatprep.subr.bf16.mxu0 0
      %278 = vmatpush1.bf16.msra.mxu0 0
      %279 = vmatprep.subr.bf16.mxu0 0
      %280 = vmatpush1.bf16.msra.mxu0 0
      %281 = vmatprep.subr.bf16.mxu0 0
      %282 = vmatpush1.bf16.msra.mxu0 0
      %283 = vmatprep.subr.bf16.mxu0 0
      %284 = vmatpush1.bf16.msra.mxu0 0
      %285 = vmatprep.subr.bf16.mxu0 0
      %286 = vmatpush1.bf16.msra.mxu0 0
      %287 = vmatprep.subr.bf16.mxu0 0
      %288 = vmatpush1.bf16.msra.mxu0 0
      %289 = vmatprep.subr.bf16.mxu0 0
      %290 = vmatpush1.bf16.msra.mxu0 0
      %291 = vmatprep.subr.bf16.mxu0 0
      %292 = vmatpush1.bf16.msra.mxu0 0
      %293 = vmatprep.mubr.bf16.mxu0 0
      %294 = vmatmul.mubr.bf16.gmra.mrb[0].mxu0 %v252
      %v295 = vpop.f32.mrb[0].mxu0
      %v296 = vadd.f32 %v238, %v295
      %v297 = vpop.f32.mrb[0].mxu0
      %v298 = vpop.f32.mrb[0].mxu0
      %v299 = vadd.f32 %v238, %v298
      %v300 = vpop.f32.mrb[0].mxu0
      %301 = vmatprep.mubr.bf16.mxu0 0
      %302 = vmatmul.mubr.bf16.gmra.mrb[0].mxu0 %v255
      %v303 = vpop.f32.mrb[0].mxu0
      %v304 = vadd.f32 %v238, %v303
      %v305 = vpop.f32.mrb[0].mxu0
      %v306 = vpop.f32.mrb[0].mxu0
      %v307 = vadd.f32 %v238, %v306
      %v308 = vpop.f32.mrb[0].mxu0
      %309 = vdwg.mxu0
      %v310 = vmax.f32 %v296, 0.0
      %v311 = vmax.f32 %v299, 0.0
      %v312 = vmax.f32 %v304, 0.0
      %v313 = vmax.f32 %v307, 0.0
      %v314 = vpack.c.bf16 %v311, %v310
      %v315 = vpack.c.bf16 %v313, %v312
      %v318 = vunpack.c.l.b16 %v314
      %v319 = vunpack.c.h.b16 %v314
      %v320 = vunpack.c.l.b16 %v315
      %v321 = vunpack.c.h.b16 %v315
      %v322 = vpack.c.b16 %v318, %v318
      %v323 = vpack.c.b16 %v319, %v319
      %v324 = vpack.c.b16 %v320, %v320
      %v325 = vpack.c.b16 %v321, %v321
      %330 = vst [vmem:[%s225] sm:$0xf] %v322
      %331 = vst [vmem:[%s225 + $0x4] sm:$0xf] %v323
      %332 = vst [vmem:[%s225 + $0x8] sm:$0xf] %v324
      %333 = vst [vmem:[%s225 + $0xc] sm:$0xf] %v325
      %s334 = smul.u32 4, %s19
      %p335 = scmp.lt.s32.totalorder %s18, 1
      %s336 = scalar_select %p335, %s18, 1
      %p337 = scmp.lt.s32.totalorder %s334, 3
      %s338 = scalar_select %p337, %s334, 3
      %s339 = smul.addr %s336, 4
      %s340 = sadd.s32 %s338, %s339
      %s341 = smul.addr %s340, 4
      %s342 = scalar_lea.vmem %s3, %s341
      // Predicated region
      $region33: #{get_model_forward.5} parent=31 // pred_check
        %p343 = pneg %p121
      $region34: #{get_model_forward.5} parent=31 // pred_check_branch
        %345 = sbr.rel (%p343) target = $region36
      $region35: #{get_model_forward.5} parent=31 // pred_region
        %s346 = smul.u32 4, %s19
      $region36: #{get_model_forward.5} parent=31 // pred_fallthru
        _
    $region32: #{get_model_forward.5} parent=5 // pred_fallthru
      _
    %p347 = scmp.le.s32.totalorder 2, %s9
    // Predicated region
    $region37: #{get_model_forward.5} parent=5 // pred_check
      %p348 = pneg %p347
    $region38: #{get_model_forward.5} parent=5 // pred_check_branch
      %350 = sbr.rel (%p348) target = $region40
    $region39: #{get_model_forward.5} parent=5 // pred_region
      %s351 = ssub.s32 %s9, 2
      // Predicated region
      $region41: #{get_model_forward.5} parent=39 // pred_check
        %p352 = pneg %p127
      $region42: #{get_model_forward.5} parent=39 // pred_check_branch
        %354 = sbr.rel (%p352) target = $region44
      $region43: #{get_model_forward.5} parent=39 // pred_region
        %s355 = smul.u32 4, %s21
        %p356 = scmp.lt.s32.totalorder %s20, 1
        %s357 = scalar_select %p356, %s20, 1
        %p358 = scmp.lt.s32.totalorder %s355, 3
        %s359 = scalar_select %p358, %s355, 3
        %s360 = smul.addr %s357, 4
        %s361 = sadd.s32 %s359, %s360
        %s362 = smul.addr %s361, 4
        %s363 = scalar_lea.vmem %s3, %s362
      $region44: #{get_model_forward.5} parent=39 // pred_fallthru
        _
    $region40: #{get_model_forward.5} parent=5 // pred_fallthru
      _
  $region6: #{get_model_forward.5} parent=0 // loop_footer
    %s13 = sadd.s32 1, %s9
  $region7: #{get_model_forward.5} parent=0 // loop_footer_branch
    %8 = sbr.rel target = $region3
  $region8: #{get_model_forward.5} parent=0 // loop_exit
    _

// kernel: get_model_forward.4
$region0: #{get_model_forward.4}
  #allocation0 [shape = 'u32[]', space=smem, size = 0x4, offset = 0x4, fixed_abs, tag = 'smem constant byte address 0x4 - core index']
  #allocation1 [shape = 'u32[144,128]{1,0:T(1,128)}', space=vmem, size = 0x12000, scoped, tag = 'internal scratch']
  #allocation2 [shape = 'f32[8,1024]{1,0:T(8,128)}', space=vmem, size = 0x8000, scoped, tag = 'scratch operand']
  %s0 = inlined_call_operand.vmem [shape: bf16[2,32,8], index: 0, kind: input, shape index: {}]
  %s1 = inlined_call_operand.vmem [shape: bf16[8,128], index: 1, kind: input, shape index: {}]
  %s2 = inlined_call_operand.vmem [shape: f32[1,128], index: 2, kind: input, shape index: {}]
  %s3 = inlined_call_operand.vmem [shape: bf16[128,128], index: 3, kind: input, shape index: {}]
  %s4 = inlined_call_operand.hbm [shape: f32[1,128], index: 4, kind: input, shape index: {}]
  %s5 = inlined_call_operand.vmem [shape: bf16[128,1024], index: 5, kind: input, shape index: {}]
  %s6 = inlined_call_operand.hbm [shape: f32[1,1024], index: 6, kind: input, shape index: {}]
  %s7 = inlined_call_operand.vmem [shape: f32[2,1,1024], index: 7, kind: output, shape index: {}]
  %s8 = sld [smem:[#allocation0]]
  $region81: #{get_model_forward.4} parent=0
    _
  %s10 = ssub.s32 1, %s8
  %s11 = scalar_select 0, %s10, %s8
  $region1: #{get_model_forward.4} parent=0
    #allocation3 [shape = 'u8[512]{0}', space=vmem, size = 0x400, scoped, tag = 'input window, operand 4, single buffered']
    #allocation4 [shape = 's32[2]{0}', space=sflag, size = 0x8, scoped, tag = 'scoped memory for get_model_forward.4']
    #allocation5 [shape = 'u8[4096]{0}', space=vmem, size = 0x1000, scoped, tag = 'input window, operand 6, single buffered']
    #allocation6 [shape = 's32[1]{0}', space=sflag, size = 0x4, scoped, tag = 'scoped memory for get_model_forward.4']
    %12 = vsyncpa [#allocation4], 0
    %13 = vsyncpa [#allocation6], 0
    loop: start=0, step=1, limit=4
    $region2: #{get_model_forward.4} parent=1 // loop_pre_header
      _
    $region3: #{get_model_forward.4} parent=1 // loop_header
      %s15 = sphi 0, %s19
      %p16 = scmp.ge.s32.totalorder %s15, 4
      %s22 = sphi 0, %s34
      %s23 = sphi 0, %s30
      %s24 = sphi 0, %s22
      %s25 = sphi 0, %s23
      %s26 = sphi 0, %s24
      %s27 = sphi 0, %s25
      %s39 = sphi 0, %s41
      %s42 = sphi 0, %s39
      %s43 = sphi 0, %s42
      %s59 = sphi 0, %s43
      %s63 = sphi 0, %s63
      %s65 = sphi 0, %s63
      %s66 = sphi 0, %s65
      %s80 = sphi 0, %s66
      %s84 = sphi 0, %s84
      %s86 = sphi 0, %s84
      %s87 = sphi 0, %s86
      %s101 = sphi 0, %s87
      %s105 = sphi 0, %s105
      %s107 = sphi 0, %s105
      %s108 = sphi 0, %s107
      %s122 = sphi 0, %s108
      %s126 = sphi 0, %s126
      %s128 = sphi 0, %s126
      %s129 = sphi 0, %s128
      %s143 = sphi 0, %s129
      %s147 = sphi 0, %s147
      %s149 = sphi 0, %s147
      %s150 = sphi 0, %s149
      %s164 = sphi 0, %s150
      %s168 = sphi 0, %s168
      %s170 = sphi 0, %s168
      %s171 = sphi 0, %s170
      %s185 = sphi 0, %s171
      %s191 = sphi 0, %s193
      %s194 = sphi 0, %s191
      %s195 = sphi 0, %s194
      %s211 = sphi 0, %s195
    $region4: #{get_model_forward.4} parent=1 // loop_header_branch
      %18 = sbr.rel (%p16) target = $region8
    $region5: #{get_model_forward.4} parent=1 // loop_body
      %s20 = ssub.s32 %s15, 1
      %s21 = ssub.s32 %s15, 2
      %s28 = sadd.s32 1, %s23
      %p29 = scmp.ge.s32.totalorder %s28, 1
      %s30 = scalar_select %p29, 0, %s28
      %s31 = sadd.s32 1, %s22
      %s32 = scalar_select %p29, %s31, %s22
      %p33 = scmp.ge.s32.totalorder %s32, 2
      %s34 = scalar_select %p33, 0, %s32
      %s35 = ssub.s32 %s22, %s34
      %s36 = ssub.s32 %s23, %s30
      %s37 = sor.u32 %s35, %s36
      %p38 = scmp.eq.s32.totalorder %s37, 0
      %s40 = sadd.s32 %s39, 1
      %s41 = scalar_select %p38, %s39, %s40
      %p44 = pneg %p38
      %p45 = scmp.eq.s32.totalorder %s15, 1
      %p46 = por %p44, %p45
      %p47 = scmp.ne.s32.totalorder %s39, %s42
      %p48 = scmp.eq.s32.totalorder %s15, 0
      %p49 = por %p47, %p48
      %p50 = scmp.ne.s32.totalorder %s39, %s42
      %p51 = scmp.eq.s32.totalorder %s20, 1
      %p52 = por %p50, %p51
      %p53 = scmp.ne.s32.totalorder %s42, %s43
      %p54 = scmp.eq.s32.totalorder %s20, 0
      %p55 = por %p53, %p54
      %p56 = scmp.ne.s32.totalorder %s42, %s43
      %p57 = scmp.eq.s32.totalorder %s21, 1
      %p58 = por %p56, %p57
      %p60 = scmp.ne.s32.totalorder %s43, %s59
      %p61 = scmp.eq.s32.totalorder %s21, 0
      %p62 = por %p60, %p61
      %s64 = sadd.s32 %s63, 1
      %p67 = scmp.eq.s32.totalorder %s15, 1
      %p68 = scmp.ne.s32.totalorder %s63, %s65
      %p69 = scmp.eq.s32.totalorder %s15, 0
      %p70 = por %p68, %p69
      %p71 = scmp.ne.s32.totalorder %s63, %s65
      %p72 = scmp.eq.s32.totalorder %s20, 1
      %p73 = por %p71, %p72
      %p74 = scmp.ne.s32.totalorder %s65, %s66
      %p75 = scmp.eq.s32.totalorder %s20, 0
      %p76 = por %p74, %p75
      %p77 = scmp.ne.s32.totalorder %s65, %s66
      %p78 = scmp.eq.s32.totalorder %s21, 1
      %p79 = por %p77, %p78
      %p81 = scmp.ne.s32.totalorder %s66, %s80
      %p82 = scmp.eq.s32.totalorder %s21, 0
      %p83 = por %p81, %p82
      %s85 = sadd.s32 %s84, 1
      %p88 = scmp.eq.s32.totalorder %s15, 1
      %p89 = scmp.ne.s32.totalorder %s84, %s86
      %p90 = scmp.eq.s32.totalorder %s15, 0
      %p91 = por %p89, %p90
      %p92 = scmp.ne.s32.totalorder %s84, %s86
      %p93 = scmp.eq.s32.totalorder %s20, 1
      %p94 = por %p92, %p93
      %p95 = scmp.ne.s32.totalorder %s86, %s87
      %p96 = scmp.eq.s32.totalorder %s20, 0
      %p97 = por %p95, %p96
      %p98 = scmp.ne.s32.totalorder %s86, %s87
      %p99 = scmp.eq.s32.totalorder %s21, 1
      %p100 = por %p98, %p99
      %p102 = scmp.ne.s32.totalorder %s87, %s101
      %p103 = scmp.eq.s32.totalorder %s21, 0
      %p104 = por %p102, %p103
      %s106 = sadd.s32 %s105, 1
      %p109 = scmp.eq.s32.totalorder %s15, 1
      %p110 = scmp.ne.s32.totalorder %s105, %s107
      %p111 = scmp.eq.s32.totalorder %s15, 0
      %p112 = por %p110, %p111
      %p113 = scmp.ne.s32.totalorder %s105, %s107
      %p114 = scmp.eq.s32.totalorder %s20, 1
      %p115 = por %p113, %p114
      %p116 = scmp.ne.s32.totalorder %s107, %s108
      %p117 = scmp.eq.s32.totalorder %s20, 0
      %p118 = por %p116, %p117
      %p119 = scmp.ne.s32.totalorder %s107, %s108
      %p120 = scmp.eq.s32.totalorder %s21, 1
      %p121 = por %p119, %p120
      %p123 = scmp.ne.s32.totalorder %s108, %s122
      %p124 = scmp.eq.s32.totalorder %s21, 0
      %p125 = por %p123, %p124
      %s127 = sadd.s32 %s126, 1
      %p130 = scmp.eq.s32.totalorder %s15, 1
      %p131 = scmp.ne.s32.totalorder %s126, %s128
      %p132 = scmp.eq.s32.totalorder %s15, 0
      %p133 = por %p131, %p132
      %p134 = scmp.ne.s32.totalorder %s126, %s128
      %p135 = scmp.eq.s32.totalorder %s20, 1
      %p136 = por %p134, %p135
      %p137 = scmp.ne.s32.totalorder %s128, %s129
      %p138 = scmp.eq.s32.totalorder %s20, 0
      %p139 = por %p137, %p138
      %p140 = scmp.ne.s32.totalorder %s128, %s129
      %p141 = scmp.eq.s32.totalorder %s21, 1
      %p142 = por %p140, %p141
      %p144 = scmp.ne.s32.totalorder %s129, %s143
      %p145 = scmp.eq.s32.totalorder %s21, 0
      %p146 = por %p144, %p145
      %s148 = sadd.s32 %s147, 1
      %p151 = scmp.eq.s32.totalorder %s15, 1
      %p152 = scmp.ne.s32.totalorder %s147, %s149
      %p153 = scmp.eq.s32.totalorder %s15, 0
      %p154 = por %p152, %p153
      %p155 = scmp.ne.s32.totalorder %s147, %s149
      %p156 = scmp.eq.s32.totalorder %s20, 1
      %p157 = por %p155, %p156
      %p158 = scmp.ne.s32.totalorder %s149, %s150
      %p159 = scmp.eq.s32.totalorder %s20, 0
      %p160 = por %p158, %p159
      %p161 = scmp.ne.s32.totalorder %s149, %s150
      %p162 = scmp.eq.s32.totalorder %s21, 1
      %p163 = por %p161, %p162
      %p165 = scmp.ne.s32.totalorder %s150, %s164
      %p166 = scmp.eq.s32.totalorder %s21, 0
      %p167 = por %p165, %p166
      %s169 = sadd.s32 %s168, 1
      %p172 = scmp.eq.s32.totalorder %s15, 1
      %p173 = scmp.ne.s32.totalorder %s168, %s170
      %p174 = scmp.eq.s32.totalorder %s15, 0
      %p175 = por %p173, %p174
      %p176 = scmp.ne.s32.totalorder %s168, %s170
      %p177 = scmp.eq.s32.totalorder %s20, 1
      %p178 = por %p176, %p177
      %p179 = scmp.ne.s32.totalorder %s170, %s171
      %p180 = scmp.eq.s32.totalorder %s20, 0
      %p181 = por %p179, %p180
      %p182 = scmp.ne.s32.totalorder %s170, %s171
      %p183 = scmp.eq.s32.totalorder %s21, 1
      %p184 = por %p182, %p183
      %p186 = scmp.ne.s32.totalorder %s171, %s185
      %p187 = scmp.eq.s32.totalorder %s21, 0
      %p188 = por %p186, %p187
      %s189 = ssub.s32 %s22, %s34
      %p190 = scmp.eq.s32.totalorder %s189, 0
      %s192 = sadd.s32 %s191, 1
      %s193 = scalar_select %p190, %s191, %s192
      %p196 = pneg %p190
      %p197 = scmp.eq.s32.totalorder %s15, 1
      %p198 = por %p196, %p197
      %p199 = scmp.ne.s32.totalorder %s191, %s194
      %p200 = scmp.eq.s32.totalorder %s15, 0
      %p201 = por %p199, %p200
      %p202 = scmp.ne.s32.totalorder %s191, %s194
      %p203 = scmp.eq.s32.totalorder %s20, 1
      %p204 = por %p202, %p203
      %p205 = scmp.ne.s32.totalorder %s194, %s195
      %p206 = scmp.eq.s32.totalorder %s20, 0
      %p207 = por %p205, %p206
      %p208 = scmp.ne.s32.totalorder %s194, %s195
      %p209 = scmp.eq.s32.totalorder %s21, 1
      %p210 = por %p208, %p209
      %p212 = scmp.ne.s32.totalorder %s195, %s211
      %p213 = scmp.eq.s32.totalorder %s21, 0
      %p214 = por %p212, %p213
      %p215 = scmp.le.s32.totalorder 1, %s15
      %p216 = scmp.lt.s32.totalorder %s15, 3
      %p217 = pnand %p215, %p216
      %p218 = pneg %p217
      // Predicated region
      $region9: #{get_model_forward.4} parent=5 // pred_check
        _
      $region10: #{get_model_forward.4} parent=5 // pred_check_branch
        %220 = sbr.rel (%p217) target = $region12
      $region11: #{get_model_forward.4} parent=5 // pred_region
        %s221 = ssub.s32 %s15, 1
        // Predicated region
        $region13: #{get_model_forward.4} parent=11 // pred_check
          %p222 = pneg %p76
        $region14: #{get_model_forward.4} parent=11 // pred_check_branch
          %224 = sbr.rel (%p222) target = $region16
        $region15: #{get_model_forward.4} parent=11 // pred_region
          _
        $region16: #{get_model_forward.4} parent=11 // pred_fallthru
          _
        // Predicated region
        $region17: #{get_model_forward.4} parent=11 // pred_check
          %p225 = pneg %p97
        $region18: #{get_model_forward.4} parent=11 // pred_check_branch
          %227 = sbr.rel (%p225) target = $region20
        $region19: #{get_model_forward.4} parent=11 // pred_region
          _
        $region20: #{get_model_forward.4} parent=11 // pred_fallthru
          _
        // Predicated region
        $region21: #{get_model_forward.4} parent=11 // pred_check
          %p228 = pneg %p118
        $region22: #{get_model_forward.4} parent=11 // pred_check_branch
          %230 = sbr.rel (%p228) target = $region24
        $region23: #{get_model_forward.4} parent=11 // pred_region
          _
        $region24: #{get_model_forward.4} parent=11 // pred_fallthru
          _
        // Predicated region
        $region25: #{get_model_forward.4} parent=11 // pred_check
          %p231 = pneg %p139
        $region26: #{get_model_forward.4} parent=11 // pred_check_branch
          %233 = sbr.rel (%p231) target = $region28
        $region27: #{get_model_forward.4} parent=11 // pred_region
          %s235 = ssub.s32 16, 16
          %236 = vsyncadd [#allocation4], %s235
          %s238 = sshll.u32 [#allocation3], 4
          %s239 = int_to_ptr.vmem [resolvable:$true] %s238
          %241 = dma.hbm_to_vmem [thread:$0]  %s4, 16, %s239, [#allocation4]
        $region28: #{get_model_forward.4} parent=11 // pred_fallthru
          _
        // Predicated region
        $region29: #{get_model_forward.4} parent=11 // pred_check
          %p242 = pneg %p160
        $region30: #{get_model_forward.4} parent=11 // pred_check_branch
          %244 = sbr.rel (%p242) target = $region32
        $region31: #{get_model_forward.4} parent=11 // pred_region
          _
        $region32: #{get_model_forward.4} parent=11 // pred_fallthru
          _
        // Predicated region
        $region33: #{get_model_forward.4} parent=11 // pred_check
          %p245 = pneg %p181
        $region34: #{get_model_forward.4} parent=11 // pred_check_branch
          %247 = sbr.rel (%p245) target = $region36
        $region35: #{get_model_forward.4} parent=11 // pred_region
          %s249 = ssub.s32 128, 128
          %250 = vsyncadd [#allocation6], %s249
          %s252 = sshll.u32 [#allocation5], 4
          %s253 = int_to_ptr.vmem [resolvable:$true] %s252
          %255 = dma.hbm_to_vmem [thread:$0]  %s6, 128, %s253, [#allocation6]
        $region36: #{get_model_forward.4} parent=11 // pred_fallthru
          _
      $region12: #{get_model_forward.4} parent=5 // pred_fallthru
        _
      %p256 = scmp.lt.s32.totalorder %s15, 2
      // Predicated region
      $region37: #{get_model_forward.4} parent=5 // pred_check
        %p257 = pneg %p256
      $region38: #{get_model_forward.4} parent=5 // pred_check_branch
        %259 = sbr.rel (%p257) target = $region40
      $region39: #{get_model_forward.4} parent=5 // pred_region
        // Predicated region
        $region41: #{get_model_forward.4} parent=39 // pred_check
          %p260 = pneg %p49
        $region42: #{get_model_forward.4} parent=39 // pred_check_branch
          %262 = sbr.rel (%p260) target = $region44
        $region43: #{get_model_forward.4} parent=39 // pred_region
          %s263 = smul.u32 4, %s23
          %p264 = scmp.lt.s32.totalorder %s22, 1
          %s265 = scalar_select %p264, %s22, 1
          %p266 = scmp.lt.s32.totalorder %s263, 3
          %s267 = scalar_select %p266, %s263, 3
          %s268 = smul.addr %s265, 4
          %s269 = sadd.s32 %s267, %s268
          %s270 = smul.addr %s269, 4
          %s271 = scalar_lea.vmem %s0, %s270
          %s272 = smul.u32 4, %s23
        $region44: #{get_model_forward.4} parent=39 // pred_fallthru
          _
      $region40: #{get_model_forward.4} parent=5 // pred_fallthru
        _
      %p273 = scmp.le.s32.totalorder 1, %s15
      %p274 = scmp.lt.s32.totalorder %s15, 3
      %p275 = pnand %p273, %p274
      %p276 = pneg %p275
      // Predicated region
      $region45: #{get_model_forward.4} parent=5 // pred_check
        _
      $region46: #{get_model_forward.4} parent=5 // pred_check_branch
        %278 = sbr.rel (%p275) target = $region48
      $region47: #{get_model_forward.4} parent=5 // pred_region
        %s279 = ssub.s32 %s15, 1
        // Predicated region
        $region49: #{get_model_forward.4} parent=47 // pred_check
          %p280 = pneg %p139
        $region50: #{get_model_forward.4} parent=47 // pred_check_branch
          %282 = sbr.rel (%p280) target = $region52
        $region51: #{get_model_forward.4} parent=47 // pred_region
          %283 = dma.done [#allocation4], 16
        $region52: #{get_model_forward.4} parent=47 // pred_fallthru
          _
        // Predicated region
        $region53: #{get_model_forward.4} parent=47 // pred_check
          %p284 = pneg %p181
        $region54: #{get_model_forward.4} parent=47 // pred_check_branch
          %286 = sbr.rel (%p284) target = $region56
        $region55: #{get_model_forward.4} parent=47 // pred_region
          %287 = dma.done [#allocation6], 128
        $region56: #{get_model_forward.4} parent=47 // pred_fallthru
          _
        %s288 = smul.u32 4, %s25
        %p289 = scmp.lt.s32.totalorder %s24, 1
        %s290 = scalar_select %p289, %s24, 1
        %p291 = scmp.lt.s32.totalorder %s288, 3
        %s292 = scalar_select %p291, %s288, 3
        %s293 = smul.addr %s290, 4
        %s294 = sadd.s32 %s292, %s293
        %s295 = smul.addr %s294, 4
        %s296 = scalar_lea.vmem %s0, %s295
        %p297 = pneg %p55
        %p298 = pneg %p52
        %p299 = pneg %p76
        %p300 = pneg %p73
        %p301 = pneg %p97
        %p302 = pneg %p94
        %p303 = pneg %p118
        %p304 = pneg %p115
        %p305 = pneg %p139
        %p306 = pneg %p136
        %p307 = pneg %p160
        %p308 = pneg %p157
        %p309 = pneg %p181
        %p310 = pneg %p178
        %p311 = pneg %p207
        %p312 = pneg %p204
        %p313 = scmp.lt.s32.totalorder %s24, 1
        %s314 = scalar_select %p313, %s24, 1
        %s315 = smul.addr %s314, 8
        %s316 = scalar_lea.vmem %s7, %s315
        %s317 = smul.u32 4, %s25
        %p318 = scmp.lt.s32.totalorder %s24, 1
        %s319 = scalar_select %p318, %s24, 1
        %p320 = scmp.lt.s32.totalorder %s317, 3
        %s321 = scalar_select %p320, %s317, 3
        %s322 = smul.addr %s319, 4
        %s323 = sadd.s32 %s321, %s322
        %s324 = smul.addr %s323, 4
        %s325 = scalar_lea.vmem %s0, %s324
        %s326 = smul.u32 4, %s25
        %p327 = scmp.lt.s32.totalorder %s24, 1
        %s328 = scalar_select %p327, %s24, 1
        %s329 = smul.addr %s328, 8
        %s330 = scalar_lea.vmem %s7, %s329
        %p332 = scmp.eq.s32.totalorder %s25, 0
        // Predicated region
        $region57: #{get_model_forward.4} parent=47 // pred_check
          %p333 = pneg %p332
        $region58: #{get_model_forward.4} parent=47 // pred_check_branch
          %335 = sbr.rel (%p333) target = $region60
        $region59: #{get_model_forward.4} parent=47 // pred_region
          %336 = vst [vmem:[#allocation2] sm:$0xff] -inf
          %337 = vst [vmem:[#allocation2 + $0x8] sm:$0xff] -inf
          %338 = vst [vmem:[#allocation2 + $0x10] sm:$0xff] -inf
          %339 = vst [vmem:[#allocation2 + $0x18] sm:$0xff] -inf
          %340 = vst [vmem:[#allocation2 + $0x20] sm:$0xff] -inf
          %341 = vst [vmem:[#allocation2 + $0x28] sm:$0xff] -inf
          %342 = vst [vmem:[#allocation2 + $0x30] sm:$0xff] -inf
          %343 = vst [vmem:[#allocation2 + $0x38] sm:$0xff] -inf
        $region60: #{get_model_forward.4} parent=47 // pred_fallthru
          _
        %v344 = vld [vmem:[%s325] sm:$0xf]
        %v345 = vld [vmem:[%s325 + $0x4] sm:$0xf]
        %v346 = vld [vmem:[%s325 + $0x8] sm:$0xf]
        %v347 = vld [vmem:[%s325 + $0xc] sm:$0xf]
        %v348 = vld [vmem:[%s1] sm:$0xf]
        %v349 = vld [vmem:[%s2] sm:$0x1]
        %v351 = vlaneseq
        %v352 = vshrl.u32 %v351, 7
        %v353 = vsub.s32 0, %v352
        %v354 = vrot.slane %v349, %v353
        %v360 = vunpack.c.l.b16 %v344
        %v361 = vunpack.c.l.b16 %v345
        %v362 = vunpack.c.l.b16 %v346
        %v363 = vunpack.c.l.b16 %v347
        %v364 = vpack.c.b16 %v361, %v360
        %v365 = vpack.c.b16 %v363, %v362
        %vm366 = vcmask 64512
        %v368 = vsel %vm366, %v364, 0
        %v371 = vsel %vm366, %v365, 0
        %vm373 = vcmask 1043456
        %v375 = vsel %vm373, %v348, 0
        %377 = vmatprep.subr.bf16.mxu0 0
        %378 = vmatpush1.bf16.msra.mxu0 %v375
        %379 = vmatprep.subr.bf16.mxu0 0
        %380 = vmatpush1.bf16.msra.mxu0 0
        %381 = vmatprep.subr.bf16.mxu0 0
        %382 = vmatpush1.bf16.msra.mxu0 0
        %383 = vmatprep.subr.bf16.mxu0 0
        %384 = vmatpush1.bf16.msra.mxu0 0
        %385 = vmatprep.subr.bf16.mxu0 0
        %386 = vmatpush1.bf16.msra.mxu0 0
        %387 = vmatprep.subr.bf16.mxu0 0
        %388 = vmatpush1.bf16.msra.mxu0 0
        %389 = vmatprep.subr.bf16.mxu0 0
        %390 = vmatpush1.bf16.msra.mxu0 0
        %391 = vmatprep.subr.bf16.mxu0 0
        %392 = vmatpush1.bf16.msra.mxu0 0
        %393 = vmatprep.subr.bf16.mxu0 0
        %394 = vmatpush1.bf16.msra.mxu0 0
        %395 = vmatprep.subr.bf16.mxu0 0
        %396 = vmatpush1.bf16.msra.mxu0 0
        %397 = vmatprep.subr.bf16.mxu0 0
        %398 = vmatpush1.bf16.msra.mxu0 0
        %399 = vmatprep.subr.bf16.mxu0 0
        %400 = vmatpush1.bf16.msra.mxu0 0
        %401 = vmatprep.subr.bf16.mxu0 0
        %402 = vmatpush1.bf16.msra.mxu0 0
        %403 = vmatprep.subr.bf16.mxu0 0
        %404 = vmatpush1.bf16.msra.mxu0 0
        %405 = vmatprep.subr.bf16.mxu0 0
        %406 = vmatpush1.bf16.msra.mxu0 0
        %407 = vmatprep.subr.bf16.mxu0 0
        %408 = vmatpush1.bf16.msra.mxu0 0
        %409 = vmatprep.mubr.bf16.mxu0 0
        %410 = vmatmul.mubr.bf16.gmra.mrb[0].mxu0 %v368
        %v411 = vpop.f32.mrb[0].mxu0
        %v412 = vadd.f32 %v354, %v411
        %v413 = vpop.f32.mrb[0].mxu0
        %v414 = vpop.f32.mrb[0].mxu0
        %v415 = vadd.f32 %v354, %v414
        %v416 = vpop.f32.mrb[0].mxu0
        %417 = vmatprep.mubr.bf16.mxu0 0
        %418 = vmatmul.mubr.bf16.gmra.mrb[0].mxu0 %v371
        %v419 = vpop.f32.mrb[0].mxu0
        %v420 = vadd.f32 %v354, %v419
        %v421 = vpop.f32.mrb[0].mxu0
        %v422 = vpop.f32.mrb[0].mxu0
        %v423 = vadd.f32 %v354, %v422
        %v424 = vpop.f32.mrb[0].mxu0
        %425 = vdwg.mxu0
        %v426 = vmax.f32 %v412, 0.0
        %v427 = vmax.f32 %v415, 0.0
        %v428 = vmax.f32 %v420, 0.0
        %v429 = vmax.f32 %v423, 0.0
        %v430 = vpack.c.bf16 %v427, %v426
        %v431 = vpack.c.bf16 %v429, %v428
        %v432 = vld [vmem:[%s3] sm:$0xf]
        %v433 = vld [vmem:[%s3 + $0x4] sm:$0xf]
        %v434 = vld [vmem:[%s3 + $0x8] sm:$0xf]
        %v435 = vld [vmem:[%s3 + $0xc] sm:$0xf]
        %v436 = vld [vmem:[%s3 + $0x10] sm:$0xf]
        %v437 = vld [vmem:[%s3 + $0x14] sm:$0xf]
        %v438 = vld [vmem:[%s3 + $0x18] sm:$0xf]
        %v439 = vld [vmem:[%s3 + $0x1c] sm:$0xf]
        %v440 = vld [vmem:[%s3 + $0x20] sm:$0xf]
        %v441 = vld [vmem:[%s3 + $0x24] sm:$0xf]
        %v442 = vld [vmem:[%s3 + $0x28] sm:$0xf]
        %v443 = vld [vmem:[%s3 + $0x2c] sm:$0xf]
        %v444 = vld [vmem:[%s3 + $0x30] sm:$0xf]
        %v445 = vld [vmem:[%s3 + $0x34] sm:$0xf]
        %v446 = vld [vmem:[%s3 + $0x38] sm:$0xf]
        %v447 = vld [vmem:[%s3 + $0x3c] sm:$0xf]
        %v448 = vld [vmem:[#allocation3] sm:$0x1]
        %v450 = vlaneseq
        %v451 = vshrl.u32 %v450, 7
        %v452 = vsub.s32 0, %v451
        %v453 = vrot.slane %v448, %v452
        %v471 = vunpack.c.l.b16 %v432
        %v472 = vunpack.c.l.b16 %v433
        %v473 = vunpack.c.l.b16 %v434
        %v474 = vunpack.c.l.b16 %v435
        %v475 = vunpack.c.l.b16 %v436
        %v476 = vunpack.c.l.b16 %v437
        %v477 = vunpack.c.l.b16 %v438
        %v478 = vunpack.c.l.b16 %v439
        %v479 = vunpack.c.l.b16 %v440
        %v480 = vunpack.c.l.b16 %v441
        %v481 = vunpack.c.l.b16 %v442
        %v482 = vunpack.c.l.b16 %v443
        %v483 = vunpack.c.l.b16 %v444
        %v484 = vunpack.c.l.b16 %v445
        %v485 = vunpack.c.l.b16 %v446
        %v486 = vunpack.c.l.b16 %v447
        %v487 = vpack.c.b16 %v472, %v471
        %v488 = vpack.c.b16 %v474, %v473
        %v489 = vpack.c.b16 %v476, %v475
        %v490 = vpack.c.b16 %v478, %v477
        %v491 = vpack.c.b16 %v480, %v479
        %v492 = vpack.c.b16 %v482, %v481
        %v493 = vpack.c.b16 %v484, %v483
        %v494 = vpack.c.b16 %v486, %v485
        %503 = vmatprep.subr.bf16.mxu0 0
        %504 = vmatpush1.bf16.msra.mxu0 %v487
        %505 = vmatprep.subr.bf16.mxu0 0
        %506 = vmatpush1.bf16.msra.mxu0 %v488
        %507 = vmatprep.subr.bf16.mxu0 0
        %508 = vmatpush1.bf16.msra.mxu0 %v489
        %509 = vmatprep.subr.bf16.mxu0 0
        %510 = vmatpush1.bf16.msra.mxu0 %v490
        %511 = vmatprep.subr.bf16.mxu0 0
        %512 = vmatpush1.bf16.msra.mxu0 %v491
        %513 = vmatprep.subr.bf16.mxu0 0
        %514 = vmatpush1.bf16.msra.mxu0 %v492
        %515 = vmatprep.subr.bf16.mxu0 0
        %516 = vmatpush1.bf16.msra.mxu0 %v493
        %517 = vmatprep.subr.bf16.mxu0 0
        %518 = vmatpush1.bf16.msra.mxu0 %v494
        %519 = vmatprep.subr.bf16.mxu0 0
        %520 = vmatpush1.bf16.msra.mxu0 0
        %521 = vmatprep.subr.bf16.mxu0 0
        %522 = vmatpush1.bf16.msra.mxu0 0
        %523 = vmatprep.subr.bf16.mxu0 0
        %524 = vmatpush1.bf16.msra.mxu0 0
        %525 = vmatprep.subr.bf16.mxu0 0
        %526 = vmatpush1.bf16.msra.mxu0 0
        %527 = vmatprep.subr.bf16.mxu0 0
        %528 = vmatpush1.bf16.msra.mxu0 0
        %529 = vmatprep.subr.bf16.mxu0 0
        %530 = vmatpush1.bf16.msra.mxu0 0
        %531 = vmatprep.subr.bf16.mxu0 0
        %532 = vmatpush1.bf16.msra.mxu0 0
        %533 = vmatprep.subr.bf16.mxu0 0
        %534 = vmatpush1.bf16.msra.mxu0 0
        %535 = vmatprep.mubr.bf16.mxu0 0
        %536 = vmatmul.mubr.bf16.gmra.mrb[0].mxu0 %v430
        %v537 = vpop.f32.mrb[0].mxu0
        %v538 = vadd.f32 %v453, %v537
        %v539 = vpop.f32.mrb[0].mxu0
        %v540 = vpop.f32.mrb[0].mxu0
        %v541 = vadd.f32 %v453, %v540
        %v542 = vpop.f32.mrb[0].mxu0
        %543 = vmatprep.mubr.bf16.mxu0 0
        %544 = vmatmul.mubr.bf16.gmra.mrb[0].mxu0 %v431
        %v545 = vpop.f32.mrb[0].mxu0
        %v546 = vadd.f32 %v453, %v545
        %v547 = vpop.f32.mrb[0].mxu0
        %v548 = vpop.f32.mrb[0].mxu0
        %v549 = vadd.f32 %v453, %v548
        %v550 = vpop.f32.mrb[0].mxu0
        %551 = vdwg.mxu0
        %v552 = vmax.f32 %v538, 0.0
        %v553 = vmax.f32 %v541, 0.0
        %v554 = vmax.f32 %v546, 0.0
        %v555 = vmax.f32 %v549, 0.0
        %v556 = vpack.c.bf16 %v553, %v552
        %v557 = vpack.c.bf16 %v555, %v554
        %v558 = vld [vmem:[%s5] sm:$0xff]
        %v559 = vld [vmem:[%s5 + $0x8] sm:$0xff]
        %v560 = vld [vmem:[%s5 + $0x10] sm:$0xff]
        %v561 = vld [vmem:[%s5 + $0x18] sm:$0xff]
        %v562 = vld [vmem:[%s5 + $0x20] sm:$0xff]
        %v563 = vld [vmem:[%s5 + $0x28] sm:$0xff]
        %v564 = vld [vmem:[%s5 + $0x30] sm:$0xff]
        %v565 = vld [vmem:[%s5 + $0x38] sm:$0xff]
        %v566 = vld [vmem:[%s5 + $0x40] sm:$0xff]
        %v567 = vld [vmem:[%s5 + $0x48] sm:$0xff]
        %v568 = vld [vmem:[%s5 + $0x50] sm:$0xff]
        %v569 = vld [vmem:[%s5 + $0x58] sm:$0xff]
        %v570 = vld [vmem:[%s5 + $0x60] sm:$0xff]
        %v571 = vld [vmem:[%s5 + $0x68] sm:$0xff]
        %v572 = vld [vmem:[%s5 + $0x70] sm:$0xff]
        %v573 = vld [vmem:[%s5 + $0x78] sm:$0xff]
        %v574 = vld [vmem:[%s5 + $0x80] sm:$0xff]
        %v575 = vld [vmem:[%s5 + $0x88] sm:$0xff]
        %v576 = vld [vmem:[%s5 + $0x90] sm:$0xff]
        %v577 = vld [vmem:[%s5 + $0x98] sm:$0xff]
        %v578 = vld [vmem:[%s5 + $0xa0] sm:$0xff]
        %v579 = vld [vmem:[%s5 + $0xa8] sm:$0xff]
        %v580 = vld [vmem:[%s5 + $0xb0] sm:$0xff]
        %v581 = vld [vmem:[%s5 + $0xb8] sm:$0xff]
        %v582 = vld [vmem:[%s5 + $0xc0] sm:$0xff]
        %v583 = vld [vmem:[%s5 + $0xc8] sm:$0xff]
        %v584 = vld [vmem:[%s5 + $0xd0] sm:$0xff]
        %v585 = vld [vmem:[%s5 + $0xd8] sm:$0xff]
        %v586 = vld [vmem:[%s5 + $0xe0] sm:$0xff]
        %v587 = vld [vmem:[%s5 + $0xe8] sm:$0xff]
        %v588 = vld [vmem:[%s5 + $0xf0] sm:$0xff]
        %v589 = vld [vmem:[%s5 + $0xf8] sm:$0xff]
        %v590 = vld [vmem:[%s5 + $0x100] sm:$0xff]
        %v591 = vld [vmem:[%s5 + $0x108] sm:$0xff]
        %v592 = vld [vmem:[%s5 + $0x110] sm:$0xff]
        %v593 = vld [vmem:[%s5 + $0x118] sm:$0xff]
        %v594 = vld [vmem:[%s5 + $0x120] sm:$0xff]
        %v595 = vld [vmem:[%s5 + $0x128] sm:$0xff]
        %v596 = vld [vmem:[%s5 + $0x130] sm:$0xff]
        %v597 = vld [vmem:[%s5 + $0x138] sm:$0xff]
        %v598 = vld [vmem:[%s5 + $0x140] sm:$0xff]
        %v599 = vld [vmem:[%s5 + $0x148] sm:$0xff]
        %v600 = vld [vmem:[%s5 + $0x150] sm:$0xff]
        %v601 = vld [vmem:[%s5 + $0x158] sm:$0xff]
        %v602 = vld [vmem:[%s5 + $0x160] sm:$0xff]
        %v603 = vld [vmem:[%s5 + $0x168] sm:$0xff]
        %v604 = vld [vmem:[%s5 + $0x170] sm:$0xff]
        %v605 = vld [vmem:[%s5 + $0x178] sm:$0xff]
        %v606 = vld [vmem:[%s5 + $0x180] sm:$0xff]
        %v607 = vld [vmem:[%s5 + $0x188] sm:$0xff]
        %v608 = vld [vmem:[%s5 + $0x190] sm:$0xff]
        %v609 = vld [vmem:[%s5 + $0x198] sm:$0xff]
        %v610 = vld [vmem:[%s5 + $0x1a0] sm:$0xff]
        %v611 = vld [vmem:[%s5 + $0x1a8] sm:$0xff]
        %v612 = vld [vmem:[%s5 + $0x1b0] sm:$0xff]
        %v613 = vld [vmem:[%s5 + $0x1b8] sm:$0xff]
        %v614 = vld [vmem:[%s5 + $0x1c0] sm:$0xff]
        %v615 = vld [vmem:[%s5 + $0x1c8] sm:$0xff]
        %v616 = vld [vmem:[%s5 + $0x1d0] sm:$0xff]
        %v617 = vld [vmem:[%s5 + $0x1d8] sm:$0xff]
        %v618 = vld [vmem:[%s5 + $0x1e0] sm:$0xff]
        %v619 = vld [vmem:[%s5 + $0x1e8] sm:$0xff]
        %v620 = vld [vmem:[%s5 + $0x1f0] sm:$0xff]
        %v621 = vld [vmem:[%s5 + $0x1f8] sm:$0xff]
        %v622 = vld [vmem:[#allocation5] sm:$0xff]
        %v624 = vlaneseq
        %v625 = vshrl.u32 %v624, 7
        %v626 = vsub.s32 0, %v625
        %v627 = vrot.slane %v622, %v626
        %v628 = vlaneseq
        %v629 = vshrl.u32 %v628, 7
        %v630 = vsub.s32 1, %v629
        %v631 = vrot.slane %v622, %v630
        %v632 = vlaneseq
        %v633 = vshrl.u32 %v632, 7
        %v634 = vsub.s32 2, %v633
        %v635 = vrot.slane %v622, %v634
        %v636 = vlaneseq
        %v637 = vshrl.u32 %v636, 7
        %v638 = vsub.s32 3, %v637
        %v639 = vrot.slane %v622, %v638
        %v640 = vlaneseq
        %v641 = vshrl.u32 %v640, 7
        %v642 = vsub.s32 4, %v641
        %v643 = vrot.slane %v622, %v642
        %v644 = vlaneseq
        %v645 = vshrl.u32 %v644, 7
        %v646 = vsub.s32 5, %v645
        %v647 = vrot.slane %v622, %v646
        %v648 = vlaneseq
        %v649 = vshrl.u32 %v648, 7
        %v650 = vsub.s32 6, %v649
        %v651 = vrot.slane %v622, %v650
        %v652 = vlaneseq
        %v653 = vshrl.u32 %v652, 7
        %v654 = vsub.s32 7, %v653
        %v655 = vrot.slane %v622, %v654
        %v728 = vunpack.c.l.b16 %v558
        %v729 = vunpack.c.h.b16 %v558
        %v730 = vunpack.c.l.b16 %v559
        %v731 = vunpack.c.h.b16 %v559
        %v732 = vunpack.c.l.b16 %v560
        %v733 = vunpack.c.h.b16 %v560
        %v734 = vunpack.c.l.b16 %v561
        %v735 = vunpack.c.h.b16 %v561
        %v736 = vunpack.c.l.b16 %v562
        %v737 = vunpack.c.h.b16 %v562
        %v738 = vunpack.c.l.b16 %v563
        %v739 = vunpack.c.h.b16 %v563
        %v740 = vunpack.c.l.b16 %v564
        %v741 = vunpack.c.h.b16 %v564
        %v742 = vunpack.c.l.b16 %v565
        %v743 = vunpack.c.h.b16 %v565
        %v744 = vunpack.c.l.b16 %v566
        %v745 = vunpack.c.h.b16 %v566
        %v746 = vunpack.c.l.b16 %v567
        %v747 = vunpack.c.h.b16 %v567
        %v748 = vunpack.c.l.b16 %v568
        %v749 = vunpack.c.h.b16 %v568
        %v750 = vunpack.c.l.b16 %v569
        %v751 = vunpack.c.h.b16 %v569
        %v752 = vunpack.c.l.b16 %v570
        %v753 = vunpack.c.h.b16 %v570
        %v754 = vunpack.c.l.b16 %v571
        %v755 = vunpack.c.h.b16 %v571
        %v756 = vunpack.c.l.b16 %v572
        %v757 = vunpack.c.h.b16 %v572
        %v758 = vunpack.c.l.b16 %v573
        %v759 = vunpack.c.h.b16 %v573
        %v760 = vunpack.c.l.b16 %v574
        %v761 = vunpack.c.h.b16 %v574
        %v762 = vunpack.c.l.b16 %v575
        %v763 = vunpack.c.h.b16 %v575
        %v764 = vunpack.c.l.b16 %v576
        %v765 = vunpack.c.h.b16 %v576
        %v766 = vunpack.c.l.b16 %v577
        %v767 = vunpack.c.h.b16 %v577
        %v768 = vunpack.c.l.b16 %v578
        %v769 = vunpack.c.h.b16 %v578
        %v770 = vunpack.c.l.b16 %v579
        %v771 = vunpack.c.h.b16 %v579
        %v772 = vunpack.c.l.b16 %v580
        %v773 = vunpack.c.h.b16 %v580
        %v774 = vunpack.c.l.b16 %v581
        %v775 = vunpack.c.h.b16 %v581
        %v776 = vunpack.c.l.b16 %v582
        %v777 = vunpack.c.h.b16 %v582
        %v778 = vunpack.c.l.b16 %v583
        %v779 = vunpack.c.h.b16 %v583
        %v780 = vunpack.c.l.b16 %v584
        %v781 = vunpack.c.h.b16 %v584
        %v782 = vunpack.c.l.b16 %v585
        %v783 = vunpack.c.h.b16 %v585
        %v784 = vunpack.c.l.b16 %v586
        %v785 = vunpack.c.h.b16 %v586
        %v786 = vunpack.c.l.b16 %v587
        %v787 = vunpack.c.h.b16 %v587
        %v788 = vunpack.c.l.b16 %v588
        %v789 = vunpack.c.h.b16 %v588
        %v790 = vunpack.c.l.b16 %v589
        %v791 = vunpack.c.h.b16 %v589
        %v792 = vunpack.c.l.b16 %v590
        %v793 = vunpack.c.h.b16 %v590
        %v794 = vunpack.c.l.b16 %v591
        %v795 = vunpack.c.h.b16 %v591
        %v796 = vunpack.c.l.b16 %v592
        %v797 = vunpack.c.h.b16 %v592
        %v798 = vunpack.c.l.b16 %v593
        %v799 = vunpack.c.h.b16 %v593
        %v800 = vunpack.c.l.b16 %v594
        %v801 = vunpack.c.h.b16 %v594
        %v802 = vunpack.c.l.b16 %v595
        %v803 = vunpack.c.h.b16 %v595
        %v804 = vunpack.c.l.b16 %v596
        %v805 = vunpack.c.h.b16 %v596
        %v806 = vunpack.c.l.b16 %v597
        %v807 = vunpack.c.h.b16 %v597
        %v808 = vunpack.c.l.b16 %v598
        %v809 = vunpack.c.h.b16 %v598
        %v810 = vunpack.c.l.b16 %v599
        %v811 = vunpack.c.h.b16 %v599
        %v812 = vunpack.c.l.b16 %v600
        %v813 = vunpack.c.h.b16 %v600
        %v814 = vunpack.c.l.b16 %v601
        %v815 = vunpack.c.h.b16 %v601
        %v816 = vunpack.c.l.b16 %v602
        %v817 = vunpack.c.h.b16 %v602
        %v818 = vunpack.c.l.b16 %v603
        %v819 = vunpack.c.h.b16 %v603
        %v820 = vunpack.c.l.b16 %v604
        %v821 = vunpack.c.h.b16 %v604
        %v822 = vunpack.c.l.b16 %v605
        %v823 = vunpack.c.h.b16 %v605
        %v824 = vunpack.c.l.b16 %v606
        %v825 = vunpack.c.h.b16 %v606
        %v826 = vunpack.c.l.b16 %v607
        %v827 = vunpack.c.h.b16 %v607
        %v828 = vunpack.c.l.b16 %v608
        %v829 = vunpack.c.h.b16 %v608
        %v830 = vunpack.c.l.b16 %v609
        %v831 = vunpack.c.h.b16 %v609
        %v832 = vunpack.c.l.b16 %v610
        %v833 = vunpack.c.h.b16 %v610
        %v834 = vunpack.c.l.b16 %v611
        %v835 = vunpack.c.h.b16 %v611
        %v836 = vunpack.c.l.b16 %v612
        %v837 = vunpack.c.h.b16 %v612
        %v838 = vunpack.c.l.b16 %v613
        %v839 = vunpack.c.h.b16 %v613
        %v840 = vunpack.c.l.b16 %v614
        %v841 = vunpack.c.h.b16 %v614
        %v842 = vunpack.c.l.b16 %v615
        %v843 = vunpack.c.h.b16 %v615
        %v844 = vunpack.c.l.b16 %v616
        %v845 = vunpack.c.h.b16 %v616
        %v846 = vunpack.c.l.b16 %v617
        %v847 = vunpack.c.h.b16 %v617
        %v848 = vunpack.c.l.b16 %v618
        %v849 = vunpack.c.h.b16 %v618
        %v850 = vunpack.c.l.b16 %v619
        %v851 = vunpack.c.h.b16 %v619
        %v852 = vunpack.c.l.b16 %v620
        %v853 = vunpack.c.h.b16 %v620
        %v854 = vunpack.c.l.b16 %v621
        %v855 = vunpack.c.h.b16 %v621
        %v856 = vpack.c.b16 %v736, %v728
        %v857 = vpack.c.b16 %v737, %v729
        %v858 = vpack.c.b16 %v738, %v730
        %v859 = vpack.c.b16 %v739, %v731
        %v860 = vpack.c.b16 %v740, %v732
        %v861 = vpack.c.b16 %v741, %v733
        %v862 = vpack.c.b16 %v742, %v734
        %v863 = vpack.c.b16 %v743, %v735
        %v864 = vpack.c.b16 %v752, %v744
        %v865 = vpack.c.b16 %v753, %v745
        %v866 = vpack.c.b16 %v754, %v746
        %v867 = vpack.c.b16 %v755, %v747
        %v868 = vpack.c.b16 %v756, %v748
        %v869 = vpack.c.b16 %v757, %v749
        %v870 = vpack.c.b16 %v758, %v750
        %v871 = vpack.c.b16 %v759, %v751
        %v872 = vpack.c.b16 %v768, %v760
        %v873 = vpack.c.b16 %v769, %v761
        %v874 = vpack.c.b16 %v770, %v762
        %v875 = vpack.c.b16 %v771, %v763
        %v876 = vpack.c.b16 %v772, %v764
        %v877 = vpack.c.b16 %v773, %v765
        %v878 = vpack.c.b16 %v774, %v766
        %v879 = vpack.c.b16 %v775, %v767
        %v880 = vpack.c.b16 %v784, %v776
        %v881 = vpack.c.b16 %v785, %v777
        %v882 = vpack.c.b16 %v786, %v778
        %v883 = vpack.c.b16 %v787, %v779
        %v884 = vpack.c.b16 %v788, %v780
        %v885 = vpack.c.b16 %v789, %v781
        %v886 = vpack.c.b16 %v790, %v782
        %v887 = vpack.c.b16 %v791, %v783
        %v888 = vpack.c.b16 %v800, %v792
        %v889 = vpack.c.b16 %v801, %v793
        %v890 = vpack.c.b16 %v802, %v794
        %v891 = vpack.c.b16 %v803, %v795
        %v892 = vpack.c.b16 %v804, %v796
        %v893 = vpack.c.b16 %v805, %v797
        %v894 = vpack.c.b16 %v806, %v798
        %v895 = vpack.c.b16 %v807, %v799
        %v896 = vpack.c.b16 %v816, %v808
        %v897 = vpack.c.b16 %v817, %v809
        %v898 = vpack.c.b16 %v818, %v810
        %v899 = vpack.c.b16 %v819, %v811
        %v900 = vpack.c.b16 %v820, %v812
        %v901 = vpack.c.b16 %v821, %v813
        %v902 = vpack.c.b16 %v822, %v814
        %v903 = vpack.c.b16 %v823, %v815
        %v904 = vpack.c.b16 %v832, %v824
        %v905 = vpack.c.b16 %v833, %v825
        %v906 = vpack.c.b16 %v834, %v826
        %v907 = vpack.c.b16 %v835, %v827
        %v908 = vpack.c.b16 %v836, %v828
        %v909 = vpack.c.b16 %v837, %v829
        %v910 = vpack.c.b16 %v838, %v830
        %v911 = vpack.c.b16 %v839, %v831
        %v912 = vpack.c.b16 %v848, %v840
        %v913 = vpack.c.b16 %v849, %v841
        %v914 = vpack.c.b16 %v850, %v842
        %v915 = vpack.c.b16 %v851, %v843
        %v916 = vpack.c.b16 %v852, %v844
        %v917 = vpack.c.b16 %v853, %v845
        %v918 = vpack.c.b16 %v854, %v846
        %v919 = vpack.c.b16 %v855, %v847
        %984 = vmatprep.subr.bf16.mxu0 %v857
        %985 = vmatpush1.bf16.msra.mxu0 %v856
        %986 = vmatprep.subr.bf16.mxu0 %v865
        %987 = vmatpush1.bf16.msra.mxu0 %v864
        %988 = vmatprep.subr.bf16.mxu0 %v873
        %989 = vmatpush1.bf16.msra.mxu0 %v872
        %990 = vmatprep.subr.bf16.mxu0 %v881
        %991 = vmatpush1.bf16.msra.mxu0 %v880
        %992 = vmatprep.subr.bf16.mxu0 %v889
        %993 = vmatpush1.bf16.msra.mxu0 %v888
        %994 = vmatprep.subr.bf16.mxu0 %v897
        %995 = vmatpush1.bf16.msra.mxu0 %v896
        %996 = vmatprep.subr.bf16.mxu0 %v905
        %997 = vmatpush1.bf16.msra.mxu0 %v904
        %998 = vmatprep.subr.bf16.mxu0 %v913
        %999 = vmatpush1.bf16.msra.mxu0 %v912
        %1000 = vmatprep.subr.bf16.mxu0 0
        %1001 = vmatpush1.bf16.msra.mxu0 0
        %1002 = vmatprep.subr.bf16.mxu0 0
        %1003 = vmatpush1.bf16.msra.mxu0 0
        %1004 = vmatprep.subr.bf16.mxu0 0
        %1005 = vmatpush1.bf16.msra.mxu0 0
        %1006 = vmatprep.subr.bf16.mxu0 0
        %1007 = vmatpush1.bf16.msra.mxu0 0
        %1008 = vmatprep.subr.bf16.mxu0 0
        %1009 = vmatpush1.bf16.msra.mxu0 0
        %1010 = vmatprep.subr.bf16.mxu0 0
        %1011 = vmatpush1.bf16.msra.mxu0 0
        %1012 = vmatprep.subr.bf16.mxu0 0
        %1013 = vmatpush1.bf16.msra.mxu0 0
        %1014 = vmatprep.subr.bf16.mxu0 0
        %1015 = vmatpush1.bf16.msra.mxu0 0
        %1016 = vmatprep.mubr.bf16.mxu0 0
        %1017 = vmatmul.mubr.bf16.gmra.mrb[0].mxu0 %v556
        %v1018 = vpop.f32.mrb[0].mxu0
        %v1019 = vadd.f32 %v627, %v1018
        %v1020 = vpop.f32.mrb[0].mxu0
        %v1021 = vadd.f32 %v631, %v1020
        %v1022 = vpop.f32.mrb[0].mxu0
        %v1023 = vadd.f32 %v627, %v1022
        %v1024 = vpop.f32.mrb[0].mxu0
        %v1025 = vadd.f32 %v631, %v1024
        %1026 = vmatprep.mubr.bf16.mxu0 0
        %1027 = vmatmul.mubr.bf16.gmra.mrb[0].mxu0 %v557
        %v1028 = vpop.f32.mrb[0].mxu0
        %v1029 = vadd.f32 %v627, %v1028
        %v1030 = vpop.f32.mrb[0].mxu0
        %v1031 = vadd.f32 %v631, %v1030
        %v1032 = vpop.f32.mrb[0].mxu0
        %v1033 = vadd.f32 %v627, %v1032
        %v1034 = vpop.f32.mrb[0].mxu0
        %v1035 = vadd.f32 %v631, %v1034
        %1036 = vdwg.mxu0
        %1037 = vmatprep.subr.bf16.mxu0 %v859
        %1038 = vmatpush1.bf16.msra.mxu0 %v858
        %1039 = vmatprep.subr.bf16.mxu0 %v867
        %1040 = vmatpush1.bf16.msra.mxu0 %v866
        %1041 = vmatprep.subr.bf16.mxu0 %v875
        %1042 = vmatpush1.bf16.msra.mxu0 %v874
        %1043 = vmatprep.subr.bf16.mxu0 %v883
        %1044 = vmatpush1.bf16.msra.mxu0 %v882
        %1045 = vmatprep.subr.bf16.mxu0 %v891
        %1046 = vmatpush1.bf16.msra.mxu0 %v890
        %1047 = vmatprep.subr.bf16.mxu0 %v899
        %1048 = vmatpush1.bf16.msra.mxu0 %v898
        %1049 = vmatprep.subr.bf16.mxu0 %v907
        %1050 = vmatpush1.bf16.msra.mxu0 %v906
        %1051 = vmatprep.subr.bf16.mxu0 %v915
        %1052 = vmatpush1.bf16.msra.mxu0 %v914
        %1053 = vmatprep.subr.bf16.mxu0 0
        %1054 = vmatpush1.bf16.msra.mxu0 0
        %1055 = vmatprep.subr.bf16.mxu0 0
        %1056 = vmatpush1.bf16.msra.mxu0 0
        %1057 = vmatprep.subr.bf16.mxu0 0
        %1058 = vmatpush1.bf16.msra.mxu0 0
        %1059 = vmatprep.subr.bf16.mxu0 0
        %1060 = vmatpush1.bf16.msra.mxu0 0
        %1061 = vmatprep.subr.bf16.mxu0 0
        %1062 = vmatpush1.bf16.msra.mxu0 0
        %1063 = vmatprep.subr.bf16.mxu0 0
        %1064 = vmatpush1.bf16.msra.mxu0 0
        %1065 = vmatprep.subr.bf16.mxu0 0
        %1066 = vmatpush1.bf16.msra.mxu0 0
        %1067 = vmatprep.subr.bf16.mxu0 0
        %1068 = vmatpush1.bf16.msra.mxu0 0
        %1069 = vmatprep.mubr.bf16.mxu0 0
        %1070 = vmatmul.mubr.bf16.gmra.mrb[0].mxu0 %v556
        %v1071 = vpop.f32.mrb[0].mxu0
        %v1072 = vadd.f32 %v635, %v1071
        %v1073 = vpop.f32.mrb[0].mxu0
        %v1074 = vadd.f32 %v639, %v1073
        %v1075 = vpop.f32.mrb[0].mxu0
        %v1076 = vadd.f32 %v635, %v1075
        %v1077 = vpop.f32.mrb[0].mxu0
        %v1078 = vadd.f32 %v639, %v1077
        %1079 = vmatprep.mubr.bf16.mxu0 0
        %1080 = vmatmul.mubr.bf16.gmra.mrb[0].mxu0 %v557
        %v1081 = vpop.f32.mrb[0].mxu0
        %v1082 = vadd.f32 %v635, %v1081
        %v1083 = vpop.f32.mrb[0].mxu0
        %v1084 = vadd.f32 %v639, %v1083
        %v1085 = vpop.f32.mrb[0].mxu0
        %v1086 = vadd.f32 %v635, %v1085
        %v1087 = vpop.f32.mrb[0].mxu0
        %v1088 = vadd.f32 %v639, %v1087
        %1089 = vdwg.mxu0
        %1090 = vmatprep.subr.bf16.mxu0 %v861
        %1091 = vmatpush1.bf16.msra.mxu0 %v860
        %1092 = vmatprep.subr.bf16.mxu0 %v869
        %1093 = vmatpush1.bf16.msra.mxu0 %v868
        %1094 = vmatprep.subr.bf16.mxu0 %v877
        %1095 = vmatpush1.bf16.msra.mxu0 %v876
        %1096 = vmatprep.subr.bf16.mxu0 %v885
        %1097 = vmatpush1.bf16.msra.mxu0 %v884
        %1098 = vmatprep.subr.bf16.mxu0 %v893
        %1099 = vmatpush1.bf16.msra.mxu0 %v892
        %1100 = vmatprep.subr.bf16.mxu0 %v901
        %1101 = vmatpush1.bf16.msra.mxu0 %v900
        %1102 = vmatprep.subr.bf16.mxu0 %v909
        %1103 = vmatpush1.bf16.msra.mxu0 %v908
        %1104 = vmatprep.subr.bf16.mxu0 %v917
        %1105 = vmatpush1.bf16.msra.mxu0 %v916
        %1106 = vmatprep.subr.bf16.mxu0 0
        %1107 = vmatpush1.bf16.msra.mxu0 0
        %1108 = vmatprep.subr.bf16.mxu0 0
        %1109 = vmatpush1.bf16.msra.mxu0 0
        %1110 = vmatprep.subr.bf16.mxu0 0
        %1111 = vmatpush1.bf16.msra.mxu0 0
        %1112 = vmatprep.subr.bf16.mxu0 0
        %1113 = vmatpush1.bf16.msra.mxu0 0
        %1114 = vmatprep.subr.bf16.mxu0 0
        %1115 = vmatpush1.bf16.msra.mxu0 0
        %1116 = vmatprep.subr.bf16.mxu0 0
        %1117 = vmatpush1.bf16.msra.mxu0 0
        %1118 = vmatprep.subr.bf16.mxu0 0
        %1119 = vmatpush1.bf16.msra.mxu0 0
        %1120 = vmatprep.subr.bf16.mxu0 0
        %1121 = vmatpush1.bf16.msra.mxu0 0
        %1122 = vmatprep.mubr.bf16.mxu0 0
        %1123 = vmatmul.mubr.bf16.gmra.mrb[0].mxu0 %v556
        %v1124 = vpop.f32.mrb[0].mxu0
        %v1125 = vadd.f32 %v643, %v1124
        %v1126 = vpop.f32.mrb[0].mxu0
        %v1127 = vadd.f32 %v647, %v1126
        %v1128 = vpop.f32.mrb[0].mxu0
        %v1129 = vadd.f32 %v643, %v1128
        %v1130 = vpop.f32.mrb[0].mxu0
        %v1131 = vadd.f32 %v647, %v1130
        %1132 = vmatprep.mubr.bf16.mxu0 0
        %1133 = vmatmul.mubr.bf16.gmra.mrb[0].mxu0 %v557
        %v1134 = vpop.f32.mrb[0].mxu0
        %v1135 = vadd.f32 %v643, %v1134
        %v1136 = vpop.f32.mrb[0].mxu0
        %v1137 = vadd.f32 %v647, %v1136
        %v1138 = vpop.f32.mrb[0].mxu0
        %v1139 = vadd.f32 %v643, %v1138
        %v1140 = vpop.f32.mrb[0].mxu0
        %v1141 = vadd.f32 %v647, %v1140
        %1142 = vdwg.mxu0
        %1143 = vmatprep.subr.bf16.mxu0 %v863
        %1144 = vmatpush1.bf16.msra.mxu0 %v862
        %1145 = vmatprep.subr.bf16.mxu0 %v871
        %1146 = vmatpush1.bf16.msra.mxu0 %v870
        %1147 = vmatprep.subr.bf16.mxu0 %v879
        %1148 = vmatpush1.bf16.msra.mxu0 %v878
        %1149 = vmatprep.subr.bf16.mxu0 %v887
        %1150 = vmatpush1.bf16.msra.mxu0 %v886
        %1151 = vmatprep.subr.bf16.mxu0 %v895
        %1152 = vmatpush1.bf16.msra.mxu0 %v894
        %1153 = vmatprep.subr.bf16.mxu0 %v903
        %1154 = vmatpush1.bf16.msra.mxu0 %v902
        %1155 = vmatprep.subr.bf16.mxu0 %v911
        %1156 = vmatpush1.bf16.msra.mxu0 %v910
        %1157 = vmatprep.subr.bf16.mxu0 %v919
        %1158 = vmatpush1.bf16.msra.mxu0 %v918
        %1159 = vmatprep.subr.bf16.mxu0 0
        %1160 = vmatpush1.bf16.msra.mxu0 0
        %1161 = vmatprep.subr.bf16.mxu0 0
        %1162 = vmatpush1.bf16.msra.mxu0 0
        %1163 = vmatprep.subr.bf16.mxu0 0
        %1164 = vmatpush1.bf16.msra.mxu0 0
        %1165 = vmatprep.subr.bf16.mxu0 0
        %1166 = vmatpush1.bf16.msra.mxu0 0
        %1167 = vmatprep.subr.bf16.mxu0 0
        %1168 = vmatpush1.bf16.msra.mxu0 0
        %1169 = vmatprep.subr.bf16.mxu0 0
        %1170 = vmatpush1.bf16.msra.mxu0 0
        %1171 = vmatprep.subr.bf16.mxu0 0
        %1172 = vmatpush1.bf16.msra.mxu0 0
        %1173 = vmatprep.subr.bf16.mxu0 0
        %1174 = vmatpush1.bf16.msra.mxu0 0
        %1175 = vmatprep.mubr.bf16.mxu0 0
        %1176 = vmatmul.mubr.bf16.gmra.mrb[0].mxu0 %v556
        %v1177 = vpop.f32.mrb[0].mxu0
        %v1178 = vadd.f32 %v651, %v1177
        %v1179 = vpop.f32.mrb[0].mxu0
        %v1180 = vadd.f32 %v655, %v1179
        %v1181 = vpop.f32.mrb[0].mxu0
        %v1182 = vadd.f32 %v651, %v1181
        %v1183 = vpop.f32.mrb[0].mxu0
        %v1184 = vadd.f32 %v655, %v1183
        %1185 = vmatprep.mubr.bf16.mxu0 0
        %1186 = vmatmul.mubr.bf16.gmra.mrb[0].mxu0 %v557
        %v1187 = vpop.f32.mrb[0].mxu0
        %v1188 = vadd.f32 %v651, %v1187
        %v1189 = vpop.f32.mrb[0].mxu0
        %v1190 = vadd.f32 %v655, %v1189
        %v1191 = vpop.f32.mrb[0].mxu0
        %v1192 = vadd.f32 %v651, %v1191
        %v1193 = vpop.f32.mrb[0].mxu0
        %v1194 = vadd.f32 %v655, %v1193
        %1195 = vdwg.mxu0
        %v1196 = vmax.f32 %v1019, 0.0
        %v1197 = vmax.f32 %v1021, 0.0
        %v1198 = vmax.f32 %v1072, 0.0
        %v1199 = vmax.f32 %v1074, 0.0
        %v1200 = vmax.f32 %v1125, 0.0
        %v1201 = vmax.f32 %v1127, 0.0
        %v1202 = vmax.f32 %v1178, 0.0
        %v1203 = vmax.f32 %v1180, 0.0
        %v1204 = vmax.f32 %v1023, 0.0
        %v1205 = vmax.f32 %v1025, 0.0
        %v1206 = vmax.f32 %v1076, 0.0
        %v1207 = vmax.f32 %v1078, 0.0
        %v1208 = vmax.f32 %v1129, 0.0
        %v1209 = vmax.f32 %v1131, 0.0
        %v1210 = vmax.f32 %v1182, 0.0
        %v1211 = vmax.f32 %v1184, 0.0
        %v1212 = vmax.f32 %v1029, 0.0
        %v1213 = vmax.f32 %v1031, 0.0
        %v1214 = vmax.f32 %v1082, 0.0
        %v1215 = vmax.f32 %v1084, 0.0
        %v1216 = vmax.f32 %v1135, 0.0
        %v1217 = vmax.f32 %v1137, 0.0
        %v1218 = vmax.f32 %v1188, 0.0
        %v1219 = vmax.f32 %v1190, 0.0
        %v1220 = vmax.f32 %v1033, 0.0
        %v1221 = vmax.f32 %v1035, 0.0
        %v1222 = vmax.f32 %v1086, 0.0
        %v1223 = vmax.f32 %v1088, 0.0
        %v1224 = vmax.f32 %v1139, 0.0
        %v1225 = vmax.f32 %v1141, 0.0
        %v1226 = vmax.f32 %v1192, 0.0
        %v1227 = vmax.f32 %v1194, 0.0
        %p1228 = scmp.ne.s32.totalorder %s25, 0
        // Predicated region
        $region61: #{get_model_forward.4} parent=47 // pred_check
          %p1229 = pneg %p1228
        $region62: #{get_model_forward.4} parent=47 // pred_check_branch
          %1231 = sbr.rel (%p1229) target = $region64
        $region63: #{get_model_forward.4} parent=47 // pred_region
          %v1232 = vld [vmem:[#allocation2] sm:$0xff]
          %v1233 = vld [vmem:[#allocation2 + $0x8] sm:$0xff]
          %v1234 = vld [vmem:[#allocation2 + $0x10] sm:$0xff]
          %v1235 = vld [vmem:[#allocation2 + $0x18] sm:$0xff]
          %v1236 = vld [vmem:[#allocation2 + $0x20] sm:$0xff]
          %v1237 = vld [vmem:[#allocation2 + $0x28] sm:$0xff]
          %v1238 = vld [vmem:[#allocation2 + $0x30] sm:$0xff]
          %v1239 = vld [vmem:[#allocation2 + $0x38] sm:$0xff]
          %v1240 = vmax.f32 %v1196, %v1204
          %v1241 = vmax.f32 %v1197, %v1205
          %v1242 = vmax.f32 %v1198, %v1206
          %v1243 = vmax.f32 %v1199, %v1207
          %v1244 = vmax.f32 %v1200, %v1208
          %v1245 = vmax.f32 %v1201, %v1209
          %v1246 = vmax.f32 %v1202, %v1210
          %v1247 = vmax.f32 %v1203, %v1211
          %v1248 = vmax.f32 %v1240, %v1212
          %v1249 = vmax.f32 %v1241, %v1213
          %v1250 = vmax.f32 %v1242, %v1214
          %v1251 = vmax.f32 %v1243, %v1215
          %v1252 = vmax.f32 %v1244, %v1216
          %v1253 = vmax.f32 %v1245, %v1217
          %v1254 = vmax.f32 %v1246, %v1218
          %v1255 = vmax.f32 %v1247, %v1219
          %v1256 = vmax.f32 %v1248, %v1220
          %v1257 = vmax.f32 %v1249, %v1221
          %v1258 = vmax.f32 %v1250, %v1222
          %v1259 = vmax.f32 %v1251, %v1223
          %v1260 = vmax.f32 %v1252, %v1224
          %v1261 = vmax.f32 %v1253, %v1225
          %v1262 = vmax.f32 %v1254, %v1226
          %v1263 = vmax.f32 %v1255, %v1227
          %v1264 = vmax.f32 %v1232, %v1256
          %v1265 = vmax.f32 %v1233, %v1257
          %v1266 = vmax.f32 %v1234, %v1258
          %v1267 = vmax.f32 %v1235, %v1259
          %v1268 = vmax.f32 %v1236, %v1260
          %v1269 = vmax.f32 %v1237, %v1261
          %v1270 = vmax.f32 %v1238, %v1262
          %v1271 = vmax.f32 %v1239, %v1263
          %1272 = vst [vmem:[#allocation2] sm:$0xff] %v1264
          %1273 = vst [vmem:[#allocation2 + $0x8] sm:$0xff] %v1265
          %1274 = vst [vmem:[#allocation2 + $0x10] sm:$0xff] %v1266
          %1275 = vst [vmem:[#allocation2 + $0x18] sm:$0xff] %v1267
          %1276 = vst [vmem:[#allocation2 + $0x20] sm:$0xff] %v1268
          %1277 = vst [vmem:[#allocation2 + $0x28] sm:$0xff] %v1269
          %1278 = vst [vmem:[#allocation2 + $0x30] sm:$0xff] %v1270
          %1279 = vst [vmem:[#allocation2 + $0x38] sm:$0xff] %v1271
        $region64: #{get_model_forward.4} parent=47 // pred_fallthru
          _
        // Predicated region
        $region65: #{get_model_forward.4} parent=47 // pred_check
          %p1280 = pneg %p332
        $region66: #{get_model_forward.4} parent=47 // pred_check_branch
          %1282 = sbr.rel (%p1280) target = $region68
        $region67: #{get_model_forward.4} parent=47 // pred_region
          %v1283 = vlaneseq
          %v1284 = vshrl.u32 %v1283, 7
          %v1285 = vadd.s32 %v1284, 8
          %v1286 = vadd.s32 %v1284, 16
          %v1287 = vadd.s32 %v1284, 24
          %s1288 = smul.u32 %s25, 32
          %v1289 = vstv %s1288
          %v1290 = vadd.s32 %v1284, %v1289
          %v1291 = vadd.s32 %v1285, %v1289
          %v1292 = vadd.s32 %v1286, %v1289
          %v1293 = vadd.s32 %v1287, %v1289
          %vm1294 = vcmp.lt.s32.totalorder %v1290, 30
          %vm1295 = vcmp.lt.s32.totalorder %v1291, 30
          %vm1296 = vcmp.lt.s32.totalorder %v1292, 30
          %vm1297 = vcmp.lt.s32.totalorder %v1293, 30
          %v1298 = vsel %vm1294, %v1196, -inf
          %v1299 = vsel %vm1294, %v1197, -inf
          %v1300 = vsel %vm1294, %v1198, -inf
          %v1301 = vsel %vm1294, %v1199, -inf
          %v1302 = vsel %vm1294, %v1200, -inf
          %v1303 = vsel %vm1294, %v1201, -inf
          %v1304 = vsel %vm1294, %v1202, -inf
          %v1305 = vsel %vm1294, %v1203, -inf
          %v1306 = vsel %vm1295, %v1204, -inf
          %v1307 = vsel %vm1295, %v1205, -inf
          %v1308 = vsel %vm1295, %v1206, -inf
          %v1309 = vsel %vm1295, %v1207, -inf
          %v1310 = vsel %vm1295, %v1208, -inf
          %v1311 = vsel %vm1295, %v1209, -inf
          %v1312 = vsel %vm1295, %v1210, -inf
          %v1313 = vsel %vm1295, %v1211, -inf
          %v1314 = vsel %vm1296, %v1212, -inf
          %v1315 = vsel %vm1296, %v1213, -inf
          %v1316 = vsel %vm1296, %v1214, -inf
          %v1317 = vsel %vm1296, %v1215, -inf
          %v1318 = vsel %vm1296, %v1216, -inf
          %v1319 = vsel %vm1296, %v1217, -inf
          %v1320 = vsel %vm1296, %v1218, -inf
          %v1321 = vsel %vm1296, %v1219, -inf
          %v1322 = vsel %vm1297, %v1220, -inf
          %v1323 = vsel %vm1297, %v1221, -inf
          %v1324 = vsel %vm1297, %v1222, -inf
          %v1325 = vsel %vm1297, %v1223, -inf
          %v1326 = vsel %vm1297, %v1224, -inf
          %v1327 = vsel %vm1297, %v1225, -inf
          %v1328 = vsel %vm1297, %v1226, -inf
          %v1329 = vsel %vm1297, %v1227, -inf
          %v1330 = vld [vmem:[#allocation2] sm:$0xff]
          %v1331 = vld [vmem:[#allocation2 + $0x8] sm:$0xff]
          %v1332 = vld [vmem:[#allocation2 + $0x10] sm:$0xff]
          %v1333 = vld [vmem:[#allocation2 + $0x18] sm:$0xff]
          %v1334 = vld [vmem:[#allocation2 + $0x20] sm:$0xff]
          %v1335 = vld [vmem:[#allocation2 + $0x28] sm:$0xff]
          %v1336 = vld [vmem:[#allocation2 + $0x30] sm:$0xff]
          %v1337 = vld [vmem:[#allocation2 + $0x38] sm:$0xff]
          %v1338 = vmax.f32 %v1298, %v1306
          %v1339 = vmax.f32 %v1299, %v1307
          %v1340 = vmax.f32 %v1300, %v1308
          %v1341 = vmax.f32 %v1301, %v1309
          %v1342 = vmax.f32 %v1302, %v1310
          %v1343 = vmax.f32 %v1303, %v1311
          %v1344 = vmax.f32 %v1304, %v1312
          %v1345 = vmax.f32 %v1305, %v1313
          %v1346 = vmax.f32 %v1338, %v1314
          %v1347 = vmax.f32 %v1339, %v1315
          %v1348 = vmax.f32 %v1340, %v1316
          %v1349 = vmax.f32 %v1341, %v1317
          %v1350 = vmax.f32 %v1342, %v1318
          %v1351 = vmax.f32 %v1343, %v1319
          %v1352 = vmax.f32 %v1344, %v1320
          %v1353 = vmax.f32 %v1345, %v1321
          %v1354 = vmax.f32 %v1346, %v1322
          %v1355 = vmax.f32 %v1347, %v1323
          %v1356 = vmax.f32 %v1348, %v1324
          %v1357 = vmax.f32 %v1349, %v1325
          %v1358 = vmax.f32 %v1350, %v1326
          %v1359 = vmax.f32 %v1351, %v1327
          %v1360 = vmax.f32 %v1352, %v1328
          %v1361 = vmax.f32 %v1353, %v1329
          %v1362 = vmax.f32 %v1330, %v1354
          %v1363 = vmax.f32 %v1331, %v1355
          %v1364 = vmax.f32 %v1332, %v1356
          %v1365 = vmax.f32 %v1333, %v1357
          %v1366 = vmax.f32 %v1334, %v1358
          %v1367 = vmax.f32 %v1335, %v1359
          %v1368 = vmax.f32 %v1336, %v1360
          %v1369 = vmax.f32 %v1337, %v1361
          %1370 = vst [vmem:[#allocation2] sm:$0xff] %v1362
          %1371 = vst [vmem:[#allocation2 + $0x8] sm:$0xff] %v1363
          %1372 = vst [vmem:[#allocation2 + $0x10] sm:$0xff] %v1364
          %1373 = vst [vmem:[#allocation2 + $0x18] sm:$0xff] %v1365
          %1374 = vst [vmem:[#allocation2 + $0x20] sm:$0xff] %v1366
          %1375 = vst [vmem:[#allocation2 + $0x28] sm:$0xff] %v1367
          %1376 = vst [vmem:[#allocation2 + $0x30] sm:$0xff] %v1368
          %1377 = vst [vmem:[#allocation2 + $0x38] sm:$0xff] %v1369
          %v1378 = vld [vmem:[#allocation2] sm:$0xff]
          %v1379 = vld [vmem:[#allocation2 + $0x8] sm:$0xff]
          %v1380 = vld [vmem:[#allocation2 + $0x10] sm:$0xff]
          %v1381 = vld [vmem:[#allocation2 + $0x18] sm:$0xff]
          %v1382 = vld [vmem:[#allocation2 + $0x20] sm:$0xff]
          %v1383 = vld [vmem:[#allocation2 + $0x28] sm:$0xff]
          %v1384 = vld [vmem:[#allocation2 + $0x30] sm:$0xff]
          %v1385 = vld [vmem:[#allocation2 + $0x38] sm:$0xff]
          %v1386 = vrot.slane %v1378, 4
          %v1387 = vmax.f32 %v1378, %v1386
          %v1388 = vrot.slane %v1387, 2
          %v1389 = vmax.f32 %v1387, %v1388
          %v1390 = vrot.slane %v1389, 1
          %v1391 = vmax.f32 %v1389, %v1390
          %v1392 = vrot.slane %v1379, 4
          %v1393 = vmax.f32 %v1379, %v1392
          %v1394 = vrot.slane %v1393, 2
          %v1395 = vmax.f32 %v1393, %v1394
          %v1396 = vrot.slane %v1395, 1
          %v1397 = vmax.f32 %v1395, %v1396
          %v1398 = vrot.slane %v1380, 4
          %v1399 = vmax.f32 %v1380, %v1398
          %v1400 = vrot.slane %v1399, 2
          %v1401 = vmax.f32 %v1399, %v1400
          %v1402 = vrot.slane %v1401, 1
          %v1403 = vmax.f32 %v1401, %v1402
          %v1404 = vrot.slane %v1381, 4
          %v1405 = vmax.f32 %v1381, %v1404
          %v1406 = vrot.slane %v1405, 2
          %v1407 = vmax.f32 %v1405, %v1406
          %v1408 = vrot.slane %v1407, 1
          %v1409 = vmax.f32 %v1407, %v1408
          %v1410 = vrot.slane %v1382, 4
          %v1411 = vmax.f32 %v1382, %v1410
          %v1412 = vrot.slane %v1411, 2
          %v1413 = vmax.f32 %v1411, %v1412
          %v1414 = vrot.slane %v1413, 1
          %v1415 = vmax.f32 %v1413, %v1414
          %v1416 = vrot.slane %v1383, 4
          %v1417 = vmax.f32 %v1383, %v1416
          %v1418 = vrot.slane %v1417, 2
          %v1419 = vmax.f32 %v1417, %v1418
          %v1420 = vrot.slane %v1419, 1
          %v1421 = vmax.f32 %v1419, %v1420
          %v1422 = vrot.slane %v1384, 4
          %v1423 = vmax.f32 %v1384, %v1422
          %v1424 = vrot.slane %v1423, 2
          %v1425 = vmax.f32 %v1423, %v1424
          %v1426 = vrot.slane %v1425, 1
          %v1427 = vmax.f32 %v1425, %v1426
          %v1428 = vrot.slane %v1385, 4
          %v1429 = vmax.f32 %v1385, %v1428
          %v1430 = vrot.slane %v1429, 2
          %v1431 = vmax.f32 %v1429, %v1430
          %v1432 = vrot.slane %v1431, 1
          %v1433 = vmax.f32 %v1431, %v1432
          %v1442 = vcombine.low %v1391, %v1397
          %v1443 = vcombine.low %v1403, %v1409
          %v1444 = vcombine.low %v1415, %v1421
          %v1445 = vcombine.low %v1427, %v1433
          %v1447 = vunpack.c.l.s4 1966171168
          %v1448 = vunpack.c.0.s8 %v1447
          %v1449 = vlaneseq
          %v1450 = vshrl.u32 %v1449, 7
          %v1451 = vsub.s32 %v1448, %v1450
          %v1452 = vrot.slane %v1442, %v1451
          %v1454 = vunpack.c.l.s4 1966171168
          %v1455 = vunpack.c.0.s8 %v1454
          %v1456 = vlaneseq
          %v1457 = vshrl.u32 %v1456, 7
          %v1458 = vsub.s32 %v1455, %v1457
          %v1459 = vrot.slane %v1443, %v1458
          %v1461 = vunpack.c.l.s4 1966171168
          %v1462 = vunpack.c.0.s8 %v1461
          %v1463 = vlaneseq
          %v1464 = vshrl.u32 %v1463, 7
          %v1465 = vsub.s32 %v1462, %v1464
          %v1466 = vrot.slane %v1444, %v1465
          %v1468 = vunpack.c.l.s4 1966171168
          %v1469 = vunpack.c.0.s8 %v1468
          %v1470 = vlaneseq
          %v1471 = vshrl.u32 %v1470, 7
          %v1472 = vsub.s32 %v1469, %v1471
          %v1473 = vrot.slane %v1445, %v1472
          %v1474 = vcombine.low %v1452, %v1459
          %v1475 = vcombine.low %v1466, %v1473
          %v1477 = vunpack.c.l.s4 1966171168
          %v1478 = vunpack.c.0.s8 %v1477
          %v1479 = vlaneseq
          %v1480 = vshrl.u32 %v1479, 7
          %v1481 = vsub.s32 %v1478, %v1480
          %v1482 = vrot.slane %v1474, %v1481
          %v1484 = vunpack.c.l.s4 1966171168
          %v1485 = vunpack.c.0.s8 %v1484
          %v1486 = vlaneseq
          %v1487 = vshrl.u32 %v1486, 7
          %v1488 = vsub.s32 %v1485, %v1487
          %v1489 = vrot.slane %v1475, %v1488
          %v1490 = vcombine.low %v1482, %v1489
          %1492 = vst [vmem:[%s330] sm:$0xff] %v1490
        $region68: #{get_model_forward.4} parent=47 // pred_fallthru
          _
        %p1493 = scmp.lt.s32.totalorder %s24, 1
        %s1494 = scalar_select %p1493, %s24, 1
        %s1495 = smul.addr %s1494, 8
        %s1496 = scalar_lea.vmem %s7, %s1495
        // Predicated region
        $region69: #{get_model_forward.4} parent=47 // pred_check
          %p1497 = pneg %p204
        $region70: #{get_model_forward.4} parent=47 // pred_check_branch
          %1499 = sbr.rel (%p1497) target = $region72
        $region71: #{get_model_forward.4} parent=47 // pred_region
          _
        $region72: #{get_model_forward.4} parent=47 // pred_fallthru
          _
      $region48: #{get_model_forward.4} parent=5 // pred_fallthru
        _
      %p1500 = scmp.le.s32.totalorder 2, %s15
      // Predicated region
      $region73: #{get_model_forward.4} parent=5 // pred_check
        %p1501 = pneg %p1500
      $region74: #{get_model_forward.4} parent=5 // pred_check_branch
        %1503 = sbr.rel (%p1501) target = $region76
      $region75: #{get_model_forward.4} parent=5 // pred_region
        %s1504 = ssub.s32 %s15, 2
        // Predicated region
        $region77: #{get_model_forward.4} parent=75 // pred_check
          %p1505 = pneg %p210
        $region78: #{get_model_forward.4} parent=75 // pred_check_branch
          %1507 = sbr.rel (%p1505) target = $region80
        $region79: #{get_model_forward.4} parent=75 // pred_region
          %p1508 = scmp.lt.s32.totalorder %s26, 1
          %s1509 = scalar_select %p1508, %s26, 1
          %s1510 = smul.addr %s1509, 8
          %s1511 = scalar_lea.vmem %s7, %s1510
        $region80: #{get_model_forward.4} parent=75 // pred_fallthru
          _
      $region76: #{get_model_forward.4} parent=5 // pred_fallthru
        _
    $region6: #{get_model_forward.4} parent=1 // loop_footer
      %s19 = sadd.s32 1, %s15
    $region7: #{get_model_forward.4} parent=1 // loop_footer_branch
      %14 = sbr.rel target = $region3
    $region8: #{get_model_forward.4} parent=1 // loop_exit
      _
    %1512 = vsyncpa [#allocation4], 1
    %s1513 = scalar_lea.sflag [#allocation4], 1
    %1514 = vsyncpa %s1513, 1
    %1515 = vsyncpa [#allocation6], 1

// kernel: get_model_forward.6
$region0: #{get_model_forward.6}
  #allocation0 [shape = 'u32[]', space=smem, size = 0x4, offset = 0x4, fixed_abs, tag = 'smem constant byte address 0x4 - core index']
  #allocation1 [shape = 'u32[144,128]{1,0:T(1,128)}', space=vmem, size = 0x12000, scoped, tag = 'internal scratch']
  #allocation2 [shape = 'f32[8,1024]{1,0:T(8,128)}', space=vmem, size = 0x8000, scoped, tag = 'scratch operand']
  %s0 = inlined_call_operand.vmem [shape: bf16[2,32,128], index: 0, kind: input, shape index: {}]
  %s1 = inlined_call_operand.vmem [shape: bf16[128,128], index: 1, kind: input, shape index: {}]
  %s2 = inlined_call_operand.vmem [shape: f32[1,128], index: 2, kind: input, shape index: {}]
  %s3 = inlined_call_operand.vmem [shape: bf16[128,128], index: 3, kind: input, shape index: {}]
  %s4 = inlined_call_operand.vmem [shape: f32[1,128], index: 4, kind: input, shape index: {}]
  %s5 = inlined_call_operand.vmem [shape: bf16[128,1024], index: 5, kind: input, shape index: {}]
  %s6 = inlined_call_operand.vmem [shape: f32[1,1024], index: 6, kind: input, shape index: {}]
  %s7 = inlined_call_operand.vmem [shape: f32[2,1,1024], index: 7, kind: output, shape index: {}]
  %s8 = sld [smem:[#allocation0]]
  $region73: #{get_model_forward.6} parent=0
    _
  %s10 = ssub.s32 1, %s8
  %s11 = scalar_select 0, %s10, %s8
  loop: start=0, step=1, limit=4
  $region2: #{get_model_forward.6} parent=0 // loop_pre_header
    _
  $region3: #{get_model_forward.6} parent=0 // loop_header
    %s13 = sphi 0, %s17
    %p14 = scmp.ge.s32.totalorder %s13, 4
    %s20 = sphi 0, %s32
    %s21 = sphi 0, %s28
    %s22 = sphi 0, %s20
    %s23 = sphi 0, %s21
    %s24 = sphi 0, %s22
    %s25 = sphi 0, %s23
    %s37 = sphi 0, %s39
    %s40 = sphi 0, %s37
    %s41 = sphi 0, %s40
    %s57 = sphi 0, %s41
    %s61 = sphi 0, %s61
    %s63 = sphi 0, %s61
    %s64 = sphi 0, %s63
    %s78 = sphi 0, %s64
    %s82 = sphi 0, %s82
    %s84 = sphi 0, %s82
    %s85 = sphi 0, %s84
    %s99 = sphi 0, %s85
    %s103 = sphi 0, %s103
    %s105 = sphi 0, %s103
    %s106 = sphi 0, %s105
    %s120 = sphi 0, %s106
    %s124 = sphi 0, %s124
    %s126 = sphi 0, %s124
    %s127 = sphi 0, %s126
    %s141 = sphi 0, %s127
    %s145 = sphi 0, %s145
    %s147 = sphi 0, %s145
    %s148 = sphi 0, %s147
    %s162 = sphi 0, %s148
    %s166 = sphi 0, %s166
    %s168 = sphi 0, %s166
    %s169 = sphi 0, %s168
    %s183 = sphi 0, %s169
    %s189 = sphi 0, %s191
    %s192 = sphi 0, %s189
    %s193 = sphi 0, %s192
    %s209 = sphi 0, %s193
  $region4: #{get_model_forward.6} parent=0 // loop_header_branch
    %16 = sbr.rel (%p14) target = $region8
  $region5: #{get_model_forward.6} parent=0 // loop_body
    %s18 = ssub.s32 %s13, 1
    %s19 = ssub.s32 %s13, 2
    %s26 = sadd.s32 1, %s21
    %p27 = scmp.ge.s32.totalorder %s26, 1
    %s28 = scalar_select %p27, 0, %s26
    %s29 = sadd.s32 1, %s20
    %s30 = scalar_select %p27, %s29, %s20
    %p31 = scmp.ge.s32.totalorder %s30, 2
    %s32 = scalar_select %p31, 0, %s30
    %s33 = ssub.s32 %s20, %s32
    %s34 = ssub.s32 %s21, %s28
    %s35 = sor.u32 %s33, %s34
    %p36 = scmp.eq.s32.totalorder %s35, 0
    %s38 = sadd.s32 %s37, 1
    %s39 = scalar_select %p36, %s37, %s38
    %p42 = pneg %p36
    %p43 = scmp.eq.s32.totalorder %s13, 1
    %p44 = por %p42, %p43
    %p45 = scmp.ne.s32.totalorder %s37, %s40
    %p46 = scmp.eq.s32.totalorder %s13, 0
    %p47 = por %p45, %p46
    %p48 = scmp.ne.s32.totalorder %s37, %s40
    %p49 = scmp.eq.s32.totalorder %s18, 1
    %p50 = por %p48, %p49
    %p51 = scmp.ne.s32.totalorder %s40, %s41
    %p52 = scmp.eq.s32.totalorder %s18, 0
    %p53 = por %p51, %p52
    %p54 = scmp.ne.s32.totalorder %s40, %s41
    %p55 = scmp.eq.s32.totalorder %s19, 1
    %p56 = por %p54, %p55
    %p58 = scmp.ne.s32.totalorder %s41, %s57
    %p59 = scmp.eq.s32.totalorder %s19, 0
    %p60 = por %p58, %p59
    %s62 = sadd.s32 %s61, 1
    %p65 = scmp.eq.s32.totalorder %s13, 1
    %p66 = scmp.ne.s32.totalorder %s61, %s63
    %p67 = scmp.eq.s32.totalorder %s13, 0
    %p68 = por %p66, %p67
    %p69 = scmp.ne.s32.totalorder %s61, %s63
    %p70 = scmp.eq.s32.totalorder %s18, 1
    %p71 = por %p69, %p70
    %p72 = scmp.ne.s32.totalorder %s63, %s64
    %p73 = scmp.eq.s32.totalorder %s18, 0
    %p74 = por %p72, %p73
    %p75 = scmp.ne.s32.totalorder %s63, %s64
    %p76 = scmp.eq.s32.totalorder %s19, 1
    %p77 = por %p75, %p76
    %p79 = scmp.ne.s32.totalorder %s64, %s78
    %p80 = scmp.eq.s32.totalorder %s19, 0
    %p81 = por %p79, %p80
    %s83 = sadd.s32 %s82, 1
    %p86 = scmp.eq.s32.totalorder %s13, 1
    %p87 = scmp.ne.s32.totalorder %s82, %s84
    %p88 = scmp.eq.s32.totalorder %s13, 0
    %p89 = por %p87, %p88
    %p90 = scmp.ne.s32.totalorder %s82, %s84
    %p91 = scmp.eq.s32.totalorder %s18, 1
    %p92 = por %p90, %p91
    %p93 = scmp.ne.s32.totalorder %s84, %s85
    %p94 = scmp.eq.s32.totalorder %s18, 0
    %p95 = por %p93, %p94
    %p96 = scmp.ne.s32.totalorder %s84, %s85
    %p97 = scmp.eq.s32.totalorder %s19, 1
    %p98 = por %p96, %p97
    %p100 = scmp.ne.s32.totalorder %s85, %s99
    %p101 = scmp.eq.s32.totalorder %s19, 0
    %p102 = por %p100, %p101
    %s104 = sadd.s32 %s103, 1
    %p107 = scmp.eq.s32.totalorder %s13, 1
    %p108 = scmp.ne.s32.totalorder %s103, %s105
    %p109 = scmp.eq.s32.totalorder %s13, 0
    %p110 = por %p108, %p109
    %p111 = scmp.ne.s32.totalorder %s103, %s105
    %p112 = scmp.eq.s32.totalorder %s18, 1
    %p113 = por %p111, %p112
    %p114 = scmp.ne.s32.totalorder %s105, %s106
    %p115 = scmp.eq.s32.totalorder %s18, 0
    %p116 = por %p114, %p115
    %p117 = scmp.ne.s32.totalorder %s105, %s106
    %p118 = scmp.eq.s32.totalorder %s19, 1
    %p119 = por %p117, %p118
    %p121 = scmp.ne.s32.totalorder %s106, %s120
    %p122 = scmp.eq.s32.totalorder %s19, 0
    %p123 = por %p121, %p122
    %s125 = sadd.s32 %s124, 1
    %p128 = scmp.eq.s32.totalorder %s13, 1
    %p129 = scmp.ne.s32.totalorder %s124, %s126
    %p130 = scmp.eq.s32.totalorder %s13, 0
    %p131 = por %p129, %p130
    %p132 = scmp.ne.s32.totalorder %s124, %s126
    %p133 = scmp.eq.s32.totalorder %s18, 1
    %p134 = por %p132, %p133
    %p135 = scmp.ne.s32.totalorder %s126, %s127
    %p136 = scmp.eq.s32.totalorder %s18, 0
    %p137 = por %p135, %p136
    %p138 = scmp.ne.s32.totalorder %s126, %s127
    %p139 = scmp.eq.s32.totalorder %s19, 1
    %p140 = por %p138, %p139
    %p142 = scmp.ne.s32.totalorder %s127, %s141
    %p143 = scmp.eq.s32.totalorder %s19, 0
    %p144 = por %p142, %p143
    %s146 = sadd.s32 %s145, 1
    %p149 = scmp.eq.s32.totalorder %s13, 1
    %p150 = scmp.ne.s32.totalorder %s145, %s147
    %p151 = scmp.eq.s32.totalorder %s13, 0
    %p152 = por %p150, %p151
    %p153 = scmp.ne.s32.totalorder %s145, %s147
    %p154 = scmp.eq.s32.totalorder %s18, 1
    %p155 = por %p153, %p154
    %p156 = scmp.ne.s32.totalorder %s147, %s148
    %p157 = scmp.eq.s32.totalorder %s18, 0
    %p158 = por %p156, %p157
    %p159 = scmp.ne.s32.totalorder %s147, %s148
    %p160 = scmp.eq.s32.totalorder %s19, 1
    %p161 = por %p159, %p160
    %p163 = scmp.ne.s32.totalorder %s148, %s162
    %p164 = scmp.eq.s32.totalorder %s19, 0
    %p165 = por %p163, %p164
    %s167 = sadd.s32 %s166, 1
    %p170 = scmp.eq.s32.totalorder %s13, 1
    %p171 = scmp.ne.s32.totalorder %s166, %s168
    %p172 = scmp.eq.s32.totalorder %s13, 0
    %p173 = por %p171, %p172
    %p174 = scmp.ne.s32.totalorder %s166, %s168
    %p175 = scmp.eq.s32.totalorder %s18, 1
    %p176 = por %p174, %p175
    %p177 = scmp.ne.s32.totalorder %s168, %s169
    %p178 = scmp.eq.s32.totalorder %s18, 0
    %p179 = por %p177, %p178
    %p180 = scmp.ne.s32.totalorder %s168, %s169
    %p181 = scmp.eq.s32.totalorder %s19, 1
    %p182 = por %p180, %p181
    %p184 = scmp.ne.s32.totalorder %s169, %s183
    %p185 = scmp.eq.s32.totalorder %s19, 0
    %p186 = por %p184, %p185
    %s187 = ssub.s32 %s20, %s32
    %p188 = scmp.eq.s32.totalorder %s187, 0
    %s190 = sadd.s32 %s189, 1
    %s191 = scalar_select %p188, %s189, %s190
    %p194 = pneg %p188
    %p195 = scmp.eq.s32.totalorder %s13, 1
    %p196 = por %p194, %p195
    %p197 = scmp.ne.s32.totalorder %s189, %s192
    %p198 = scmp.eq.s32.totalorder %s13, 0
    %p199 = por %p197, %p198
    %p200 = scmp.ne.s32.totalorder %s189, %s192
    %p201 = scmp.eq.s32.totalorder %s18, 1
    %p202 = por %p200, %p201
    %p203 = scmp.ne.s32.totalorder %s192, %s193
    %p204 = scmp.eq.s32.totalorder %s18, 0
    %p205 = por %p203, %p204
    %p206 = scmp.ne.s32.totalorder %s192, %s193
    %p207 = scmp.eq.s32.totalorder %s19, 1
    %p208 = por %p206, %p207
    %p210 = scmp.ne.s32.totalorder %s193, %s209
    %p211 = scmp.eq.s32.totalorder %s19, 0
    %p212 = por %p210, %p211
    %p213 = scmp.le.s32.totalorder 1, %s13
    %p214 = scmp.lt.s32.totalorder %s13, 3
    %p215 = pnand %p213, %p214
    %p216 = pneg %p215
    // Predicated region
    $region9: #{get_model_forward.6} parent=5 // pred_check
      _
    $region10: #{get_model_forward.6} parent=5 // pred_check_branch
      %218 = sbr.rel (%p215) target = $region12
    $region11: #{get_model_forward.6} parent=5 // pred_region
      %s219 = ssub.s32 %s13, 1
      // Predicated region
      $region13: #{get_model_forward.6} parent=11 // pred_check
        %p220 = pneg %p74
      $region14: #{get_model_forward.6} parent=11 // pred_check_branch
        %222 = sbr.rel (%p220) target = $region16
      $region15: #{get_model_forward.6} parent=11 // pred_region
        _
      $region16: #{get_model_forward.6} parent=11 // pred_fallthru
        _
      // Predicated region
      $region17: #{get_model_forward.6} parent=11 // pred_check
        %p223 = pneg %p95
      $region18: #{get_model_forward.6} parent=11 // pred_check_branch
        %225 = sbr.rel (%p223) target = $region20
      $region19: #{get_model_forward.6} parent=11 // pred_region
        _
      $region20: #{get_model_forward.6} parent=11 // pred_fallthru
        _
      // Predicated region
      $region21: #{get_model_forward.6} parent=11 // pred_check
        %p226 = pneg %p116
      $region22: #{get_model_forward.6} parent=11 // pred_check_branch
        %228 = sbr.rel (%p226) target = $region24
      $region23: #{get_model_forward.6} parent=11 // pred_region
        _
      $region24: #{get_model_forward.6} parent=11 // pred_fallthru
        _
      // Predicated region
      $region25: #{get_model_forward.6} parent=11 // pred_check
        %p229 = pneg %p137
      $region26: #{get_model_forward.6} parent=11 // pred_check_branch
        %231 = sbr.rel (%p229) target = $region28
      $region27: #{get_model_forward.6} parent=11 // pred_region
        _
      $region28: #{get_model_forward.6} parent=11 // pred_fallthru
        _
      // Predicated region
      $region29: #{get_model_forward.6} parent=11 // pred_check
        %p232 = pneg %p158
      $region30: #{get_model_forward.6} parent=11 // pred_check_branch
        %234 = sbr.rel (%p232) target = $region32
      $region31: #{get_model_forward.6} parent=11 // pred_region
        _
      $region32: #{get_model_forward.6} parent=11 // pred_fallthru
        _
      // Predicated region
      $region33: #{get_model_forward.6} parent=11 // pred_check
        %p235 = pneg %p179
      $region34: #{get_model_forward.6} parent=11 // pred_check_branch
        %237 = sbr.rel (%p235) target = $region36
      $region35: #{get_model_forward.6} parent=11 // pred_region
        _
      $region36: #{get_model_forward.6} parent=11 // pred_fallthru
        _
    $region12: #{get_model_forward.6} parent=5 // pred_fallthru
      _
    %p238 = scmp.lt.s32.totalorder %s13, 2
    // Predicated region
    $region37: #{get_model_forward.6} parent=5 // pred_check
      %p239 = pneg %p238
    $region38: #{get_model_forward.6} parent=5 // pred_check_branch
      %241 = sbr.rel (%p239) target = $region40
    $region39: #{get_model_forward.6} parent=5 // pred_region
      // Predicated region
      $region41: #{get_model_forward.6} parent=39 // pred_check
        %p242 = pneg %p47
      $region42: #{get_model_forward.6} parent=39 // pred_check_branch
        %244 = sbr.rel (%p242) target = $region44
      $region43: #{get_model_forward.6} parent=39 // pred_region
        %s245 = smul.u32 4, %s21
        %p246 = scmp.lt.s32.totalorder %s20, 1
        %s247 = scalar_select %p246, %s20, 1
        %p248 = scmp.lt.s32.totalorder %s245, 3
        %s249 = scalar_select %p248, %s245, 3
        %s250 = smul.addr %s247, 4
        %s251 = sadd.s32 %s249, %s250
        %s252 = smul.addr %s251, 4
        %s253 = scalar_lea.vmem %s0, %s252
        %s254 = smul.u32 4, %s21
      $region44: #{get_model_forward.6} parent=39 // pred_fallthru
        _
    $region40: #{get_model_forward.6} parent=5 // pred_fallthru
      _
    %p255 = scmp.le.s32.totalorder 1, %s13
    %p256 = scmp.lt.s32.totalorder %s13, 3
    %p257 = pnand %p255, %p256
    %p258 = pneg %p257
    // Predicated region
    $region45: #{get_model_forward.6} parent=5 // pred_check
      _
    $region46: #{get_model_forward.6} parent=5 // pred_check_branch
      %260 = sbr.rel (%p257) target = $region48
    $region47: #{get_model_forward.6} parent=5 // pred_region
      %s261 = ssub.s32 %s13, 1
      %s262 = smul.u32 4, %s23
      %p263 = scmp.lt.s32.totalorder %s22, 1
      %s264 = scalar_select %p263, %s22, 1
      %p265 = scmp.lt.s32.totalorder %s262, 3
      %s266 = scalar_select %p265, %s262, 3
      %s267 = smul.addr %s264, 4
      %s268 = sadd.s32 %s266, %s267
      %s269 = smul.addr %s268, 4
      %s270 = scalar_lea.vmem %s0, %s269
      %p271 = pneg %p53
      %p272 = pneg %p50
      %p273 = pneg %p74
      %p274 = pneg %p71
      %p275 = pneg %p95
      %p276 = pneg %p92
      %p277 = pneg %p116
      %p278 = pneg %p113
      %p279 = pneg %p137
      %p280 = pneg %p134
      %p281 = pneg %p158
      %p282 = pneg %p155
      %p283 = pneg %p179
      %p284 = pneg %p176
      %p285 = pneg %p205
      %p286 = pneg %p202
      %p287 = scmp.lt.s32.totalorder %s22, 1
      %s288 = scalar_select %p287, %s22, 1
      %s289 = smul.addr %s288, 8
      %s290 = scalar_lea.vmem %s7, %s289
      %s291 = smul.u32 4, %s23
      %p292 = scmp.lt.s32.totalorder %s22, 1
      %s293 = scalar_select %p292, %s22, 1
      %p294 = scmp.lt.s32.totalorder %s291, 3
      %s295 = scalar_select %p294, %s291, 3
      %s296 = smul.addr %s293, 4
      %s297 = sadd.s32 %s295, %s296
      %s298 = smul.addr %s297, 4
      %s299 = scalar_lea.vmem %s0, %s298
      %s300 = smul.u32 4, %s23
      %p301 = scmp.lt.s32.totalorder %s22, 1
      %s302 = scalar_select %p301, %s22, 1
      %s303 = smul.addr %s302, 8
      %s304 = scalar_lea.vmem %s7, %s303
      %p306 = scmp.eq.s32.totalorder %s23, 0
      // Predicated region
      $region49: #{get_model_forward.6} parent=47 // pred_check
        %p307 = pneg %p306
      $region50: #{get_model_forward.6} parent=47 // pred_check_branch
        %309 = sbr.rel (%p307) target = $region52
      $region51: #{get_model_forward.6} parent=47 // pred_region
        %310 = vst [vmem:[#allocation2] sm:$0xff] -inf
        %311 = vst [vmem:[#allocation2 + $0x8] sm:$0xff] -inf
        %312 = vst [vmem:[#allocation2 + $0x10] sm:$0xff] -inf
        %313 = vst [vmem:[#allocation2 + $0x18] sm:$0xff] -inf
        %314 = vst [vmem:[#allocation2 + $0x20] sm:$0xff] -inf
        %315 = vst [vmem:[#allocation2 + $0x28] sm:$0xff] -inf
        %316 = vst [vmem:[#allocation2 + $0x30] sm:$0xff] -inf
        %317 = vst [vmem:[#allocation2 + $0x38] sm:$0xff] -inf
      $region52: #{get_model_forward.6} parent=47 // pred_fallthru
        _
      %v318 = vld [vmem:[%s299] sm:$0xf]
      %v319 = vld [vmem:[%s299 + $0x4] sm:$0xf]
      %v320 = vld [vmem:[%s299 + $0x8] sm:$0xf]
      %v321 = vld [vmem:[%s299 + $0xc] sm:$0xf]
      %v322 = vld [vmem:[%s1] sm:$0xf]
      %v323 = vld [vmem:[%s1 + $0x4] sm:$0xf]
      %v324 = vld [vmem:[%s1 + $0x8] sm:$0xf]
      %v325 = vld [vmem:[%s1 + $0xc] sm:$0xf]
      %v326 = vld [vmem:[%s1 + $0x10] sm:$0xf]
      %v327 = vld [vmem:[%s1 + $0x14] sm:$0xf]
      %v328 = vld [vmem:[%s1 + $0x18] sm:$0xf]
      %v329 = vld [vmem:[%s1 + $0x1c] sm:$0xf]
      %v330 = vld [vmem:[%s1 + $0x20] sm:$0xf]
      %v331 = vld [vmem:[%s1 + $0x24] sm:$0xf]
      %v332 = vld [vmem:[%s1 + $0x28] sm:$0xf]
      %v333 = vld [vmem:[%s1 + $0x2c] sm:$0xf]
      %v334 = vld [vmem:[%s1 + $0x30] sm:$0xf]
      %v335 = vld [vmem:[%s1 + $0x34] sm:$0xf]
      %v336 = vld [vmem:[%s1 + $0x38] sm:$0xf]
      %v337 = vld [vmem:[%s1 + $0x3c] sm:$0xf]
      %v338 = vld [vmem:[%s2] sm:$0x1]
      %v340 = vlaneseq
      %v341 = vshrl.u32 %v340, 7
      %v342 = vsub.s32 0, %v341
      %v343 = vrot.slane %v338, %v342
      %v349 = vunpack.c.l.b16 %v318
      %v350 = vunpack.c.l.b16 %v319
      %v351 = vunpack.c.l.b16 %v320
      %v352 = vunpack.c.l.b16 %v321
      %v353 = vpack.c.b16 %v350, %v349
      %v354 = vpack.c.b16 %v352, %v351
      %v373 = vunpack.c.l.b16 %v322
      %v374 = vunpack.c.l.b16 %v323
      %v375 = vunpack.c.l.b16 %v324
      %v376 = vunpack.c.l.b16 %v325
      %v377 = vunpack.c.l.b16 %v326
      %v378 = vunpack.c.l.b16 %v327
      %v379 = vunpack.c.l.b16 %v328
      %v380 = vunpack.c.l.b16 %v329
      %v381 = vunpack.c.l.b16 %v330
      %v382 = vunpack.c.l.b16 %v331
      %v383 = vunpack.c.l.b16 %v332
      %v384 = vunpack.c.l.b16 %v333
      %v385 = vunpack.c.l.b16 %v334
      %v386 = vunpack.c.l.b16 %v335
      %v387 = vunpack.c.l.b16 %v336
      %v388 = vunpack.c.l.b16 %v337
      %v389 = vpack.c.b16 %v374, %v373
      %v390 = vpack.c.b16 %v376, %v375
      %v391 = vpack.c.b16 %v378, %v377
      %v392 = vpack.c.b16 %v380, %v379
      %v393 = vpack.c.b16 %v382, %v381
      %v394 = vpack.c.b16 %v384, %v383
      %v395 = vpack.c.b16 %v386, %v385
      %v396 = vpack.c.b16 %v388, %v387
      %405 = vmatprep.subr.bf16.mxu0 0
      %406 = vmatpush1.bf16.msra.mxu0 %v389
      %407 = vmatprep.subr.bf16.mxu0 0
      %408 = vmatpush1.bf16.msra.mxu0 %v390
      %409 = vmatprep.subr.bf16.mxu0 0
      %410 = vmatpush1.bf16.msra.mxu0 %v391
      %411 = vmatprep.subr.bf16.mxu0 0
      %412 = vmatpush1.bf16.msra.mxu0 %v392
      %413 = vmatprep.subr.bf16.mxu0 0
      %414 = vmatpush1.bf16.msra.mxu0 %v393
      %415 = vmatprep.subr.bf16.mxu0 0
      %416 = vmatpush1.bf16.msra.mxu0 %v394
      %417 = vmatprep.subr.bf16.mxu0 0
      %418 = vmatpush1.bf16.msra.mxu0 %v395
      %419 = vmatprep.subr.bf16.mxu0 0
      %420 = vmatpush1.bf16.msra.mxu0 %v396
      %421 = vmatprep.subr.bf16.mxu0 0
      %422 = vmatpush1.bf16.msra.mxu0 0
      %423 = vmatprep.subr.bf16.mxu0 0
      %424 = vmatpush1.bf16.msra.mxu0 0
      %425 = vmatprep.subr.bf16.mxu0 0
      %426 = vmatpush1.bf16.msra.mxu0 0
      %427 = vmatprep.subr.bf16.mxu0 0
      %428 = vmatpush1.bf16.msra.mxu0 0
      %429 = vmatprep.subr.bf16.mxu0 0
      %430 = vmatpush1.bf16.msra.mxu0 0
      %431 = vmatprep.subr.bf16.mxu0 0
      %432 = vmatpush1.bf16.msra.mxu0 0
      %433 = vmatprep.subr.bf16.mxu0 0
      %434 = vmatpush1.bf16.msra.mxu0 0
      %435 = vmatprep.subr.bf16.mxu0 0
      %436 = vmatpush1.bf16.msra.mxu0 0
      %437 = vmatprep.mubr.bf16.mxu0 0
      %438 = vmatmul.mubr.bf16.gmra.mrb[0].mxu0 %v353
      %v439 = vpop.f32.mrb[0].mxu0
      %v440 = vadd.f32 %v343, %v439
      %v441 = vpop.f32.mrb[0].mxu0
      %v442 = vpop.f32.mrb[0].mxu0
      %v443 = vadd.f32 %v343, %v442
      %v444 = vpop.f32.mrb[0].mxu0
      %445 = vmatprep.mubr.bf16.mxu0 0
      %446 = vmatmul.mubr.bf16.gmra.mrb[0].mxu0 %v354
      %v447 = vpop.f32.mrb[0].mxu0
      %v448 = vadd.f32 %v343, %v447
      %v449 = vpop.f32.mrb[0].mxu0
      %v450 = vpop.f32.mrb[0].mxu0
      %v451 = vadd.f32 %v343, %v450
      %v452 = vpop.f32.mrb[0].mxu0
      %453 = vdwg.mxu0
      %v454 = vmax.f32 %v440, 0.0
      %v455 = vmax.f32 %v443, 0.0
      %v456 = vmax.f32 %v448, 0.0
      %v457 = vmax.f32 %v451, 0.0
      %v458 = vpack.c.bf16 %v455, %v454
      %v459 = vpack.c.bf16 %v457, %v456
      %v460 = vld [vmem:[%s3] sm:$0xf]
      %v461 = vld [vmem:[%s3 + $0x4] sm:$0xf]
      %v462 = vld [vmem:[%s3 + $0x8] sm:$0xf]
      %v463 = vld [vmem:[%s3 + $0xc] sm:$0xf]
      %v464 = vld [vmem:[%s3 + $0x10] sm:$0xf]
      %v465 = vld [vmem:[%s3 + $0x14] sm:$0xf]
      %v466 = vld [vmem:[%s3 + $0x18] sm:$0xf]
      %v467 = vld [vmem:[%s3 + $0x1c] sm:$0xf]
      %v468 = vld [vmem:[%s3 + $0x20] sm:$0xf]
      %v469 = vld [vmem:[%s3 + $0x24] sm:$0xf]
      %v470 = vld [vmem:[%s3 + $0x28] sm:$0xf]
      %v471 = vld [vmem:[%s3 + $0x2c] sm:$0xf]
      %v472 = vld [vmem:[%s3 + $0x30] sm:$0xf]
      %v473 = vld [vmem:[%s3 + $0x34] sm:$0xf]
      %v474 = vld [vmem:[%s3 + $0x38] sm:$0xf]
      %v475 = vld [vmem:[%s3 + $0x3c] sm:$0xf]
      %v476 = vld [vmem:[%s4] sm:$0x1]
      %v478 = vlaneseq
      %v479 = vshrl.u32 %v478, 7
      %v480 = vsub.s32 0, %v479
      %v481 = vrot.slane %v476, %v480
      %v499 = vunpack.c.l.b16 %v460
      %v500 = vunpack.c.l.b16 %v461
      %v501 = vunpack.c.l.b16 %v462
      %v502 = vunpack.c.l.b16 %v463
      %v503 = vunpack.c.l.b16 %v464
      %v504 = vunpack.c.l.b16 %v465
      %v505 = vunpack.c.l.b16 %v466
      %v506 = vunpack.c.l.b16 %v467
      %v507 = vunpack.c.l.b16 %v468
      %v508 = vunpack.c.l.b16 %v469
      %v509 = vunpack.c.l.b16 %v470
      %v510 = vunpack.c.l.b16 %v471
      %v511 = vunpack.c.l.b16 %v472
      %v512 = vunpack.c.l.b16 %v473
      %v513 = vunpack.c.l.b16 %v474
      %v514 = vunpack.c.l.b16 %v475
      %v515 = vpack.c.b16 %v500, %v499
      %v516 = vpack.c.b16 %v502, %v501
      %v517 = vpack.c.b16 %v504, %v503
      %v518 = vpack.c.b16 %v506, %v505
      %v519 = vpack.c.b16 %v508, %v507
      %v520 = vpack.c.b16 %v510, %v509
      %v521 = vpack.c.b16 %v512, %v511
      %v522 = vpack.c.b16 %v514, %v513
      %531 = vmatprep.subr.bf16.mxu0 0
      %532 = vmatpush1.bf16.msra.mxu0 %v515
      %533 = vmatprep.subr.bf16.mxu0 0
      %534 = vmatpush1.bf16.msra.mxu0 %v516
      %535 = vmatprep.subr.bf16.mxu0 0
      %536 = vmatpush1.bf16.msra.mxu0 %v517
      %537 = vmatprep.subr.bf16.mxu0 0
      %538 = vmatpush1.bf16.msra.mxu0 %v518
      %539 = vmatprep.subr.bf16.mxu0 0
      %540 = vmatpush1.bf16.msra.mxu0 %v519
      %541 = vmatprep.subr.bf16.mxu0 0
      %542 = vmatpush1.bf16.msra.mxu0 %v520
      %543 = vmatprep.subr.bf16.mxu0 0
      %544 = vmatpush1.bf16.msra.mxu0 %v521
      %545 = vmatprep.subr.bf16.mxu0 0
      %546 = vmatpush1.bf16.msra.mxu0 %v522
      %547 = vmatprep.subr.bf16.mxu0 0
      %548 = vmatpush1.bf16.msra.mxu0 0
      %549 = vmatprep.subr.bf16.mxu0 0
      %550 = vmatpush1.bf16.msra.mxu0 0
      %551 = vmatprep.subr.bf16.mxu0 0
      %552 = vmatpush1.bf16.msra.mxu0 0
      %553 = vmatprep.subr.bf16.mxu0 0
      %554 = vmatpush1.bf16.msra.mxu0 0
      %555 = vmatprep.subr.bf16.mxu0 0
      %556 = vmatpush1.bf16.msra.mxu0 0
      %557 = vmatprep.subr.bf16.mxu0 0
      %558 = vmatpush1.bf16.msra.mxu0 0
      %559 = vmatprep.subr.bf16.mxu0 0
      %560 = vmatpush1.bf16.msra.mxu0 0
      %561 = vmatprep.subr.bf16.mxu0 0
      %562 = vmatpush1.bf16.msra.mxu0 0
      %563 = vmatprep.mubr.bf16.mxu0 0
      %564 = vmatmul.mubr.bf16.gmra.mrb[0].mxu0 %v458
      %v565 = vpop.f32.mrb[0].mxu0
      %v566 = vadd.f32 %v481, %v565
      %v567 = vpop.f32.mrb[0].mxu0
      %v568 = vpop.f32.mrb[0].mxu0
      %v569 = vadd.f32 %v481, %v568
      %v570 = vpop.f32.mrb[0].mxu0
      %571 = vmatprep.mubr.bf16.mxu0 0
      %572 = vmatmul.mubr.bf16.gmra.mrb[0].mxu0 %v459
      %v573 = vpop.f32.mrb[0].mxu0
      %v574 = vadd.f32 %v481, %v573
      %v575 = vpop.f32.mrb[0].mxu0
      %v576 = vpop.f32.mrb[0].mxu0
      %v577 = vadd.f32 %v481, %v576
      %v578 = vpop.f32.mrb[0].mxu0
      %579 = vdwg.mxu0
      %v580 = vmax.f32 %v566, 0.0
      %v581 = vmax.f32 %v569, 0.0
      %v582 = vmax.f32 %v574, 0.0
      %v583 = vmax.f32 %v577, 0.0
      %v584 = vpack.c.bf16 %v581, %v580
      %v585 = vpack.c.bf16 %v583, %v582
      %v586 = vld [vmem:[%s5] sm:$0xff]
      %v587 = vld [vmem:[%s5 + $0x8] sm:$0xff]
      %v588 = vld [vmem:[%s5 + $0x10] sm:$0xff]
      %v589 = vld [vmem:[%s5 + $0x18] sm:$0xff]
      %v590 = vld [vmem:[%s5 + $0x20] sm:$0xff]
      %v591 = vld [vmem:[%s5 + $0x28] sm:$0xff]
      %v592 = vld [vmem:[%s5 + $0x30] sm:$0xff]
      %v593 = vld [vmem:[%s5 + $0x38] sm:$0xff]
      %v594 = vld [vmem:[%s5 + $0x40] sm:$0xff]
      %v595 = vld [vmem:[%s5 + $0x48] sm:$0xff]
      %v596 = vld [vmem:[%s5 + $0x50] sm:$0xff]
      %v597 = vld [vmem:[%s5 + $0x58] sm:$0xff]
      %v598 = vld [vmem:[%s5 + $0x60] sm:$0xff]
      %v599 = vld [vmem:[%s5 + $0x68] sm:$0xff]
      %v600 = vld [vmem:[%s5 + $0x70] sm:$0xff]
      %v601 = vld [vmem:[%s5 + $0x78] sm:$0xff]
      %v602 = vld [vmem:[%s5 + $0x80] sm:$0xff]
      %v603 = vld [vmem:[%s5 + $0x88] sm:$0xff]
      %v604 = vld [vmem:[%s5 + $0x90] sm:$0xff]
      %v605 = vld [vmem:[%s5 + $0x98] sm:$0xff]
      %v606 = vld [vmem:[%s5 + $0xa0] sm:$0xff]
      %v607 = vld [vmem:[%s5 + $0xa8] sm:$0xff]
      %v608 = vld [vmem:[%s5 + $0xb0] sm:$0xff]
      %v609 = vld [vmem:[%s5 + $0xb8] sm:$0xff]
      %v610 = vld [vmem:[%s5 + $0xc0] sm:$0xff]
      %v611 = vld [vmem:[%s5 + $0xc8] sm:$0xff]
      %v612 = vld [vmem:[%s5 + $0xd0] sm:$0xff]
      %v613 = vld [vmem:[%s5 + $0xd8] sm:$0xff]
      %v614 = vld [vmem:[%s5 + $0xe0] sm:$0xff]
      %v615 = vld [vmem:[%s5 + $0xe8] sm:$0xff]
      %v616 = vld [vmem:[%s5 + $0xf0] sm:$0xff]
      %v617 = vld [vmem:[%s5 + $0xf8] sm:$0xff]
      %v618 = vld [vmem:[%s5 + $0x100] sm:$0xff]
      %v619 = vld [vmem:[%s5 + $0x108] sm:$0xff]
      %v620 = vld [vmem:[%s5 + $0x110] sm:$0xff]
      %v621 = vld [vmem:[%s5 + $0x118] sm:$0xff]
      %v622 = vld [vmem:[%s5 + $0x120] sm:$0xff]
      %v623 = vld [vmem:[%s5 + $0x128] sm:$0xff]
      %v624 = vld [vmem:[%s5 + $0x130] sm:$0xff]
      %v625 = vld [vmem:[%s5 + $0x138] sm:$0xff]
      %v626 = vld [vmem:[%s5 + $0x140] sm:$0xff]
      %v627 = vld [vmem:[%s5 + $0x148] sm:$0xff]
      %v628 = vld [vmem:[%s5 + $0x150] sm:$0xff]
      %v629 = vld [vmem:[%s5 + $0x158] sm:$0xff]
      %v630 = vld [vmem:[%s5 + $0x160] sm:$0xff]
      %v631 = vld [vmem:[%s5 + $0x168] sm:$0xff]
      %v632 = vld [vmem:[%s5 + $0x170] sm:$0xff]
      %v633 = vld [vmem:[%s5 + $0x178] sm:$0xff]
      %v634 = vld [vmem:[%s5 + $0x180] sm:$0xff]
      %v635 = vld [vmem:[%s5 + $0x188] sm:$0xff]
      %v636 = vld [vmem:[%s5 + $0x190] sm:$0xff]
      %v637 = vld [vmem:[%s5 + $0x198] sm:$0xff]
      %v638 = vld [vmem:[%s5 + $0x1a0] sm:$0xff]
      %v639 = vld [vmem:[%s5 + $0x1a8] sm:$0xff]
      %v640 = vld [vmem:[%s5 + $0x1b0] sm:$0xff]
      %v641 = vld [vmem:[%s5 + $0x1b8] sm:$0xff]
      %v642 = vld [vmem:[%s5 + $0x1c0] sm:$0xff]
      %v643 = vld [vmem:[%s5 + $0x1c8] sm:$0xff]
      %v644 = vld [vmem:[%s5 + $0x1d0] sm:$0xff]
      %v645 = vld [vmem:[%s5 + $0x1d8] sm:$0xff]
      %v646 = vld [vmem:[%s5 + $0x1e0] sm:$0xff]
      %v647 = vld [vmem:[%s5 + $0x1e8] sm:$0xff]
      %v648 = vld [vmem:[%s5 + $0x1f0] sm:$0xff]
      %v649 = vld [vmem:[%s5 + $0x1f8] sm:$0xff]
      %v650 = vld [vmem:[%s6] sm:$0xff]
      %v652 = vlaneseq
      %v653 = vshrl.u32 %v652, 7
      %v654 = vsub.s32 0, %v653
      %v655 = vrot.slane %v650, %v654
      %v656 = vlaneseq
      %v657 = vshrl.u32 %v656, 7
      %v658 = vsub.s32 1, %v657
      %v659 = vrot.slane %v650, %v658
      %v660 = vlaneseq
      %v661 = vshrl.u32 %v660, 7
      %v662 = vsub.s32 2, %v661
      %v663 = vrot.slane %v650, %v662
      %v664 = vlaneseq
      %v665 = vshrl.u32 %v664, 7
      %v666 = vsub.s32 3, %v665
      %v667 = vrot.slane %v650, %v666
      %v668 = vlaneseq
      %v669 = vshrl.u32 %v668, 7
      %v670 = vsub.s32 4, %v669
      %v671 = vrot.slane %v650, %v670
      %v672 = vlaneseq
      %v673 = vshrl.u32 %v672, 7
      %v674 = vsub.s32 5, %v673
      %v675 = vrot.slane %v650, %v674
      %v676 = vlaneseq
      %v677 = vshrl.u32 %v676, 7
      %v678 = vsub.s32 6, %v677
      %v679 = vrot.slane %v650, %v678
      %v680 = vlaneseq
      %v681 = vshrl.u32 %v680, 7
      %v682 = vsub.s32 7, %v681
      %v683 = vrot.slane %v650, %v682
      %v756 = vunpack.c.l.b16 %v586
      %v757 = vunpack.c.h.b16 %v586
      %v758 = vunpack.c.l.b16 %v587
      %v759 = vunpack.c.h.b16 %v587
      %v760 = vunpack.c.l.b16 %v588
      %v761 = vunpack.c.h.b16 %v588
      %v762 = vunpack.c.l.b16 %v589
      %v763 = vunpack.c.h.b16 %v589
      %v764 = vunpack.c.l.b16 %v590
      %v765 = vunpack.c.h.b16 %v590
      %v766 = vunpack.c.l.b16 %v591
      %v767 = vunpack.c.h.b16 %v591
      %v768 = vunpack.c.l.b16 %v592
      %v769 = vunpack.c.h.b16 %v592
      %v770 = vunpack.c.l.b16 %v593
      %v771 = vunpack.c.h.b16 %v593
      %v772 = vunpack.c.l.b16 %v594
      %v773 = vunpack.c.h.b16 %v594
      %v774 = vunpack.c.l.b16 %v595
      %v775 = vunpack.c.h.b16 %v595
      %v776 = vunpack.c.l.b16 %v596
      %v777 = vunpack.c.h.b16 %v596
      %v778 = vunpack.c.l.b16 %v597
      %v779 = vunpack.c.h.b16 %v597
      %v780 = vunpack.c.l.b16 %v598
      %v781 = vunpack.c.h.b16 %v598
      %v782 = vunpack.c.l.b16 %v599
      %v783 = vunpack.c.h.b16 %v599
      %v784 = vunpack.c.l.b16 %v600
      %v785 = vunpack.c.h.b16 %v600
      %v786 = vunpack.c.l.b16 %v601
      %v787 = vunpack.c.h.b16 %v601
      %v788 = vunpack.c.l.b16 %v602
      %v789 = vunpack.c.h.b16 %v602
      %v790 = vunpack.c.l.b16 %v603
      %v791 = vunpack.c.h.b16 %v603
      %v792 = vunpack.c.l.b16 %v604
      %v793 = vunpack.c.h.b16 %v604
      %v794 = vunpack.c.l.b16 %v605
      %v795 = vunpack.c.h.b16 %v605
      %v796 = vunpack.c.l.b16 %v606
      %v797 = vunpack.c.h.b16 %v606
      %v798 = vunpack.c.l.b16 %v607
      %v799 = vunpack.c.h.b16 %v607
      %v800 = vunpack.c.l.b16 %v608
      %v801 = vunpack.c.h.b16 %v608
      %v802 = vunpack.c.l.b16 %v609
      %v803 = vunpack.c.h.b16 %v609
      %v804 = vunpack.c.l.b16 %v610
      %v805 = vunpack.c.h.b16 %v610
      %v806 = vunpack.c.l.b16 %v611
      %v807 = vunpack.c.h.b16 %v611
      %v808 = vunpack.c.l.b16 %v612
      %v809 = vunpack.c.h.b16 %v612
      %v810 = vunpack.c.l.b16 %v613
      %v811 = vunpack.c.h.b16 %v613
      %v812 = vunpack.c.l.b16 %v614
      %v813 = vunpack.c.h.b16 %v614
      %v814 = vunpack.c.l.b16 %v615
      %v815 = vunpack.c.h.b16 %v615
      %v816 = vunpack.c.l.b16 %v616
      %v817 = vunpack.c.h.b16 %v616
      %v818 = vunpack.c.l.b16 %v617
      %v819 = vunpack.c.h.b16 %v617
      %v820 = vunpack.c.l.b16 %v618
      %v821 = vunpack.c.h.b16 %v618
      %v822 = vunpack.c.l.b16 %v619
      %v823 = vunpack.c.h.b16 %v619
      %v824 = vunpack.c.l.b16 %v620
      %v825 = vunpack.c.h.b16 %v620
      %v826 = vunpack.c.l.b16 %v621
      %v827 = vunpack.c.h.b16 %v621
      %v828 = vunpack.c.l.b16 %v622
      %v829 = vunpack.c.h.b16 %v622
      %v830 = vunpack.c.l.b16 %v623
      %v831 = vunpack.c.h.b16 %v623
      %v832 = vunpack.c.l.b16 %v624
      %v833 = vunpack.c.h.b16 %v624
      %v834 = vunpack.c.l.b16 %v625
      %v835 = vunpack.c.h.b16 %v625
      %v836 = vunpack.c.l.b16 %v626
      %v837 = vunpack.c.h.b16 %v626
      %v838 = vunpack.c.l.b16 %v627
      %v839 = vunpack.c.h.b16 %v627
      %v840 = vunpack.c.l.b16 %v628
      %v841 = vunpack.c.h.b16 %v628
      %v842 = vunpack.c.l.b16 %v629
      %v843 = vunpack.c.h.b16 %v629
      %v844 = vunpack.c.l.b16 %v630
      %v845 = vunpack.c.h.b16 %v630
      %v846 = vunpack.c.l.b16 %v631
      %v847 = vunpack.c.h.b16 %v631
      %v848 = vunpack.c.l.b16 %v632
      %v849 = vunpack.c.h.b16 %v632
      %v850 = vunpack.c.l.b16 %v633
      %v851 = vunpack.c.h.b16 %v633
      %v852 = vunpack.c.l.b16 %v634
      %v853 = vunpack.c.h.b16 %v634
      %v854 = vunpack.c.l.b16 %v635
      %v855 = vunpack.c.h.b16 %v635
      %v856 = vunpack.c.l.b16 %v636
      %v857 = vunpack.c.h.b16 %v636
      %v858 = vunpack.c.l.b16 %v637
      %v859 = vunpack.c.h.b16 %v637
      %v860 = vunpack.c.l.b16 %v638
      %v861 = vunpack.c.h.b16 %v638
      %v862 = vunpack.c.l.b16 %v639
      %v863 = vunpack.c.h.b16 %v639
      %v864 = vunpack.c.l.b16 %v640
      %v865 = vunpack.c.h.b16 %v640
      %v866 = vunpack.c.l.b16 %v641
      %v867 = vunpack.c.h.b16 %v641
      %v868 = vunpack.c.l.b16 %v642
      %v869 = vunpack.c.h.b16 %v642
      %v870 = vunpack.c.l.b16 %v643
      %v871 = vunpack.c.h.b16 %v643
      %v872 = vunpack.c.l.b16 %v644
      %v873 = vunpack.c.h.b16 %v644
      %v874 = vunpack.c.l.b16 %v645
      %v875 = vunpack.c.h.b16 %v645
      %v876 = vunpack.c.l.b16 %v646
      %v877 = vunpack.c.h.b16 %v646
      %v878 = vunpack.c.l.b16 %v647
      %v879 = vunpack.c.h.b16 %v647
      %v880 = vunpack.c.l.b16 %v648
      %v881 = vunpack.c.h.b16 %v648
      %v882 = vunpack.c.l.b16 %v649
      %v883 = vunpack.c.h.b16 %v649
      %v884 = vpack.c.b16 %v764, %v756
      %v885 = vpack.c.b16 %v765, %v757
      %v886 = vpack.c.b16 %v766, %v758
      %v887 = vpack.c.b16 %v767, %v759
      %v888 = vpack.c.b16 %v768, %v760
      %v889 = vpack.c.b16 %v769, %v761
      %v890 = vpack.c.b16 %v770, %v762
      %v891 = vpack.c.b16 %v771, %v763
      %v892 = vpack.c.b16 %v780, %v772
      %v893 = vpack.c.b16 %v781, %v773
      %v894 = vpack.c.b16 %v782, %v774
      %v895 = vpack.c.b16 %v783, %v775
      %v896 = vpack.c.b16 %v784, %v776
      %v897 = vpack.c.b16 %v785, %v777
      %v898 = vpack.c.b16 %v786, %v778
      %v899 = vpack.c.b16 %v787, %v779
      %v900 = vpack.c.b16 %v796, %v788
      %v901 = vpack.c.b16 %v797, %v789
      %v902 = vpack.c.b16 %v798, %v790
      %v903 = vpack.c.b16 %v799, %v791
      %v904 = vpack.c.b16 %v800, %v792
      %v905 = vpack.c.b16 %v801, %v793
      %v906 = vpack.c.b16 %v802, %v794
      %v907 = vpack.c.b16 %v803, %v795
      %v908 = vpack.c.b16 %v812, %v804
      %v909 = vpack.c.b16 %v813, %v805
      %v910 = vpack.c.b16 %v814, %v806
      %v911 = vpack.c.b16 %v815, %v807
      %v912 = vpack.c.b16 %v816, %v808
      %v913 = vpack.c.b16 %v817, %v809
      %v914 = vpack.c.b16 %v818, %v810
      %v915 = vpack.c.b16 %v819, %v811
      %v916 = vpack.c.b16 %v828, %v820
      %v917 = vpack.c.b16 %v829, %v821
      %v918 = vpack.c.b16 %v830, %v822
      %v919 = vpack.c.b16 %v831, %v823
      %v920 = vpack.c.b16 %v832, %v824
      %v921 = vpack.c.b16 %v833, %v825
      %v922 = vpack.c.b16 %v834, %v826
      %v923 = vpack.c.b16 %v835, %v827
      %v924 = vpack.c.b16 %v844, %v836
      %v925 = vpack.c.b16 %v845, %v837
      %v926 = vpack.c.b16 %v846, %v838
      %v927 = vpack.c.b16 %v847, %v839
      %v928 = vpack.c.b16 %v848, %v840
      %v929 = vpack.c.b16 %v849, %v841
      %v930 = vpack.c.b16 %v850, %v842
      %v931 = vpack.c.b16 %v851, %v843
      %v932 = vpack.c.b16 %v860, %v852
      %v933 = vpack.c.b16 %v861, %v853
      %v934 = vpack.c.b16 %v862, %v854
      %v935 = vpack.c.b16 %v863, %v855
      %v936 = vpack.c.b16 %v864, %v856
      %v937 = vpack.c.b16 %v865, %v857
      %v938 = vpack.c.b16 %v866, %v858
      %v939 = vpack.c.b16 %v867, %v859
      %v940 = vpack.c.b16 %v876, %v868
      %v941 = vpack.c.b16 %v877, %v869
      %v942 = vpack.c.b16 %v878, %v870
      %v943 = vpack.c.b16 %v879, %v871
      %v944 = vpack.c.b16 %v880, %v872
      %v945 = vpack.c.b16 %v881, %v873
      %v946 = vpack.c.b16 %v882, %v874
      %v947 = vpack.c.b16 %v883, %v875
      %1012 = vmatprep.subr.bf16.mxu0 %v885
      %1013 = vmatpush1.bf16.msra.mxu0 %v884
      %1014 = vmatprep.subr.bf16.mxu0 %v893
      %1015 = vmatpush1.bf16.msra.mxu0 %v892
      %1016 = vmatprep.subr.bf16.mxu0 %v901
      %1017 = vmatpush1.bf16.msra.mxu0 %v900
      %1018 = vmatprep.subr.bf16.mxu0 %v909
      %1019 = vmatpush1.bf16.msra.mxu0 %v908
      %1020 = vmatprep.subr.bf16.mxu0 %v917
      %1021 = vmatpush1.bf16.msra.mxu0 %v916
      %1022 = vmatprep.subr.bf16.mxu0 %v925
      %1023 = vmatpush1.bf16.msra.mxu0 %v924
      %1024 = vmatprep.subr.bf16.mxu0 %v933
      %1025 = vmatpush1.bf16.msra.mxu0 %v932
      %1026 = vmatprep.subr.bf16.mxu0 %v941
      %1027 = vmatpush1.bf16.msra.mxu0 %v940
      %1028 = vmatprep.subr.bf16.mxu0 0
      %1029 = vmatpush1.bf16.msra.mxu0 0
      %1030 = vmatprep.subr.bf16.mxu0 0
      %1031 = vmatpush1.bf16.msra.mxu0 0
      %1032 = vmatprep.subr.bf16.mxu0 0
      %1033 = vmatpush1.bf16.msra.mxu0 0
      %1034 = vmatprep.subr.bf16.mxu0 0
      %1035 = vmatpush1.bf16.msra.mxu0 0
      %1036 = vmatprep.subr.bf16.mxu0 0
      %1037 = vmatpush1.bf16.msra.mxu0 0
      %1038 = vmatprep.subr.bf16.mxu0 0
      %1039 = vmatpush1.bf16.msra.mxu0 0
      %1040 = vmatprep.subr.bf16.mxu0 0
      %1041 = vmatpush1.bf16.msra.mxu0 0
      %1042 = vmatprep.subr.bf16.mxu0 0
      %1043 = vmatpush1.bf16.msra.mxu0 0
      %1044 = vmatprep.mubr.bf16.mxu0 0
      %1045 = vmatmul.mubr.bf16.gmra.mrb[0].mxu0 %v584
      %v1046 = vpop.f32.mrb[0].mxu0
      %v1047 = vadd.f32 %v655, %v1046
      %v1048 = vpop.f32.mrb[0].mxu0
      %v1049 = vadd.f32 %v659, %v1048
      %v1050 = vpop.f32.mrb[0].mxu0
      %v1051 = vadd.f32 %v655, %v1050
      %v1052 = vpop.f32.mrb[0].mxu0
      %v1053 = vadd.f32 %v659, %v1052
      %1054 = vmatprep.mubr.bf16.mxu0 0
      %1055 = vmatmul.mubr.bf16.gmra.mrb[0].mxu0 %v585
      %v1056 = vpop.f32.mrb[0].mxu0
      %v1057 = vadd.f32 %v655, %v1056
      %v1058 = vpop.f32.mrb[0].mxu0
      %v1059 = vadd.f32 %v659, %v1058
      %v1060 = vpop.f32.mrb[0].mxu0
      %v1061 = vadd.f32 %v655, %v1060
      %v1062 = vpop.f32.mrb[0].mxu0
      %v1063 = vadd.f32 %v659, %v1062
      %1064 = vdwg.mxu0
      %1065 = vmatprep.subr.bf16.mxu0 %v887
      %1066 = vmatpush1.bf16.msra.mxu0 %v886
      %1067 = vmatprep.subr.bf16.mxu0 %v895
      %1068 = vmatpush1.bf16.msra.mxu0 %v894
      %1069 = vmatprep.subr.bf16.mxu0 %v903
      %1070 = vmatpush1.bf16.msra.mxu0 %v902
      %1071 = vmatprep.subr.bf16.mxu0 %v911
      %1072 = vmatpush1.bf16.msra.mxu0 %v910
      %1073 = vmatprep.subr.bf16.mxu0 %v919
      %1074 = vmatpush1.bf16.msra.mxu0 %v918
      %1075 = vmatprep.subr.bf16.mxu0 %v927
      %1076 = vmatpush1.bf16.msra.mxu0 %v926
      %1077 = vmatprep.subr.bf16.mxu0 %v935
      %1078 = vmatpush1.bf16.msra.mxu0 %v934
      %1079 = vmatprep.subr.bf16.mxu0 %v943
      %1080 = vmatpush1.bf16.msra.mxu0 %v942
      %1081 = vmatprep.subr.bf16.mxu0 0
      %1082 = vmatpush1.bf16.msra.mxu0 0
      %1083 = vmatprep.subr.bf16.mxu0 0
      %1084 = vmatpush1.bf16.msra.mxu0 0
      %1085 = vmatprep.subr.bf16.mxu0 0
      %1086 = vmatpush1.bf16.msra.mxu0 0
      %1087 = vmatprep.subr.bf16.mxu0 0
      %1088 = vmatpush1.bf16.msra.mxu0 0
      %1089 = vmatprep.subr.bf16.mxu0 0
      %1090 = vmatpush1.bf16.msra.mxu0 0
      %1091 = vmatprep.subr.bf16.mxu0 0
      %1092 = vmatpush1.bf16.msra.mxu0 0
      %1093 = vmatprep.subr.bf16.mxu0 0
      %1094 = vmatpush1.bf16.msra.mxu0 0
      %1095 = vmatprep.subr.bf16.mxu0 0
      %1096 = vmatpush1.bf16.msra.mxu0 0
      %1097 = vmatprep.mubr.bf16.mxu0 0
      %1098 = vmatmul.mubr.bf16.gmra.mrb[0].mxu0 %v584
      %v1099 = vpop.f32.mrb[0].mxu0
      %v1100 = vadd.f32 %v663, %v1099
      %v1101 = vpop.f32.mrb[0].mxu0
      %v1102 = vadd.f32 %v667, %v1101
      %v1103 = vpop.f32.mrb[0].mxu0
      %v1104 = vadd.f32 %v663, %v1103
      %v1105 = vpop.f32.mrb[0].mxu0
      %v1106 = vadd.f32 %v667, %v1105
      %1107 = vmatprep.mubr.bf16.mxu0 0
      %1108 = vmatmul.mubr.bf16.gmra.mrb[0].mxu0 %v585
      %v1109 = vpop.f32.mrb[0].mxu0
      %v1110 = vadd.f32 %v663, %v1109
      %v1111 = vpop.f32.mrb[0].mxu0
      %v1112 = vadd.f32 %v667, %v1111
      %v1113 = vpop.f32.mrb[0].mxu0
      %v1114 = vadd.f32 %v663, %v1113
      %v1115 = vpop.f32.mrb[0].mxu0
      %v1116 = vadd.f32 %v667, %v1115
      %1117 = vdwg.mxu0
      %1118 = vmatprep.subr.bf16.mxu0 %v889
      %1119 = vmatpush1.bf16.msra.mxu0 %v888
      %1120 = vmatprep.subr.bf16.mxu0 %v897
      %1121 = vmatpush1.bf16.msra.mxu0 %v896
      %1122 = vmatprep.subr.bf16.mxu0 %v905
      %1123 = vmatpush1.bf16.msra.mxu0 %v904
      %1124 = vmatprep.subr.bf16.mxu0 %v913
      %1125 = vmatpush1.bf16.msra.mxu0 %v912
      %1126 = vmatprep.subr.bf16.mxu0 %v921
      %1127 = vmatpush1.bf16.msra.mxu0 %v920
      %1128 = vmatprep.subr.bf16.mxu0 %v929
      %1129 = vmatpush1.bf16.msra.mxu0 %v928
      %1130 = vmatprep.subr.bf16.mxu0 %v937
      %1131 = vmatpush1.bf16.msra.mxu0 %v936
      %1132 = vmatprep.subr.bf16.mxu0 %v945
      %1133 = vmatpush1.bf16.msra.mxu0 %v944
      %1134 = vmatprep.subr.bf16.mxu0 0
      %1135 = vmatpush1.bf16.msra.mxu0 0
      %1136 = vmatprep.subr.bf16.mxu0 0
      %1137 = vmatpush1.bf16.msra.mxu0 0
      %1138 = vmatprep.subr.bf16.mxu0 0
      %1139 = vmatpush1.bf16.msra.mxu0 0
      %1140 = vmatprep.subr.bf16.mxu0 0
      %1141 = vmatpush1.bf16.msra.mxu0 0
      %1142 = vmatprep.subr.bf16.mxu0 0
      %1143 = vmatpush1.bf16.msra.mxu0 0
      %1144 = vmatprep.subr.bf16.mxu0 0
      %1145 = vmatpush1.bf16.msra.mxu0 0
      %1146 = vmatprep.subr.bf16.mxu0 0
      %1147 = vmatpush1.bf16.msra.mxu0 0
      %1148 = vmatprep.subr.bf16.mxu0 0
      %1149 = vmatpush1.bf16.msra.mxu0 0
      %1150 = vmatprep.mubr.bf16.mxu0 0
      %1151 = vmatmul.mubr.bf16.gmra.mrb[0].mxu0 %v584
      %v1152 = vpop.f32.mrb[0].mxu0
      %v1153 = vadd.f32 %v671, %v1152
      %v1154 = vpop.f32.mrb[0].mxu0
      %v1155 = vadd.f32 %v675, %v1154
      %v1156 = vpop.f32.mrb[0].mxu0
      %v1157 = vadd.f32 %v671, %v1156
      %v1158 = vpop.f32.mrb[0].mxu0
      %v1159 = vadd.f32 %v675, %v1158
      %1160 = vmatprep.mubr.bf16.mxu0 0
      %1161 = vmatmul.mubr.bf16.gmra.mrb[0].mxu0 %v585
      %v1162 = vpop.f32.mrb[0].mxu0
      %v1163 = vadd.f32 %v671, %v1162
      %v1164 = vpop.f32.mrb[0].mxu0
      %v1165 = vadd.f32 %v675, %v1164
      %v1166 = vpop.f32.mrb[0].mxu0
      %v1167 = vadd.f32 %v671, %v1166
      %v1168 = vpop.f32.mrb[0].mxu0
      %v1169 = vadd.f32 %v675, %v1168
      %1170 = vdwg.mxu0
      %1171 = vmatprep.subr.bf16.mxu0 %v891
      %1172 = vmatpush1.bf16.msra.mxu0 %v890
      %1173 = vmatprep.subr.bf16.mxu0 %v899
      %1174 = vmatpush1.bf16.msra.mxu0 %v898
      %1175 = vmatprep.subr.bf16.mxu0 %v907
      %1176 = vmatpush1.bf16.msra.mxu0 %v906
      %1177 = vmatprep.subr.bf16.mxu0 %v915
      %1178 = vmatpush1.bf16.msra.mxu0 %v914
      %1179 = vmatprep.subr.bf16.mxu0 %v923
      %1180 = vmatpush1.bf16.msra.mxu0 %v922
      %1181 = vmatprep.subr.bf16.mxu0 %v931
      %1182 = vmatpush1.bf16.msra.mxu0 %v930
      %1183 = vmatprep.subr.bf16.mxu0 %v939
      %1184 = vmatpush1.bf16.msra.mxu0 %v938
      %1185 = vmatprep.subr.bf16.mxu0 %v947
      %1186 = vmatpush1.bf16.msra.mxu0 %v946
      %1187 = vmatprep.subr.bf16.mxu0 0
      %1188 = vmatpush1.bf16.msra.mxu0 0
      %1189 = vmatprep.subr.bf16.mxu0 0
      %1190 = vmatpush1.bf16.msra.mxu0 0
      %1191 = vmatprep.subr.bf16.mxu0 0
      %1192 = vmatpush1.bf16.msra.mxu0 0
      %1193 = vmatprep.subr.bf16.mxu0 0
      %1194 = vmatpush1.bf16.msra.mxu0 0
      %1195 = vmatprep.subr.bf16.mxu0 0
      %1196 = vmatpush1.bf16.msra.mxu0 0
      %1197 = vmatprep.subr.bf16.mxu0 0
      %1198 = vmatpush1.bf16.msra.mxu0 0
      %1199 = vmatprep.subr.bf16.mxu0 0
      %1200 = vmatpush1.bf16.msra.mxu0 0
      %1201 = vmatprep.subr.bf16.mxu0 0
      %1202 = vmatpush1.bf16.msra.mxu0 0
      %1203 = vmatprep.mubr.bf16.mxu0 0
      %1204 = vmatmul.mubr.bf16.gmra.mrb[0].mxu0 %v584
      %v1205 = vpop.f32.mrb[0].mxu0
      %v1206 = vadd.f32 %v679, %v1205
      %v1207 = vpop.f32.mrb[0].mxu0
      %v1208 = vadd.f32 %v683, %v1207
      %v1209 = vpop.f32.mrb[0].mxu0
      %v1210 = vadd.f32 %v679, %v1209
      %v1211 = vpop.f32.mrb[0].mxu0
      %v1212 = vadd.f32 %v683, %v1211
      %1213 = vmatprep.mubr.bf16.mxu0 0
      %1214 = vmatmul.mubr.bf16.gmra.mrb[0].mxu0 %v585
      %v1215 = vpop.f32.mrb[0].mxu0
      %v1216 = vadd.f32 %v679, %v1215
      %v1217 = vpop.f32.mrb[0].mxu0
      %v1218 = vadd.f32 %v683, %v1217
      %v1219 = vpop.f32.mrb[0].mxu0
      %v1220 = vadd.f32 %v679, %v1219
      %v1221 = vpop.f32.mrb[0].mxu0
      %v1222 = vadd.f32 %v683, %v1221
      %1223 = vdwg.mxu0
      %v1224 = vmax.f32 %v1047, 0.0
      %v1225 = vmax.f32 %v1049, 0.0
      %v1226 = vmax.f32 %v1100, 0.0
      %v1227 = vmax.f32 %v1102, 0.0
      %v1228 = vmax.f32 %v1153, 0.0
      %v1229 = vmax.f32 %v1155, 0.0
      %v1230 = vmax.f32 %v1206, 0.0
      %v1231 = vmax.f32 %v1208, 0.0
      %v1232 = vmax.f32 %v1051, 0.0
      %v1233 = vmax.f32 %v1053, 0.0
      %v1234 = vmax.f32 %v1104, 0.0
      %v1235 = vmax.f32 %v1106, 0.0
      %v1236 = vmax.f32 %v1157, 0.0
      %v1237 = vmax.f32 %v1159, 0.0
      %v1238 = vmax.f32 %v1210, 0.0
      %v1239 = vmax.f32 %v1212, 0.0
      %v1240 = vmax.f32 %v1057, 0.0
      %v1241 = vmax.f32 %v1059, 0.0
      %v1242 = vmax.f32 %v1110, 0.0
      %v1243 = vmax.f32 %v1112, 0.0
      %v1244 = vmax.f32 %v1163, 0.0
      %v1245 = vmax.f32 %v1165, 0.0
      %v1246 = vmax.f32 %v1216, 0.0
      %v1247 = vmax.f32 %v1218, 0.0
      %v1248 = vmax.f32 %v1061, 0.0
      %v1249 = vmax.f32 %v1063, 0.0
      %v1250 = vmax.f32 %v1114, 0.0
      %v1251 = vmax.f32 %v1116, 0.0
      %v1252 = vmax.f32 %v1167, 0.0
      %v1253 = vmax.f32 %v1169, 0.0
      %v1254 = vmax.f32 %v1220, 0.0
      %v1255 = vmax.f32 %v1222, 0.0
      %p1256 = scmp.ne.s32.totalorder %s23, 0
      // Predicated region
      $region53: #{get_model_forward.6} parent=47 // pred_check
        %p1257 = pneg %p1256
      $region54: #{get_model_forward.6} parent=47 // pred_check_branch
        %1259 = sbr.rel (%p1257) target = $region56
      $region55: #{get_model_forward.6} parent=47 // pred_region
        %v1260 = vld [vmem:[#allocation2] sm:$0xff]
        %v1261 = vld [vmem:[#allocation2 + $0x8] sm:$0xff]
        %v1262 = vld [vmem:[#allocation2 + $0x10] sm:$0xff]
        %v1263 = vld [vmem:[#allocation2 + $0x18] sm:$0xff]
        %v1264 = vld [vmem:[#allocation2 + $0x20] sm:$0xff]
        %v1265 = vld [vmem:[#allocation2 + $0x28] sm:$0xff]
        %v1266 = vld [vmem:[#allocation2 + $0x30] sm:$0xff]
        %v1267 = vld [vmem:[#allocation2 + $0x38] sm:$0xff]
        %v1268 = vmax.f32 %v1224, %v1232
        %v1269 = vmax.f32 %v1225, %v1233
        %v1270 = vmax.f32 %v1226, %v1234
        %v1271 = vmax.f32 %v1227, %v1235
        %v1272 = vmax.f32 %v1228, %v1236
        %v1273 = vmax.f32 %v1229, %v1237
        %v1274 = vmax.f32 %v1230, %v1238
        %v1275 = vmax.f32 %v1231, %v1239
        %v1276 = vmax.f32 %v1268, %v1240
        %v1277 = vmax.f32 %v1269, %v1241
        %v1278 = vmax.f32 %v1270, %v1242
        %v1279 = vmax.f32 %v1271, %v1243
        %v1280 = vmax.f32 %v1272, %v1244
        %v1281 = vmax.f32 %v1273, %v1245
        %v1282 = vmax.f32 %v1274, %v1246
        %v1283 = vmax.f32 %v1275, %v1247
        %v1284 = vmax.f32 %v1276, %v1248
        %v1285 = vmax.f32 %v1277, %v1249
        %v1286 = vmax.f32 %v1278, %v1250
        %v1287 = vmax.f32 %v1279, %v1251
        %v1288 = vmax.f32 %v1280, %v1252
        %v1289 = vmax.f32 %v1281, %v1253
        %v1290 = vmax.f32 %v1282, %v1254
        %v1291 = vmax.f32 %v1283, %v1255
        %v1292 = vmax.f32 %v1260, %v1284
        %v1293 = vmax.f32 %v1261, %v1285
        %v1294 = vmax.f32 %v1262, %v1286
        %v1295 = vmax.f32 %v1263, %v1287
        %v1296 = vmax.f32 %v1264, %v1288
        %v1297 = vmax.f32 %v1265, %v1289
        %v1298 = vmax.f32 %v1266, %v1290
        %v1299 = vmax.f32 %v1267, %v1291
        %1300 = vst [vmem:[#allocation2] sm:$0xff] %v1292
        %1301 = vst [vmem:[#allocation2 + $0x8] sm:$0xff] %v1293
        %1302 = vst [vmem:[#allocation2 + $0x10] sm:$0xff] %v1294
        %1303 = vst [vmem:[#allocation2 + $0x18] sm:$0xff] %v1295
        %1304 = vst [vmem:[#allocation2 + $0x20] sm:$0xff] %v1296
        %1305 = vst [vmem:[#allocation2 + $0x28] sm:$0xff] %v1297
        %1306 = vst [vmem:[#allocation2 + $0x30] sm:$0xff] %v1298
        %1307 = vst [vmem:[#allocation2 + $0x38] sm:$0xff] %v1299
      $region56: #{get_model_forward.6} parent=47 // pred_fallthru
        _
      // Predicated region
      $region57: #{get_model_forward.6} parent=47 // pred_check
        %p1308 = pneg %p306
      $region58: #{get_model_forward.6} parent=47 // pred_check_branch
        %1310 = sbr.rel (%p1308) target = $region60
      $region59: #{get_model_forward.6} parent=47 // pred_region
        %v1311 = vlaneseq
        %v1312 = vshrl.u32 %v1311, 7
        %v1313 = vadd.s32 %v1312, 8
        %v1314 = vadd.s32 %v1312, 16
        %v1315 = vadd.s32 %v1312, 24
        %s1316 = smul.u32 %s23, 32
        %v1317 = vstv %s1316
        %v1318 = vadd.s32 %v1312, %v1317
        %v1319 = vadd.s32 %v1313, %v1317
        %v1320 = vadd.s32 %v1314, %v1317
        %v1321 = vadd.s32 %v1315, %v1317
        %vm1322 = vcmp.lt.s32.totalorder %v1318, 30
        %vm1323 = vcmp.lt.s32.totalorder %v1319, 30
        %vm1324 = vcmp.lt.s32.totalorder %v1320, 30
        %vm1325 = vcmp.lt.s32.totalorder %v1321, 30
        %v1326 = vsel %vm1322, %v1224, -inf
        %v1327 = vsel %vm1322, %v1225, -inf
        %v1328 = vsel %vm1322, %v1226, -inf
        %v1329 = vsel %vm1322, %v1227, -inf
        %v1330 = vsel %vm1322, %v1228, -inf
        %v1331 = vsel %vm1322, %v1229, -inf
        %v1332 = vsel %vm1322, %v1230, -inf
        %v1333 = vsel %vm1322, %v1231, -inf
        %v1334 = vsel %vm1323, %v1232, -inf
        %v1335 = vsel %vm1323, %v1233, -inf
        %v1336 = vsel %vm1323, %v1234, -inf
        %v1337 = vsel %vm1323, %v1235, -inf
        %v1338 = vsel %vm1323, %v1236, -inf
        %v1339 = vsel %vm1323, %v1237, -inf
        %v1340 = vsel %vm1323, %v1238, -inf
        %v1341 = vsel %vm1323, %v1239, -inf
        %v1342 = vsel %vm1324, %v1240, -inf
        %v1343 = vsel %vm1324, %v1241, -inf
        %v1344 = vsel %vm1324, %v1242, -inf
        %v1345 = vsel %vm1324, %v1243, -inf
        %v1346 = vsel %vm1324, %v1244, -inf
        %v1347 = vsel %vm1324, %v1245, -inf
        %v1348 = vsel %vm1324, %v1246, -inf
        %v1349 = vsel %vm1324, %v1247, -inf
        %v1350 = vsel %vm1325, %v1248, -inf
        %v1351 = vsel %vm1325, %v1249, -inf
        %v1352 = vsel %vm1325, %v1250, -inf
        %v1353 = vsel %vm1325, %v1251, -inf
        %v1354 = vsel %vm1325, %v1252, -inf
        %v1355 = vsel %vm1325, %v1253, -inf
        %v1356 = vsel %vm1325, %v1254, -inf
        %v1357 = vsel %vm1325, %v1255, -inf
        %v1358 = vld [vmem:[#allocation2] sm:$0xff]
        %v1359 = vld [vmem:[#allocation2 + $0x8] sm:$0xff]
        %v1360 = vld [vmem:[#allocation2 + $0x10] sm:$0xff]
        %v1361 = vld [vmem:[#allocation2 + $0x18] sm:$0xff]
        %v1362 = vld [vmem:[#allocation2 + $0x20] sm:$0xff]
        %v1363 = vld [vmem:[#allocation2 + $0x28] sm:$0xff]
        %v1364 = vld [vmem:[#allocation2 + $0x30] sm:$0xff]
        %v1365 = vld [vmem:[#allocation2 + $0x38] sm:$0xff]
        %v1366 = vmax.f32 %v1326, %v1334
        %v1367 = vmax.f32 %v1327, %v1335
        %v1368 = vmax.f32 %v1328, %v1336
        %v1369 = vmax.f32 %v1329, %v1337
        %v1370 = vmax.f32 %v1330, %v1338
        %v1371 = vmax.f32 %v1331, %v1339
        %v1372 = vmax.f32 %v1332, %v1340
        %v1373 = vmax.f32 %v1333, %v1341
        %v1374 = vmax.f32 %v1366, %v1342
        %v1375 = vmax.f32 %v1367, %v1343
        %v1376 = vmax.f32 %v1368, %v1344
        %v1377 = vmax.f32 %v1369, %v1345
        %v1378 = vmax.f32 %v1370, %v1346
        %v1379 = vmax.f32 %v1371, %v1347
        %v1380 = vmax.f32 %v1372, %v1348
        %v1381 = vmax.f32 %v1373, %v1349
        %v1382 = vmax.f32 %v1374, %v1350
        %v1383 = vmax.f32 %v1375, %v1351
        %v1384 = vmax.f32 %v1376, %v1352
        %v1385 = vmax.f32 %v1377, %v1353
        %v1386 = vmax.f32 %v1378, %v1354
        %v1387 = vmax.f32 %v1379, %v1355
        %v1388 = vmax.f32 %v1380, %v1356
        %v1389 = vmax.f32 %v1381, %v1357
        %v1390 = vmax.f32 %v1358, %v1382
        %v1391 = vmax.f32 %v1359, %v1383
        %v1392 = vmax.f32 %v1360, %v1384
        %v1393 = vmax.f32 %v1361, %v1385
        %v1394 = vmax.f32 %v1362, %v1386
        %v1395 = vmax.f32 %v1363, %v1387
        %v1396 = vmax.f32 %v1364, %v1388
        %v1397 = vmax.f32 %v1365, %v1389
        %1398 = vst [vmem:[#allocation2] sm:$0xff] %v1390
        %1399 = vst [vmem:[#allocation2 + $0x8] sm:$0xff] %v1391
        %1400 = vst [vmem:[#allocation2 + $0x10] sm:$0xff] %v1392
        %1401 = vst [vmem:[#allocation2 + $0x18] sm:$0xff] %v1393
        %1402 = vst [vmem:[#allocation2 + $0x20] sm:$0xff] %v1394
        %1403 = vst [vmem:[#allocation2 + $0x28] sm:$0xff] %v1395
        %1404 = vst [vmem:[#allocation2 + $0x30] sm:$0xff] %v1396
        %1405 = vst [vmem:[#allocation2 + $0x38] sm:$0xff] %v1397
        %v1406 = vld [vmem:[#allocation2] sm:$0xff]
        %v1407 = vld [vmem:[#allocation2 + $0x8] sm:$0xff]
        %v1408 = vld [vmem:[#allocation2 + $0x10] sm:$0xff]
        %v1409 = vld [vmem:[#allocation2 + $0x18] sm:$0xff]
        %v1410 = vld [vmem:[#allocation2 + $0x20] sm:$0xff]
        %v1411 = vld [vmem:[#allocation2 + $0x28] sm:$0xff]
        %v1412 = vld [vmem:[#allocation2 + $0x30] sm:$0xff]
        %v1413 = vld [vmem:[#allocation2 + $0x38] sm:$0xff]
        %v1414 = vrot.slane %v1406, 4
        %v1415 = vmax.f32 %v1406, %v1414
        %v1416 = vrot.slane %v1415, 2
        %v1417 = vmax.f32 %v1415, %v1416
        %v1418 = vrot.slane %v1417, 1
        %v1419 = vmax.f32 %v1417, %v1418
        %v1420 = vrot.slane %v1407, 4
        %v1421 = vmax.f32 %v1407, %v1420
        %v1422 = vrot.slane %v1421, 2
        %v1423 = vmax.f32 %v1421, %v1422
        %v1424 = vrot.slane %v1423, 1
        %v1425 = vmax.f32 %v1423, %v1424
        %v1426 = vrot.slane %v1408, 4
        %v1427 = vmax.f32 %v1408, %v1426
        %v1428 = vrot.slane %v1427, 2
        %v1429 = vmax.f32 %v1427, %v1428
        %v1430 = vrot.slane %v1429, 1
        %v1431 = vmax.f32 %v1429, %v1430
        %v1432 = vrot.slane %v1409, 4
        %v1433 = vmax.f32 %v1409, %v1432
        %v1434 = vrot.slane %v1433, 2
        %v1435 = vmax.f32 %v1433, %v1434
        %v1436 = vrot.slane %v1435, 1
        %v1437 = vmax.f32 %v1435, %v1436
        %v1438 = vrot.slane %v1410, 4
        %v1439 = vmax.f32 %v1410, %v1438
        %v1440 = vrot.slane %v1439, 2
        %v1441 = vmax.f32 %v1439, %v1440
        %v1442 = vrot.slane %v1441, 1
        %v1443 = vmax.f32 %v1441, %v1442
        %v1444 = vrot.slane %v1411, 4
        %v1445 = vmax.f32 %v1411, %v1444
        %v1446 = vrot.slane %v1445, 2
        %v1447 = vmax.f32 %v1445, %v1446
        %v1448 = vrot.slane %v1447, 1
        %v1449 = vmax.f32 %v1447, %v1448
        %v1450 = vrot.slane %v1412, 4
        %v1451 = vmax.f32 %v1412, %v1450
        %v1452 = vrot.slane %v1451, 2
        %v1453 = vmax.f32 %v1451, %v1452
        %v1454 = vrot.slane %v1453, 1
        %v1455 = vmax.f32 %v1453, %v1454
        %v1456 = vrot.slane %v1413, 4
        %v1457 = vmax.f32 %v1413, %v1456
        %v1458 = vrot.slane %v1457, 2
        %v1459 = vmax.f32 %v1457, %v1458
        %v1460 = vrot.slane %v1459, 1
        %v1461 = vmax.f32 %v1459, %v1460
        %v1470 = vcombine.low %v1419, %v1425
        %v1471 = vcombine.low %v1431, %v1437
        %v1472 = vcombine.low %v1443, %v1449
        %v1473 = vcombine.low %v1455, %v1461
        %v1475 = vunpack.c.l.s4 1966171168
        %v1476 = vunpack.c.0.s8 %v1475
        %v1477 = vlaneseq
        %v1478 = vshrl.u32 %v1477, 7
        %v1479 = vsub.s32 %v1476, %v1478
        %v1480 = vrot.slane %v1470, %v1479
        %v1482 = vunpack.c.l.s4 1966171168
        %v1483 = vunpack.c.0.s8 %v1482
        %v1484 = vlaneseq
        %v1485 = vshrl.u32 %v1484, 7
        %v1486 = vsub.s32 %v1483, %v1485
        %v1487 = vrot.slane %v1471, %v1486
        %v1489 = vunpack.c.l.s4 1966171168
        %v1490 = vunpack.c.0.s8 %v1489
        %v1491 = vlaneseq
        %v1492 = vshrl.u32 %v1491, 7
        %v1493 = vsub.s32 %v1490, %v1492
        %v1494 = vrot.slane %v1472, %v1493
        %v1496 = vunpack.c.l.s4 1966171168
        %v1497 = vunpack.c.0.s8 %v1496
        %v1498 = vlaneseq
        %v1499 = vshrl.u32 %v1498, 7
        %v1500 = vsub.s32 %v1497, %v1499
        %v1501 = vrot.slane %v1473, %v1500
        %v1502 = vcombine.low %v1480, %v1487
        %v1503 = vcombine.low %v1494, %v1501
        %v1505 = vunpack.c.l.s4 1966171168
        %v1506 = vunpack.c.0.s8 %v1505
        %v1507 = vlaneseq
        %v1508 = vshrl.u32 %v1507, 7
        %v1509 = vsub.s32 %v1506, %v1508
        %v1510 = vrot.slane %v1502, %v1509
        %v1512 = vunpack.c.l.s4 1966171168
        %v1513 = vunpack.c.0.s8 %v1512
        %v1514 = vlaneseq
        %v1515 = vshrl.u32 %v1514, 7
        %v1516 = vsub.s32 %v1513, %v1515
        %v1517 = vrot.slane %v1503, %v1516
        %v1518 = vcombine.low %v1510, %v1517
        %1520 = vst [vmem:[%s304] sm:$0xff] %v1518
      $region60: #{get_model_forward.6} parent=47 // pred_fallthru
        _
      %p1521 = scmp.lt.s32.totalorder %s22, 1
      %s1522 = scalar_select %p1521, %s22, 1
      %s1523 = smul.addr %s1522, 8
      %s1524 = scalar_lea.vmem %s7, %s1523
      // Predicated region
      $region61: #{get_model_forward.6} parent=47 // pred_check
        %p1525 = pneg %p202
      $region62: #{get_model_forward.6} parent=47 // pred_check_branch
        %1527 = sbr.rel (%p1525) target = $region64
      $region63: #{get_model_forward.6} parent=47 // pred_region
        _
      $region64: #{get_model_forward.6} parent=47 // pred_fallthru
        _
    $region48: #{get_model_forward.6} parent=5 // pred_fallthru
      _
    %p1528 = scmp.le.s32.totalorder 2, %s13
    // Predicated region
    $region65: #{get_model_forward.6} parent=5 // pred_check
      %p1529 = pneg %p1528
    $region66: #{get_model_forward.6} parent=5 // pred_check_branch
      %1531 = sbr.rel (%p1529) target = $region68
    $region67: #{get_model_forward.6} parent=5 // pred_region
      %s1532 = ssub.s32 %s13, 2
      // Predicated region
      $region69: #{get_model_forward.6} parent=67 // pred_check
        %p1533 = pneg %p208
      $region70: #{get_model_forward.6} parent=67 // pred_check_branch
        %1535 = sbr.rel (%p1533) target = $region72
      $region71: #{get_model_forward.6} parent=67 // pred_region
        %p1536 = scmp.lt.s32.totalorder %s24, 1
        %s1537 = scalar_select %p1536, %s24, 1
        %s1538 = smul.addr %s1537, 8
        %s1539 = scalar_lea.vmem %s7, %s1538
      $region72: #{get_model_forward.6} parent=67 // pred_fallthru
        _
    $region68: #{get_model_forward.6} parent=5 // pred_fallthru
      _
  $region6: #{get_model_forward.6} parent=0 // loop_footer
    %s17 = sadd.s32 1, %s13
  $region7: #{get_model_forward.6} parent=0 // loop_footer_branch
    %12 = sbr.rel target = $region3
  $region8: #{get_model_forward.6} parent=0 // loop_exit
    _

// kernel: get_model_forward.7
$region0: #{get_model_forward.7}
  #allocation0 [shape = 'u32[]', space=smem, size = 0x4, offset = 0x4, fixed_abs, tag = 'smem constant byte address 0x4 - core index']
  #allocation1 [shape = 'u32[144,128]{1,0:T(1,128)}', space=vmem, size = 0x12000, scoped, tag = 'internal scratch']
  #allocation2 [shape = 'f32[8,1024]{1,0:T(8,128)}', space=vmem, size = 0x8000, scoped, tag = 'scratch operand']
  %s0 = inlined_call_operand.vmem [shape: bf16[2,32,128], index: 0, kind: input, shape index: {}]
  %s1 = inlined_call_operand.vmem [shape: bf16[2,128,128], index: 1, kind: input, shape index: {}]
  %s2 = inlined_call_operand.vmem [shape: f32[1,128], index: 2, kind: input, shape index: {}]
  %s3 = inlined_call_operand.vmem [shape: bf16[128,1024], index: 3, kind: input, shape index: {}]
  %s4 = inlined_call_operand.vmem [shape: f32[1,1024], index: 4, kind: input, shape index: {}]
  %s5 = inlined_call_operand.vmem [shape: f32[2,1,1024], index: 5, kind: output, shape index: {}]
  %s6 = sld [smem:[#allocation0]]
  $region65: #{get_model_forward.7} parent=0
    _
  %s8 = ssub.s32 1, %s6
  %s9 = scalar_select 0, %s8, %s6
  loop: start=0, step=1, limit=4
  $region2: #{get_model_forward.7} parent=0 // loop_pre_header
    _
  $region3: #{get_model_forward.7} parent=0 // loop_header
    %s11 = sphi 0, %s15
    %p12 = scmp.ge.s32.totalorder %s11, 4
    %s18 = sphi 0, %s30
    %s19 = sphi 0, %s26
    %s20 = sphi 0, %s18
    %s21 = sphi 0, %s19
    %s22 = sphi 0, %s20
    %s23 = sphi 0, %s21
    %s35 = sphi 0, %s37
    %s38 = sphi 0, %s35
    %s39 = sphi 0, %s38
    %s55 = sphi 0, %s39
    %s61 = sphi 0, %s63
    %s64 = sphi 0, %s61
    %s65 = sphi 0, %s64
    %s81 = sphi 0, %s65
    %s85 = sphi 0, %s85
    %s87 = sphi 0, %s85
    %s88 = sphi 0, %s87
    %s102 = sphi 0, %s88
    %s106 = sphi 0, %s106
    %s108 = sphi 0, %s106
    %s109 = sphi 0, %s108
    %s123 = sphi 0, %s109
    %s127 = sphi 0, %s127
    %s129 = sphi 0, %s127
    %s130 = sphi 0, %s129
    %s144 = sphi 0, %s130
    %s150 = sphi 0, %s152
    %s153 = sphi 0, %s150
    %s154 = sphi 0, %s153
    %s170 = sphi 0, %s154
  $region4: #{get_model_forward.7} parent=0 // loop_header_branch
    %14 = sbr.rel (%p12) target = $region8
  $region5: #{get_model_forward.7} parent=0 // loop_body
    %s16 = ssub.s32 %s11, 1
    %s17 = ssub.s32 %s11, 2
    %s24 = sadd.s32 1, %s19
    %p25 = scmp.ge.s32.totalorder %s24, 1
    %s26 = scalar_select %p25, 0, %s24
    %s27 = sadd.s32 1, %s18
    %s28 = scalar_select %p25, %s27, %s18
    %p29 = scmp.ge.s32.totalorder %s28, 2
    %s30 = scalar_select %p29, 0, %s28
    %s31 = ssub.s32 %s18, %s30
    %s32 = ssub.s32 %s19, %s26
    %s33 = sor.u32 %s31, %s32
    %p34 = scmp.eq.s32.totalorder %s33, 0
    %s36 = sadd.s32 %s35, 1
    %s37 = scalar_select %p34, %s35, %s36
    %p40 = pneg %p34
    %p41 = scmp.eq.s32.totalorder %s11, 1
    %p42 = por %p40, %p41
    %p43 = scmp.ne.s32.totalorder %s35, %s38
    %p44 = scmp.eq.s32.totalorder %s11, 0
    %p45 = por %p43, %p44
    %p46 = scmp.ne.s32.totalorder %s35, %s38
    %p47 = scmp.eq.s32.totalorder %s16, 1
    %p48 = por %p46, %p47
    %p49 = scmp.ne.s32.totalorder %s38, %s39
    %p50 = scmp.eq.s32.totalorder %s16, 0
    %p51 = por %p49, %p50
    %p52 = scmp.ne.s32.totalorder %s38, %s39
    %p53 = scmp.eq.s32.totalorder %s17, 1
    %p54 = por %p52, %p53
    %p56 = scmp.ne.s32.totalorder %s39, %s55
    %p57 = scmp.eq.s32.totalorder %s17, 0
    %p58 = por %p56, %p57
    %s59 = ssub.s32 %s18, %s30
    %p60 = scmp.eq.s32.totalorder %s59, 0
    %s62 = sadd.s32 %s61, 1
    %s63 = scalar_select %p60, %s61, %s62
    %p66 = pneg %p60
    %p67 = scmp.eq.s32.totalorder %s11, 1
    %p68 = por %p66, %p67
    %p69 = scmp.ne.s32.totalorder %s61, %s64
    %p70 = scmp.eq.s32.totalorder %s11, 0
    %p71 = por %p69, %p70
    %p72 = scmp.ne.s32.totalorder %s61, %s64
    %p73 = scmp.eq.s32.totalorder %s16, 1
    %p74 = por %p72, %p73
    %p75 = scmp.ne.s32.totalorder %s64, %s65
    %p76 = scmp.eq.s32.totalorder %s16, 0
    %p77 = por %p75, %p76
    %p78 = scmp.ne.s32.totalorder %s64, %s65
    %p79 = scmp.eq.s32.totalorder %s17, 1
    %p80 = por %p78, %p79
    %p82 = scmp.ne.s32.totalorder %s65, %s81
    %p83 = scmp.eq.s32.totalorder %s17, 0
    %p84 = por %p82, %p83
    %s86 = sadd.s32 %s85, 1
    %p89 = scmp.eq.s32.totalorder %s11, 1
    %p90 = scmp.ne.s32.totalorder %s85, %s87
    %p91 = scmp.eq.s32.totalorder %s11, 0
    %p92 = por %p90, %p91
    %p93 = scmp.ne.s32.totalorder %s85, %s87
    %p94 = scmp.eq.s32.totalorder %s16, 1
    %p95 = por %p93, %p94
    %p96 = scmp.ne.s32.totalorder %s87, %s88
    %p97 = scmp.eq.s32.totalorder %s16, 0
    %p98 = por %p96, %p97
    %p99 = scmp.ne.s32.totalorder %s87, %s88
    %p100 = scmp.eq.s32.totalorder %s17, 1
    %p101 = por %p99, %p100
    %p103 = scmp.ne.s32.totalorder %s88, %s102
    %p104 = scmp.eq.s32.totalorder %s17, 0
    %p105 = por %p103, %p104
    %s107 = sadd.s32 %s106, 1
    %p110 = scmp.eq.s32.totalorder %s11, 1
    %p111 = scmp.ne.s32.totalorder %s106, %s108
    %p112 = scmp.eq.s32.totalorder %s11, 0
    %p113 = por %p111, %p112
    %p114 = scmp.ne.s32.totalorder %s106, %s108
    %p115 = scmp.eq.s32.totalorder %s16, 1
    %p116 = por %p114, %p115
    %p117 = scmp.ne.s32.totalorder %s108, %s109
    %p118 = scmp.eq.s32.totalorder %s16, 0
    %p119 = por %p117, %p118
    %p120 = scmp.ne.s32.totalorder %s108, %s109
    %p121 = scmp.eq.s32.totalorder %s17, 1
    %p122 = por %p120, %p121
    %p124 = scmp.ne.s32.totalorder %s109, %s123
    %p125 = scmp.eq.s32.totalorder %s17, 0
    %p126 = por %p124, %p125
    %s128 = sadd.s32 %s127, 1
    %p131 = scmp.eq.s32.totalorder %s11, 1
    %p132 = scmp.ne.s32.totalorder %s127, %s129
    %p133 = scmp.eq.s32.totalorder %s11, 0
    %p134 = por %p132, %p133
    %p135 = scmp.ne.s32.totalorder %s127, %s129
    %p136 = scmp.eq.s32.totalorder %s16, 1
    %p137 = por %p135, %p136
    %p138 = scmp.ne.s32.totalorder %s129, %s130
    %p139 = scmp.eq.s32.totalorder %s16, 0
    %p140 = por %p138, %p139
    %p141 = scmp.ne.s32.totalorder %s129, %s130
    %p142 = scmp.eq.s32.totalorder %s17, 1
    %p143 = por %p141, %p142
    %p145 = scmp.ne.s32.totalorder %s130, %s144
    %p146 = scmp.eq.s32.totalorder %s17, 0
    %p147 = por %p145, %p146
    %s148 = ssub.s32 %s18, %s30
    %p149 = scmp.eq.s32.totalorder %s148, 0
    %s151 = sadd.s32 %s150, 1
    %s152 = scalar_select %p149, %s150, %s151
    %p155 = pneg %p149
    %p156 = scmp.eq.s32.totalorder %s11, 1
    %p157 = por %p155, %p156
    %p158 = scmp.ne.s32.totalorder %s150, %s153
    %p159 = scmp.eq.s32.totalorder %s11, 0
    %p160 = por %p158, %p159
    %p161 = scmp.ne.s32.totalorder %s150, %s153
    %p162 = scmp.eq.s32.totalorder %s16, 1
    %p163 = por %p161, %p162
    %p164 = scmp.ne.s32.totalorder %s153, %s154
    %p165 = scmp.eq.s32.totalorder %s16, 0
    %p166 = por %p164, %p165
    %p167 = scmp.ne.s32.totalorder %s153, %s154
    %p168 = scmp.eq.s32.totalorder %s17, 1
    %p169 = por %p167, %p168
    %p171 = scmp.ne.s32.totalorder %s154, %s170
    %p172 = scmp.eq.s32.totalorder %s17, 0
    %p173 = por %p171, %p172
    %p174 = scmp.le.s32.totalorder 1, %s11
    %p175 = scmp.lt.s32.totalorder %s11, 3
    %p176 = pnand %p174, %p175
    %p177 = pneg %p176
    // Predicated region
    $region9: #{get_model_forward.7} parent=5 // pred_check
      _
    $region10: #{get_model_forward.7} parent=5 // pred_check_branch
      %179 = sbr.rel (%p176) target = $region12
    $region11: #{get_model_forward.7} parent=5 // pred_region
      %s180 = ssub.s32 %s11, 1
      // Predicated region
      $region13: #{get_model_forward.7} parent=11 // pred_check
        %p181 = pneg %p98
      $region14: #{get_model_forward.7} parent=11 // pred_check_branch
        %183 = sbr.rel (%p181) target = $region16
      $region15: #{get_model_forward.7} parent=11 // pred_region
        _
      $region16: #{get_model_forward.7} parent=11 // pred_fallthru
        _
      // Predicated region
      $region17: #{get_model_forward.7} parent=11 // pred_check
        %p184 = pneg %p119
      $region18: #{get_model_forward.7} parent=11 // pred_check_branch
        %186 = sbr.rel (%p184) target = $region20
      $region19: #{get_model_forward.7} parent=11 // pred_region
        _
      $region20: #{get_model_forward.7} parent=11 // pred_fallthru
        _
      // Predicated region
      $region21: #{get_model_forward.7} parent=11 // pred_check
        %p187 = pneg %p140
      $region22: #{get_model_forward.7} parent=11 // pred_check_branch
        %189 = sbr.rel (%p187) target = $region24
      $region23: #{get_model_forward.7} parent=11 // pred_region
        _
      $region24: #{get_model_forward.7} parent=11 // pred_fallthru
        _
    $region12: #{get_model_forward.7} parent=5 // pred_fallthru
      _
    %p190 = scmp.lt.s32.totalorder %s11, 2
    // Predicated region
    $region25: #{get_model_forward.7} parent=5 // pred_check
      %p191 = pneg %p190
    $region26: #{get_model_forward.7} parent=5 // pred_check_branch
      %193 = sbr.rel (%p191) target = $region28
    $region27: #{get_model_forward.7} parent=5 // pred_region
      // Predicated region
      $region29: #{get_model_forward.7} parent=27 // pred_check
        %p194 = pneg %p45
      $region30: #{get_model_forward.7} parent=27 // pred_check_branch
        %196 = sbr.rel (%p194) target = $region32
      $region31: #{get_model_forward.7} parent=27 // pred_region
        %s197 = smul.u32 4, %s19
        %p198 = scmp.lt.s32.totalorder %s18, 1
        %s199 = scalar_select %p198, %s18, 1
        %p200 = scmp.lt.s32.totalorder %s197, 3
        %s201 = scalar_select %p200, %s197, 3
        %s202 = smul.addr %s199, 4
        %s203 = sadd.s32 %s201, %s202
        %s204 = smul.addr %s203, 4
        %s205 = scalar_lea.vmem %s0, %s204
        %s206 = smul.u32 4, %s19
      $region32: #{get_model_forward.7} parent=27 // pred_fallthru
        _
      // Predicated region
      $region33: #{get_model_forward.7} parent=27 // pred_check
        %p207 = pneg %p71
      $region34: #{get_model_forward.7} parent=27 // pred_check_branch
        %209 = sbr.rel (%p207) target = $region36
      $region35: #{get_model_forward.7} parent=27 // pred_region
        %p210 = scmp.lt.s32.totalorder %s18, 1
        %s211 = scalar_select %p210, %s18, 1
        %s212 = smul.addr %s211, 16
        %s213 = smul.addr %s212, 4
        %s214 = scalar_lea.vmem %s1, %s213
      $region36: #{get_model_forward.7} parent=27 // pred_fallthru
        _
    $region28: #{get_model_forward.7} parent=5 // pred_fallthru
      _
    %p215 = scmp.le.s32.totalorder 1, %s11
    %p216 = scmp.lt.s32.totalorder %s11, 3
    %p217 = pnand %p215, %p216
    %p218 = pneg %p217
    // Predicated region
    $region37: #{get_model_forward.7} parent=5 // pred_check
      _
    $region38: #{get_model_forward.7} parent=5 // pred_check_branch
      %220 = sbr.rel (%p217) target = $region40
    $region39: #{get_model_forward.7} parent=5 // pred_region
      %s221 = ssub.s32 %s11, 1
      %s222 = smul.u32 4, %s21
      %p223 = scmp.lt.s32.totalorder %s20, 1
      %s224 = scalar_select %p223, %s20, 1
      %p225 = scmp.lt.s32.totalorder %s222, 3
      %s226 = scalar_select %p225, %s222, 3
      %s227 = smul.addr %s224, 4
      %s228 = sadd.s32 %s226, %s227
      %s229 = smul.addr %s228, 4
      %s230 = scalar_lea.vmem %s0, %s229
      %p231 = pneg %p51
      %p232 = pneg %p48
      %p233 = scmp.lt.s32.totalorder %s20, 1
      %s234 = scalar_select %p233, %s20, 1
      %s235 = smul.addr %s234, 16
      %s236 = smul.addr %s235, 4
      %s237 = scalar_lea.vmem %s1, %s236
      %p238 = pneg %p77
      %p239 = pneg %p74
      %p240 = pneg %p98
      %p241 = pneg %p95
      %p242 = pneg %p119
      %p243 = pneg %p116
      %p244 = pneg %p140
      %p245 = pneg %p137
      %p246 = pneg %p166
      %p247 = pneg %p163
      %p248 = scmp.lt.s32.totalorder %s20, 1
      %s249 = scalar_select %p248, %s20, 1
      %s250 = smul.addr %s249, 8
      %s251 = scalar_lea.vmem %s5, %s250
      %s252 = smul.u32 4, %s21
      %p253 = scmp.lt.s32.totalorder %s20, 1
      %s254 = scalar_select %p253, %s20, 1
      %p255 = scmp.lt.s32.totalorder %s252, 3
      %s256 = scalar_select %p255, %s252, 3
      %s257 = smul.addr %s254, 4
      %s258 = sadd.s32 %s256, %s257
      %s259 = smul.addr %s258, 4
      %s260 = scalar_lea.vmem %s0, %s259
      %s261 = smul.u32 4, %s21
      %p262 = scmp.lt.s32.totalorder %s20, 1
      %s263 = scalar_select %p262, %s20, 1
      %s264 = smul.addr %s263, 16
      %s265 = smul.addr %s264, 4
      %s266 = scalar_lea.vmem %s1, %s265
      %p267 = scmp.lt.s32.totalorder %s20, 1
      %s268 = scalar_select %p267, %s20, 1
      %s269 = smul.addr %s268, 8
      %s270 = scalar_lea.vmem %s5, %s269
      %p272 = scmp.eq.s32.totalorder %s21, 0
      // Predicated region
      $region41: #{get_model_forward.7} parent=39 // pred_check
        %p273 = pneg %p272
      $region42: #{get_model_forward.7} parent=39 // pred_check_branch
        %275 = sbr.rel (%p273) target = $region44
      $region43: #{get_model_forward.7} parent=39 // pred_region
        %276 = vst [vmem:[#allocation2] sm:$0xff] -inf
        %277 = vst [vmem:[#allocation2 + $0x8] sm:$0xff] -inf
        %278 = vst [vmem:[#allocation2 + $0x10] sm:$0xff] -inf
        %279 = vst [vmem:[#allocation2 + $0x18] sm:$0xff] -inf
        %280 = vst [vmem:[#allocation2 + $0x20] sm:$0xff] -inf
        %281 = vst [vmem:[#allocation2 + $0x28] sm:$0xff] -inf
        %282 = vst [vmem:[#allocation2 + $0x30] sm:$0xff] -inf
        %283 = vst [vmem:[#allocation2 + $0x38] sm:$0xff] -inf
      $region44: #{get_model_forward.7} parent=39 // pred_fallthru
        _
      %v284 = vld [vmem:[%s260] sm:$0xf]
      %v285 = vld [vmem:[%s260 + $0x4] sm:$0xf]
      %v286 = vld [vmem:[%s260 + $0x8] sm:$0xf]
      %v287 = vld [vmem:[%s260 + $0xc] sm:$0xf]
      %v288 = vld [vmem:[%s266] sm:$0xf]
      %v289 = vld [vmem:[%s266 + $0x4] sm:$0xf]
      %v290 = vld [vmem:[%s266 + $0x8] sm:$0xf]
      %v291 = vld [vmem:[%s266 + $0xc] sm:$0xf]
      %v292 = vld [vmem:[%s266 + $0x10] sm:$0xf]
      %v293 = vld [vmem:[%s266 + $0x14] sm:$0xf]
      %v294 = vld [vmem:[%s266 + $0x18] sm:$0xf]
      %v295 = vld [vmem:[%s266 + $0x1c] sm:$0xf]
      %v296 = vld [vmem:[%s266 + $0x20] sm:$0xf]
      %v297 = vld [vmem:[%s266 + $0x24] sm:$0xf]
      %v298 = vld [vmem:[%s266 + $0x28] sm:$0xf]
      %v299 = vld [vmem:[%s266 + $0x2c] sm:$0xf]
      %v300 = vld [vmem:[%s266 + $0x30] sm:$0xf]
      %v301 = vld [vmem:[%s266 + $0x34] sm:$0xf]
      %v302 = vld [vmem:[%s266 + $0x38] sm:$0xf]
      %v303 = vld [vmem:[%s266 + $0x3c] sm:$0xf]
      %v304 = vld [vmem:[%s2] sm:$0x1]
      %v306 = vlaneseq
      %v307 = vshrl.u32 %v306, 7
      %v308 = vsub.s32 0, %v307
      %v309 = vrot.slane %v304, %v308
      %v315 = vunpack.c.l.b16 %v284
      %v316 = vunpack.c.l.b16 %v285
      %v317 = vunpack.c.l.b16 %v286
      %v318 = vunpack.c.l.b16 %v287
      %v319 = vpack.c.b16 %v316, %v315
      %v320 = vpack.c.b16 %v318, %v317
      %v339 = vunpack.c.l.b16 %v288
      %v340 = vunpack.c.l.b16 %v289
      %v341 = vunpack.c.l.b16 %v290
      %v342 = vunpack.c.l.b16 %v291
      %v343 = vunpack.c.l.b16 %v292
      %v344 = vunpack.c.l.b16 %v293
      %v345 = vunpack.c.l.b16 %v294
      %v346 = vunpack.c.l.b16 %v295
      %v347 = vunpack.c.l.b16 %v296
      %v348 = vunpack.c.l.b16 %v297
      %v349 = vunpack.c.l.b16 %v298
      %v350 = vunpack.c.l.b16 %v299
      %v351 = vunpack.c.l.b16 %v300
      %v352 = vunpack.c.l.b16 %v301
      %v353 = vunpack.c.l.b16 %v302
      %v354 = vunpack.c.l.b16 %v303
      %v355 = vpack.c.b16 %v340, %v339
      %v356 = vpack.c.b16 %v342, %v341
      %v357 = vpack.c.b16 %v344, %v343
      %v358 = vpack.c.b16 %v346, %v345
      %v359 = vpack.c.b16 %v348, %v347
      %v360 = vpack.c.b16 %v350, %v349
      %v361 = vpack.c.b16 %v352, %v351
      %v362 = vpack.c.b16 %v354, %v353
      %371 = vmatprep.subr.bf16.mxu0 0
      %372 = vmatpush1.bf16.msra.mxu0 %v355
      %373 = vmatprep.subr.bf16.mxu0 0
      %374 = vmatpush1.bf16.msra.mxu0 %v356
      %375 = vmatprep.subr.bf16.mxu0 0
      %376 = vmatpush1.bf16.msra.mxu0 %v357
      %377 = vmatprep.subr.bf16.mxu0 0
      %378 = vmatpush1.bf16.msra.mxu0 %v358
      %379 = vmatprep.subr.bf16.mxu0 0
      %380 = vmatpush1.bf16.msra.mxu0 %v359
      %381 = vmatprep.subr.bf16.mxu0 0
      %382 = vmatpush1.bf16.msra.mxu0 %v360
      %383 = vmatprep.subr.bf16.mxu0 0
      %384 = vmatpush1.bf16.msra.mxu0 %v361
      %385 = vmatprep.subr.bf16.mxu0 0
      %386 = vmatpush1.bf16.msra.mxu0 %v362
      %387 = vmatprep.subr.bf16.mxu0 0
      %388 = vmatpush1.bf16.msra.mxu0 0
      %389 = vmatprep.subr.bf16.mxu0 0
      %390 = vmatpush1.bf16.msra.mxu0 0
      %391 = vmatprep.subr.bf16.mxu0 0
      %392 = vmatpush1.bf16.msra.mxu0 0
      %393 = vmatprep.subr.bf16.mxu0 0
      %394 = vmatpush1.bf16.msra.mxu0 0
      %395 = vmatprep.subr.bf16.mxu0 0
      %396 = vmatpush1.bf16.msra.mxu0 0
      %397 = vmatprep.subr.bf16.mxu0 0
      %398 = vmatpush1.bf16.msra.mxu0 0
      %399 = vmatprep.subr.bf16.mxu0 0
      %400 = vmatpush1.bf16.msra.mxu0 0
      %401 = vmatprep.subr.bf16.mxu0 0
      %402 = vmatpush1.bf16.msra.mxu0 0
      %403 = vmatprep.mubr.bf16.mxu0 0
      %404 = vmatmul.mubr.bf16.gmra.mrb[0].mxu0 %v319
      %v405 = vpop.f32.mrb[0].mxu0
      %v406 = vadd.f32 %v309, %v405
      %v407 = vpop.f32.mrb[0].mxu0
      %v408 = vpop.f32.mrb[0].mxu0
      %v409 = vadd.f32 %v309, %v408
      %v410 = vpop.f32.mrb[0].mxu0
      %411 = vmatprep.mubr.bf16.mxu0 0
      %412 = vmatmul.mubr.bf16.gmra.mrb[0].mxu0 %v320
      %v413 = vpop.f32.mrb[0].mxu0
      %v414 = vadd.f32 %v309, %v413
      %v415 = vpop.f32.mrb[0].mxu0
      %v416 = vpop.f32.mrb[0].mxu0
      %v417 = vadd.f32 %v309, %v416
      %v418 = vpop.f32.mrb[0].mxu0
      %419 = vdwg.mxu0
      %v420 = vmax.f32 %v406, 0.0
      %v421 = vmax.f32 %v409, 0.0
      %v422 = vmax.f32 %v414, 0.0
      %v423 = vmax.f32 %v417, 0.0
      %v424 = vpack.c.bf16 %v421, %v420
      %v425 = vpack.c.bf16 %v423, %v422
      %v426 = vld [vmem:[%s3] sm:$0xff]
      %v427 = vld [vmem:[%s3 + $0x8] sm:$0xff]
      %v428 = vld [vmem:[%s3 + $0x10] sm:$0xff]
      %v429 = vld [vmem:[%s3 + $0x18] sm:$0xff]
      %v430 = vld [vmem:[%s3 + $0x20] sm:$0xff]
      %v431 = vld [vmem:[%s3 + $0x28] sm:$0xff]
      %v432 = vld [vmem:[%s3 + $0x30] sm:$0xff]
      %v433 = vld [vmem:[%s3 + $0x38] sm:$0xff]
      %v434 = vld [vmem:[%s3 + $0x40] sm:$0xff]
      %v435 = vld [vmem:[%s3 + $0x48] sm:$0xff]
      %v436 = vld [vmem:[%s3 + $0x50] sm:$0xff]
      %v437 = vld [vmem:[%s3 + $0x58] sm:$0xff]
      %v438 = vld [vmem:[%s3 + $0x60] sm:$0xff]
      %v439 = vld [vmem:[%s3 + $0x68] sm:$0xff]
      %v440 = vld [vmem:[%s3 + $0x70] sm:$0xff]
      %v441 = vld [vmem:[%s3 + $0x78] sm:$0xff]
      %v442 = vld [vmem:[%s3 + $0x80] sm:$0xff]
      %v443 = vld [vmem:[%s3 + $0x88] sm:$0xff]
      %v444 = vld [vmem:[%s3 + $0x90] sm:$0xff]
      %v445 = vld [vmem:[%s3 + $0x98] sm:$0xff]
      %v446 = vld [vmem:[%s3 + $0xa0] sm:$0xff]
      %v447 = vld [vmem:[%s3 + $0xa8] sm:$0xff]
      %v448 = vld [vmem:[%s3 + $0xb0] sm:$0xff]
      %v449 = vld [vmem:[%s3 + $0xb8] sm:$0xff]
      %v450 = vld [vmem:[%s3 + $0xc0] sm:$0xff]
      %v451 = vld [vmem:[%s3 + $0xc8] sm:$0xff]
      %v452 = vld [vmem:[%s3 + $0xd0] sm:$0xff]
      %v453 = vld [vmem:[%s3 + $0xd8] sm:$0xff]
      %v454 = vld [vmem:[%s3 + $0xe0] sm:$0xff]
      %v455 = vld [vmem:[%s3 + $0xe8] sm:$0xff]
      %v456 = vld [vmem:[%s3 + $0xf0] sm:$0xff]
      %v457 = vld [vmem:[%s3 + $0xf8] sm:$0xff]
      %v458 = vld [vmem:[%s3 + $0x100] sm:$0xff]
      %v459 = vld [vmem:[%s3 + $0x108] sm:$0xff]
      %v460 = vld [vmem:[%s3 + $0x110] sm:$0xff]
      %v461 = vld [vmem:[%s3 + $0x118] sm:$0xff]
      %v462 = vld [vmem:[%s3 + $0x120] sm:$0xff]
      %v463 = vld [vmem:[%s3 + $0x128] sm:$0xff]
      %v464 = vld [vmem:[%s3 + $0x130] sm:$0xff]
      %v465 = vld [vmem:[%s3 + $0x138] sm:$0xff]
      %v466 = vld [vmem:[%s3 + $0x140] sm:$0xff]
      %v467 = vld [vmem:[%s3 + $0x148] sm:$0xff]
      %v468 = vld [vmem:[%s3 + $0x150] sm:$0xff]
      %v469 = vld [vmem:[%s3 + $0x158] sm:$0xff]
      %v470 = vld [vmem:[%s3 + $0x160] sm:$0xff]
      %v471 = vld [vmem:[%s3 + $0x168] sm:$0xff]
      %v472 = vld [vmem:[%s3 + $0x170] sm:$0xff]
      %v473 = vld [vmem:[%s3 + $0x178] sm:$0xff]
      %v474 = vld [vmem:[%s3 + $0x180] sm:$0xff]
      %v475 = vld [vmem:[%s3 + $0x188] sm:$0xff]
      %v476 = vld [vmem:[%s3 + $0x190] sm:$0xff]
      %v477 = vld [vmem:[%s3 + $0x198] sm:$0xff]
      %v478 = vld [vmem:[%s3 + $0x1a0] sm:$0xff]
      %v479 = vld [vmem:[%s3 + $0x1a8] sm:$0xff]
      %v480 = vld [vmem:[%s3 + $0x1b0] sm:$0xff]
      %v481 = vld [vmem:[%s3 + $0x1b8] sm:$0xff]
      %v482 = vld [vmem:[%s3 + $0x1c0] sm:$0xff]
      %v483 = vld [vmem:[%s3 + $0x1c8] sm:$0xff]
      %v484 = vld [vmem:[%s3 + $0x1d0] sm:$0xff]
      %v485 = vld [vmem:[%s3 + $0x1d8] sm:$0xff]
      %v486 = vld [vmem:[%s3 + $0x1e0] sm:$0xff]
      %v487 = vld [vmem:[%s3 + $0x1e8] sm:$0xff]
      %v488 = vld [vmem:[%s3 + $0x1f0] sm:$0xff]
      %v489 = vld [vmem:[%s3 + $0x1f8] sm:$0xff]
      %v490 = vld [vmem:[%s4] sm:$0xff]
      %v492 = vlaneseq
      %v493 = vshrl.u32 %v492, 7
      %v494 = vsub.s32 0, %v493
      %v495 = vrot.slane %v490, %v494
      %v496 = vlaneseq
      %v497 = vshrl.u32 %v496, 7
      %v498 = vsub.s32 1, %v497
      %v499 = vrot.slane %v490, %v498
      %v500 = vlaneseq
      %v501 = vshrl.u32 %v500, 7
      %v502 = vsub.s32 2, %v501
      %v503 = vrot.slane %v490, %v502
      %v504 = vlaneseq
      %v505 = vshrl.u32 %v504, 7
      %v506 = vsub.s32 3, %v505
      %v507 = vrot.slane %v490, %v506
      %v508 = vlaneseq
      %v509 = vshrl.u32 %v508, 7
      %v510 = vsub.s32 4, %v509
      %v511 = vrot.slane %v490, %v510
      %v512 = vlaneseq
      %v513 = vshrl.u32 %v512, 7
      %v514 = vsub.s32 5, %v513
      %v515 = vrot.slane %v490, %v514
      %v516 = vlaneseq
      %v517 = vshrl.u32 %v516, 7
      %v518 = vsub.s32 6, %v517
      %v519 = vrot.slane %v490, %v518
      %v520 = vlaneseq
      %v521 = vshrl.u32 %v520, 7
      %v522 = vsub.s32 7, %v521
      %v523 = vrot.slane %v490, %v522
      %v596 = vunpack.c.l.b16 %v426
      %v597 = vunpack.c.h.b16 %v426
      %v598 = vunpack.c.l.b16 %v427
      %v599 = vunpack.c.h.b16 %v427
      %v600 = vunpack.c.l.b16 %v428
      %v601 = vunpack.c.h.b16 %v428
      %v602 = vunpack.c.l.b16 %v429
      %v603 = vunpack.c.h.b16 %v429
      %v604 = vunpack.c.l.b16 %v430
      %v605 = vunpack.c.h.b16 %v430
      %v606 = vunpack.c.l.b16 %v431
      %v607 = vunpack.c.h.b16 %v431
      %v608 = vunpack.c.l.b16 %v432
      %v609 = vunpack.c.h.b16 %v432
      %v610 = vunpack.c.l.b16 %v433
      %v611 = vunpack.c.h.b16 %v433
      %v612 = vunpack.c.l.b16 %v434
      %v613 = vunpack.c.h.b16 %v434
      %v614 = vunpack.c.l.b16 %v435
      %v615 = vunpack.c.h.b16 %v435
      %v616 = vunpack.c.l.b16 %v436
      %v617 = vunpack.c.h.b16 %v436
      %v618 = vunpack.c.l.b16 %v437
      %v619 = vunpack.c.h.b16 %v437
      %v620 = vunpack.c.l.b16 %v438
      %v621 = vunpack.c.h.b16 %v438
      %v622 = vunpack.c.l.b16 %v439
      %v623 = vunpack.c.h.b16 %v439
      %v624 = vunpack.c.l.b16 %v440
      %v625 = vunpack.c.h.b16 %v440
      %v626 = vunpack.c.l.b16 %v441
      %v627 = vunpack.c.h.b16 %v441
      %v628 = vunpack.c.l.b16 %v442
      %v629 = vunpack.c.h.b16 %v442
      %v630 = vunpack.c.l.b16 %v443
      %v631 = vunpack.c.h.b16 %v443
      %v632 = vunpack.c.l.b16 %v444
      %v633 = vunpack.c.h.b16 %v444
      %v634 = vunpack.c.l.b16 %v445
      %v635 = vunpack.c.h.b16 %v445
      %v636 = vunpack.c.l.b16 %v446
      %v637 = vunpack.c.h.b16 %v446
      %v638 = vunpack.c.l.b16 %v447
      %v639 = vunpack.c.h.b16 %v447
      %v640 = vunpack.c.l.b16 %v448
      %v641 = vunpack.c.h.b16 %v448
      %v642 = vunpack.c.l.b16 %v449
      %v643 = vunpack.c.h.b16 %v449
      %v644 = vunpack.c.l.b16 %v450
      %v645 = vunpack.c.h.b16 %v450
      %v646 = vunpack.c.l.b16 %v451
      %v647 = vunpack.c.h.b16 %v451
      %v648 = vunpack.c.l.b16 %v452
      %v649 = vunpack.c.h.b16 %v452
      %v650 = vunpack.c.l.b16 %v453
      %v651 = vunpack.c.h.b16 %v453
      %v652 = vunpack.c.l.b16 %v454
      %v653 = vunpack.c.h.b16 %v454
      %v654 = vunpack.c.l.b16 %v455
      %v655 = vunpack.c.h.b16 %v455
      %v656 = vunpack.c.l.b16 %v456
      %v657 = vunpack.c.h.b16 %v456
      %v658 = vunpack.c.l.b16 %v457
      %v659 = vunpack.c.h.b16 %v457
      %v660 = vunpack.c.l.b16 %v458
      %v661 = vunpack.c.h.b16 %v458
      %v662 = vunpack.c.l.b16 %v459
      %v663 = vunpack.c.h.b16 %v459
      %v664 = vunpack.c.l.b16 %v460
      %v665 = vunpack.c.h.b16 %v460
      %v666 = vunpack.c.l.b16 %v461
      %v667 = vunpack.c.h.b16 %v461
      %v668 = vunpack.c.l.b16 %v462
      %v669 = vunpack.c.h.b16 %v462
      %v670 = vunpack.c.l.b16 %v463
      %v671 = vunpack.c.h.b16 %v463
      %v672 = vunpack.c.l.b16 %v464
      %v673 = vunpack.c.h.b16 %v464
      %v674 = vunpack.c.l.b16 %v465
      %v675 = vunpack.c.h.b16 %v465
      %v676 = vunpack.c.l.b16 %v466
      %v677 = vunpack.c.h.b16 %v466
      %v678 = vunpack.c.l.b16 %v467
      %v679 = vunpack.c.h.b16 %v467
      %v680 = vunpack.c.l.b16 %v468
      %v681 = vunpack.c.h.b16 %v468
      %v682 = vunpack.c.l.b16 %v469
      %v683 = vunpack.c.h.b16 %v469
      %v684 = vunpack.c.l.b16 %v470
      %v685 = vunpack.c.h.b16 %v470
      %v686 = vunpack.c.l.b16 %v471
      %v687 = vunpack.c.h.b16 %v471
      %v688 = vunpack.c.l.b16 %v472
      %v689 = vunpack.c.h.b16 %v472
      %v690 = vunpack.c.l.b16 %v473
      %v691 = vunpack.c.h.b16 %v473
      %v692 = vunpack.c.l.b16 %v474
      %v693 = vunpack.c.h.b16 %v474
      %v694 = vunpack.c.l.b16 %v475
      %v695 = vunpack.c.h.b16 %v475
      %v696 = vunpack.c.l.b16 %v476
      %v697 = vunpack.c.h.b16 %v476
      %v698 = vunpack.c.l.b16 %v477
      %v699 = vunpack.c.h.b16 %v477
      %v700 = vunpack.c.l.b16 %v478
      %v701 = vunpack.c.h.b16 %v478
      %v702 = vunpack.c.l.b16 %v479
      %v703 = vunpack.c.h.b16 %v479
      %v704 = vunpack.c.l.b16 %v480
      %v705 = vunpack.c.h.b16 %v480
      %v706 = vunpack.c.l.b16 %v481
      %v707 = vunpack.c.h.b16 %v481
      %v708 = vunpack.c.l.b16 %v482
      %v709 = vunpack.c.h.b16 %v482
      %v710 = vunpack.c.l.b16 %v483
      %v711 = vunpack.c.h.b16 %v483
      %v712 = vunpack.c.l.b16 %v484
      %v713 = vunpack.c.h.b16 %v484
      %v714 = vunpack.c.l.b16 %v485
      %v715 = vunpack.c.h.b16 %v485
      %v716 = vunpack.c.l.b16 %v486
      %v717 = vunpack.c.h.b16 %v486
      %v718 = vunpack.c.l.b16 %v487
      %v719 = vunpack.c.h.b16 %v487
      %v720 = vunpack.c.l.b16 %v488
      %v721 = vunpack.c.h.b16 %v488
      %v722 = vunpack.c.l.b16 %v489
      %v723 = vunpack.c.h.b16 %v489
      %v724 = vpack.c.b16 %v604, %v596
      %v725 = vpack.c.b16 %v605, %v597
      %v726 = vpack.c.b16 %v606, %v598
      %v727 = vpack.c.b16 %v607, %v599
      %v728 = vpack.c.b16 %v608, %v600
      %v729 = vpack.c.b16 %v609, %v601
      %v730 = vpack.c.b16 %v610, %v602
      %v731 = vpack.c.b16 %v611, %v603
      %v732 = vpack.c.b16 %v620, %v612
      %v733 = vpack.c.b16 %v621, %v613
      %v734 = vpack.c.b16 %v622, %v614
      %v735 = vpack.c.b16 %v623, %v615
      %v736 = vpack.c.b16 %v624, %v616
      %v737 = vpack.c.b16 %v625, %v617
      %v738 = vpack.c.b16 %v626, %v618
      %v739 = vpack.c.b16 %v627, %v619
      %v740 = vpack.c.b16 %v636, %v628
      %v741 = vpack.c.b16 %v637, %v629
      %v742 = vpack.c.b16 %v638, %v630
      %v743 = vpack.c.b16 %v639, %v631
      %v744 = vpack.c.b16 %v640, %v632
      %v745 = vpack.c.b16 %v641, %v633
      %v746 = vpack.c.b16 %v642, %v634
      %v747 = vpack.c.b16 %v643, %v635
      %v748 = vpack.c.b16 %v652, %v644
      %v749 = vpack.c.b16 %v653, %v645
      %v750 = vpack.c.b16 %v654, %v646
      %v751 = vpack.c.b16 %v655, %v647
      %v752 = vpack.c.b16 %v656, %v648
      %v753 = vpack.c.b16 %v657, %v649
      %v754 = vpack.c.b16 %v658, %v650
      %v755 = vpack.c.b16 %v659, %v651
      %v756 = vpack.c.b16 %v668, %v660
      %v757 = vpack.c.b16 %v669, %v661
      %v758 = vpack.c.b16 %v670, %v662
      %v759 = vpack.c.b16 %v671, %v663
      %v760 = vpack.c.b16 %v672, %v664
      %v761 = vpack.c.b16 %v673, %v665
      %v762 = vpack.c.b16 %v674, %v666
      %v763 = vpack.c.b16 %v675, %v667
      %v764 = vpack.c.b16 %v684, %v676
      %v765 = vpack.c.b16 %v685, %v677
      %v766 = vpack.c.b16 %v686, %v678
      %v767 = vpack.c.b16 %v687, %v679
      %v768 = vpack.c.b16 %v688, %v680
      %v769 = vpack.c.b16 %v689, %v681
      %v770 = vpack.c.b16 %v690, %v682
      %v771 = vpack.c.b16 %v691, %v683
      %v772 = vpack.c.b16 %v700, %v692
      %v773 = vpack.c.b16 %v701, %v693
      %v774 = vpack.c.b16 %v702, %v694
      %v775 = vpack.c.b16 %v703, %v695
      %v776 = vpack.c.b16 %v704, %v696
      %v777 = vpack.c.b16 %v705, %v697
      %v778 = vpack.c.b16 %v706, %v698
      %v779 = vpack.c.b16 %v707, %v699
      %v780 = vpack.c.b16 %v716, %v708
      %v781 = vpack.c.b16 %v717, %v709
      %v782 = vpack.c.b16 %v718, %v710
      %v783 = vpack.c.b16 %v719, %v711
      %v784 = vpack.c.b16 %v720, %v712
      %v785 = vpack.c.b16 %v721, %v713
      %v786 = vpack.c.b16 %v722, %v714
      %v787 = vpack.c.b16 %v723, %v715
      %852 = vmatprep.subr.bf16.mxu0 %v725
      %853 = vmatpush1.bf16.msra.mxu0 %v724
      %854 = vmatprep.subr.bf16.mxu0 %v733
      %855 = vmatpush1.bf16.msra.mxu0 %v732
      %856 = vmatprep.subr.bf16.mxu0 %v741
      %857 = vmatpush1.bf16.msra.mxu0 %v740
      %858 = vmatprep.subr.bf16.mxu0 %v749
      %859 = vmatpush1.bf16.msra.mxu0 %v748
      %860 = vmatprep.subr.bf16.mxu0 %v757
      %861 = vmatpush1.bf16.msra.mxu0 %v756
      %862 = vmatprep.subr.bf16.mxu0 %v765
      %863 = vmatpush1.bf16.msra.mxu0 %v764
      %864 = vmatprep.subr.bf16.mxu0 %v773
      %865 = vmatpush1.bf16.msra.mxu0 %v772
      %866 = vmatprep.subr.bf16.mxu0 %v781
      %867 = vmatpush1.bf16.msra.mxu0 %v780
      %868 = vmatprep.subr.bf16.mxu0 0
      %869 = vmatpush1.bf16.msra.mxu0 0
      %870 = vmatprep.subr.bf16.mxu0 0
      %871 = vmatpush1.bf16.msra.mxu0 0
      %872 = vmatprep.subr.bf16.mxu0 0
      %873 = vmatpush1.bf16.msra.mxu0 0
      %874 = vmatprep.subr.bf16.mxu0 0
      %875 = vmatpush1.bf16.msra.mxu0 0
      %876 = vmatprep.subr.bf16.mxu0 0
      %877 = vmatpush1.bf16.msra.mxu0 0
      %878 = vmatprep.subr.bf16.mxu0 0
      %879 = vmatpush1.bf16.msra.mxu0 0
      %880 = vmatprep.subr.bf16.mxu0 0
      %881 = vmatpush1.bf16.msra.mxu0 0
      %882 = vmatprep.subr.bf16.mxu0 0
      %883 = vmatpush1.bf16.msra.mxu0 0
      %884 = vmatprep.mubr.bf16.mxu0 0
      %885 = vmatmul.mubr.bf16.gmra.mrb[0].mxu0 %v424
      %v886 = vpop.f32.mrb[0].mxu0
      %v887 = vadd.f32 %v495, %v886
      %v888 = vpop.f32.mrb[0].mxu0
      %v889 = vadd.f32 %v499, %v888
      %v890 = vpop.f32.mrb[0].mxu0
      %v891 = vadd.f32 %v495, %v890
      %v892 = vpop.f32.mrb[0].mxu0
      %v893 = vadd.f32 %v499, %v892
      %894 = vmatprep.mubr.bf16.mxu0 0
      %895 = vmatmul.mubr.bf16.gmra.mrb[0].mxu0 %v425
      %v896 = vpop.f32.mrb[0].mxu0
      %v897 = vadd.f32 %v495, %v896
      %v898 = vpop.f32.mrb[0].mxu0
      %v899 = vadd.f32 %v499, %v898
      %v900 = vpop.f32.mrb[0].mxu0
      %v901 = vadd.f32 %v495, %v900
      %v902 = vpop.f32.mrb[0].mxu0
      %v903 = vadd.f32 %v499, %v902
      %904 = vdwg.mxu0
      %905 = vmatprep.subr.bf16.mxu0 %v727
      %906 = vmatpush1.bf16.msra.mxu0 %v726
      %907 = vmatprep.subr.bf16.mxu0 %v735
      %908 = vmatpush1.bf16.msra.mxu0 %v734
      %909 = vmatprep.subr.bf16.mxu0 %v743
      %910 = vmatpush1.bf16.msra.mxu0 %v742
      %911 = vmatprep.subr.bf16.mxu0 %v751
      %912 = vmatpush1.bf16.msra.mxu0 %v750
      %913 = vmatprep.subr.bf16.mxu0 %v759
      %914 = vmatpush1.bf16.msra.mxu0 %v758
      %915 = vmatprep.subr.bf16.mxu0 %v767
      %916 = vmatpush1.bf16.msra.mxu0 %v766
      %917 = vmatprep.subr.bf16.mxu0 %v775
      %918 = vmatpush1.bf16.msra.mxu0 %v774
      %919 = vmatprep.subr.bf16.mxu0 %v783
      %920 = vmatpush1.bf16.msra.mxu0 %v782
      %921 = vmatprep.subr.bf16.mxu0 0
      %922 = vmatpush1.bf16.msra.mxu0 0
      %923 = vmatprep.subr.bf16.mxu0 0
      %924 = vmatpush1.bf16.msra.mxu0 0
      %925 = vmatprep.subr.bf16.mxu0 0
      %926 = vmatpush1.bf16.msra.mxu0 0
      %927 = vmatprep.subr.bf16.mxu0 0
      %928 = vmatpush1.bf16.msra.mxu0 0
      %929 = vmatprep.subr.bf16.mxu0 0
      %930 = vmatpush1.bf16.msra.mxu0 0
      %931 = vmatprep.subr.bf16.mxu0 0
      %932 = vmatpush1.bf16.msra.mxu0 0
      %933 = vmatprep.subr.bf16.mxu0 0
      %934 = vmatpush1.bf16.msra.mxu0 0
      %935 = vmatprep.subr.bf16.mxu0 0
      %936 = vmatpush1.bf16.msra.mxu0 0
      %937 = vmatprep.mubr.bf16.mxu0 0
      %938 = vmatmul.mubr.bf16.gmra.mrb[0].mxu0 %v424
      %v939 = vpop.f32.mrb[0].mxu0
      %v940 = vadd.f32 %v503, %v939
      %v941 = vpop.f32.mrb[0].mxu0
      %v942 = vadd.f32 %v507, %v941
      %v943 = vpop.f32.mrb[0].mxu0
      %v944 = vadd.f32 %v503, %v943
      %v945 = vpop.f32.mrb[0].mxu0
      %v946 = vadd.f32 %v507, %v945
      %947 = vmatprep.mubr.bf16.mxu0 0
      %948 = vmatmul.mubr.bf16.gmra.mrb[0].mxu0 %v425
      %v949 = vpop.f32.mrb[0].mxu0
      %v950 = vadd.f32 %v503, %v949
      %v951 = vpop.f32.mrb[0].mxu0
      %v952 = vadd.f32 %v507, %v951
      %v953 = vpop.f32.mrb[0].mxu0
      %v954 = vadd.f32 %v503, %v953
      %v955 = vpop.f32.mrb[0].mxu0
      %v956 = vadd.f32 %v507, %v955
      %957 = vdwg.mxu0
      %958 = vmatprep.subr.bf16.mxu0 %v729
      %959 = vmatpush1.bf16.msra.mxu0 %v728
      %960 = vmatprep.subr.bf16.mxu0 %v737
      %961 = vmatpush1.bf16.msra.mxu0 %v736
      %962 = vmatprep.subr.bf16.mxu0 %v745
      %963 = vmatpush1.bf16.msra.mxu0 %v744
      %964 = vmatprep.subr.bf16.mxu0 %v753
      %965 = vmatpush1.bf16.msra.mxu0 %v752
      %966 = vmatprep.subr.bf16.mxu0 %v761
      %967 = vmatpush1.bf16.msra.mxu0 %v760
      %968 = vmatprep.subr.bf16.mxu0 %v769
      %969 = vmatpush1.bf16.msra.mxu0 %v768
      %970 = vmatprep.subr.bf16.mxu0 %v777
      %971 = vmatpush1.bf16.msra.mxu0 %v776
      %972 = vmatprep.subr.bf16.mxu0 %v785
      %973 = vmatpush1.bf16.msra.mxu0 %v784
      %974 = vmatprep.subr.bf16.mxu0 0
      %975 = vmatpush1.bf16.msra.mxu0 0
      %976 = vmatprep.subr.bf16.mxu0 0
      %977 = vmatpush1.bf16.msra.mxu0 0
      %978 = vmatprep.subr.bf16.mxu0 0
      %979 = vmatpush1.bf16.msra.mxu0 0
      %980 = vmatprep.subr.bf16.mxu0 0
      %981 = vmatpush1.bf16.msra.mxu0 0
      %982 = vmatprep.subr.bf16.mxu0 0
      %983 = vmatpush1.bf16.msra.mxu0 0
      %984 = vmatprep.subr.bf16.mxu0 0
      %985 = vmatpush1.bf16.msra.mxu0 0
      %986 = vmatprep.subr.bf16.mxu0 0
      %987 = vmatpush1.bf16.msra.mxu0 0
      %988 = vmatprep.subr.bf16.mxu0 0
      %989 = vmatpush1.bf16.msra.mxu0 0
      %990 = vmatprep.mubr.bf16.mxu0 0
      %991 = vmatmul.mubr.bf16.gmra.mrb[0].mxu0 %v424
      %v992 = vpop.f32.mrb[0].mxu0
      %v993 = vadd.f32 %v511, %v992
      %v994 = vpop.f32.mrb[0].mxu0
      %v995 = vadd.f32 %v515, %v994
      %v996 = vpop.f32.mrb[0].mxu0
      %v997 = vadd.f32 %v511, %v996
      %v998 = vpop.f32.mrb[0].mxu0
      %v999 = vadd.f32 %v515, %v998
      %1000 = vmatprep.mubr.bf16.mxu0 0
      %1001 = vmatmul.mubr.bf16.gmra.mrb[0].mxu0 %v425
      %v1002 = vpop.f32.mrb[0].mxu0
      %v1003 = vadd.f32 %v511, %v1002
      %v1004 = vpop.f32.mrb[0].mxu0
      %v1005 = vadd.f32 %v515, %v1004
      %v1006 = vpop.f32.mrb[0].mxu0
      %v1007 = vadd.f32 %v511, %v1006
      %v1008 = vpop.f32.mrb[0].mxu0
      %v1009 = vadd.f32 %v515, %v1008
      %1010 = vdwg.mxu0
      %1011 = vmatprep.subr.bf16.mxu0 %v731
      %1012 = vmatpush1.bf16.msra.mxu0 %v730
      %1013 = vmatprep.subr.bf16.mxu0 %v739
      %1014 = vmatpush1.bf16.msra.mxu0 %v738
      %1015 = vmatprep.subr.bf16.mxu0 %v747
      %1016 = vmatpush1.bf16.msra.mxu0 %v746
      %1017 = vmatprep.subr.bf16.mxu0 %v755
      %1018 = vmatpush1.bf16.msra.mxu0 %v754
      %1019 = vmatprep.subr.bf16.mxu0 %v763
      %1020 = vmatpush1.bf16.msra.mxu0 %v762
      %1021 = vmatprep.subr.bf16.mxu0 %v771
      %1022 = vmatpush1.bf16.msra.mxu0 %v770
      %1023 = vmatprep.subr.bf16.mxu0 %v779
      %1024 = vmatpush1.bf16.msra.mxu0 %v778
      %1025 = vmatprep.subr.bf16.mxu0 %v787
      %1026 = vmatpush1.bf16.msra.mxu0 %v786
      %1027 = vmatprep.subr.bf16.mxu0 0
      %1028 = vmatpush1.bf16.msra.mxu0 0
      %1029 = vmatprep.subr.bf16.mxu0 0
      %1030 = vmatpush1.bf16.msra.mxu0 0
      %1031 = vmatprep.subr.bf16.mxu0 0
      %1032 = vmatpush1.bf16.msra.mxu0 0
      %1033 = vmatprep.subr.bf16.mxu0 0
      %1034 = vmatpush1.bf16.msra.mxu0 0
      %1035 = vmatprep.subr.bf16.mxu0 0
      %1036 = vmatpush1.bf16.msra.mxu0 0
      %1037 = vmatprep.subr.bf16.mxu0 0
      %1038 = vmatpush1.bf16.msra.mxu0 0
      %1039 = vmatprep.subr.bf16.mxu0 0
      %1040 = vmatpush1.bf16.msra.mxu0 0
      %1041 = vmatprep.subr.bf16.mxu0 0
      %1042 = vmatpush1.bf16.msra.mxu0 0
      %1043 = vmatprep.mubr.bf16.mxu0 0
      %1044 = vmatmul.mubr.bf16.gmra.mrb[0].mxu0 %v424
      %v1045 = vpop.f32.mrb[0].mxu0
      %v1046 = vadd.f32 %v519, %v1045
      %v1047 = vpop.f32.mrb[0].mxu0
      %v1048 = vadd.f32 %v523, %v1047
      %v1049 = vpop.f32.mrb[0].mxu0
      %v1050 = vadd.f32 %v519, %v1049
      %v1051 = vpop.f32.mrb[0].mxu0
      %v1052 = vadd.f32 %v523, %v1051
      %1053 = vmatprep.mubr.bf16.mxu0 0
      %1054 = vmatmul.mubr.bf16.gmra.mrb[0].mxu0 %v425
      %v1055 = vpop.f32.mrb[0].mxu0
      %v1056 = vadd.f32 %v519, %v1055
      %v1057 = vpop.f32.mrb[0].mxu0
      %v1058 = vadd.f32 %v523, %v1057
      %v1059 = vpop.f32.mrb[0].mxu0
      %v1060 = vadd.f32 %v519, %v1059
      %v1061 = vpop.f32.mrb[0].mxu0
      %v1062 = vadd.f32 %v523, %v1061
      %1063 = vdwg.mxu0
      %p1064 = scmp.ne.s32.totalorder %s21, 0
      // Predicated region
      $region45: #{get_model_forward.7} parent=39 // pred_check
        %p1065 = pneg %p1064
      $region46: #{get_model_forward.7} parent=39 // pred_check_branch
        %1067 = sbr.rel (%p1065) target = $region48
      $region47: #{get_model_forward.7} parent=39 // pred_region
        %v1068 = vld [vmem:[#allocation2] sm:$0xff]
        %v1069 = vld [vmem:[#allocation2 + $0x8] sm:$0xff]
        %v1070 = vld [vmem:[#allocation2 + $0x10] sm:$0xff]
        %v1071 = vld [vmem:[#allocation2 + $0x18] sm:$0xff]
        %v1072 = vld [vmem:[#allocation2 + $0x20] sm:$0xff]
        %v1073 = vld [vmem:[#allocation2 + $0x28] sm:$0xff]
        %v1074 = vld [vmem:[#allocation2 + $0x30] sm:$0xff]
        %v1075 = vld [vmem:[#allocation2 + $0x38] sm:$0xff]
        %v1076 = vmax.f32 %v887, %v891
        %v1077 = vmax.f32 %v889, %v893
        %v1078 = vmax.f32 %v940, %v944
        %v1079 = vmax.f32 %v942, %v946
        %v1080 = vmax.f32 %v993, %v997
        %v1081 = vmax.f32 %v995, %v999
        %v1082 = vmax.f32 %v1046, %v1050
        %v1083 = vmax.f32 %v1048, %v1052
        %v1084 = vmax.f32 %v1076, %v897
        %v1085 = vmax.f32 %v1077, %v899
        %v1086 = vmax.f32 %v1078, %v950
        %v1087 = vmax.f32 %v1079, %v952
        %v1088 = vmax.f32 %v1080, %v1003
        %v1089 = vmax.f32 %v1081, %v1005
        %v1090 = vmax.f32 %v1082, %v1056
        %v1091 = vmax.f32 %v1083, %v1058
        %v1092 = vmax.f32 %v1084, %v901
        %v1093 = vmax.f32 %v1085, %v903
        %v1094 = vmax.f32 %v1086, %v954
        %v1095 = vmax.f32 %v1087, %v956
        %v1096 = vmax.f32 %v1088, %v1007
        %v1097 = vmax.f32 %v1089, %v1009
        %v1098 = vmax.f32 %v1090, %v1060
        %v1099 = vmax.f32 %v1091, %v1062
        %v1100 = vmax.f32 %v1068, %v1092
        %v1101 = vmax.f32 %v1069, %v1093
        %v1102 = vmax.f32 %v1070, %v1094
        %v1103 = vmax.f32 %v1071, %v1095
        %v1104 = vmax.f32 %v1072, %v1096
        %v1105 = vmax.f32 %v1073, %v1097
        %v1106 = vmax.f32 %v1074, %v1098
        %v1107 = vmax.f32 %v1075, %v1099
        %1108 = vst [vmem:[#allocation2] sm:$0xff] %v1100
        %1109 = vst [vmem:[#allocation2 + $0x8] sm:$0xff] %v1101
        %1110 = vst [vmem:[#allocation2 + $0x10] sm:$0xff] %v1102
        %1111 = vst [vmem:[#allocation2 + $0x18] sm:$0xff] %v1103
        %1112 = vst [vmem:[#allocation2 + $0x20] sm:$0xff] %v1104
        %1113 = vst [vmem:[#allocation2 + $0x28] sm:$0xff] %v1105
        %1114 = vst [vmem:[#allocation2 + $0x30] sm:$0xff] %v1106
        %1115 = vst [vmem:[#allocation2 + $0x38] sm:$0xff] %v1107
      $region48: #{get_model_forward.7} parent=39 // pred_fallthru
        _
      // Predicated region
      $region49: #{get_model_forward.7} parent=39 // pred_check
        %p1116 = pneg %p272
      $region50: #{get_model_forward.7} parent=39 // pred_check_branch
        %1118 = sbr.rel (%p1116) target = $region52
      $region51: #{get_model_forward.7} parent=39 // pred_region
        %v1119 = vlaneseq
        %v1120 = vshrl.u32 %v1119, 7
        %v1121 = vadd.s32 %v1120, 8
        %v1122 = vadd.s32 %v1120, 16
        %v1123 = vadd.s32 %v1120, 24
        %s1124 = smul.u32 %s21, 32
        %v1125 = vstv %s1124
        %v1126 = vadd.s32 %v1120, %v1125
        %v1127 = vadd.s32 %v1121, %v1125
        %v1128 = vadd.s32 %v1122, %v1125
        %v1129 = vadd.s32 %v1123, %v1125
        %vm1130 = vcmp.lt.s32.totalorder %v1126, 30
        %vm1131 = vcmp.lt.s32.totalorder %v1127, 30
        %vm1132 = vcmp.lt.s32.totalorder %v1128, 30
        %vm1133 = vcmp.lt.s32.totalorder %v1129, 30
        %v1134 = vsel %vm1130, %v887, -inf
        %v1135 = vsel %vm1130, %v889, -inf
        %v1136 = vsel %vm1130, %v940, -inf
        %v1137 = vsel %vm1130, %v942, -inf
        %v1138 = vsel %vm1130, %v993, -inf
        %v1139 = vsel %vm1130, %v995, -inf
        %v1140 = vsel %vm1130, %v1046, -inf
        %v1141 = vsel %vm1130, %v1048, -inf
        %v1142 = vsel %vm1131, %v891, -inf
        %v1143 = vsel %vm1131, %v893, -inf
        %v1144 = vsel %vm1131, %v944, -inf
        %v1145 = vsel %vm1131, %v946, -inf
        %v1146 = vsel %vm1131, %v997, -inf
        %v1147 = vsel %vm1131, %v999, -inf
        %v1148 = vsel %vm1131, %v1050, -inf
        %v1149 = vsel %vm1131, %v1052, -inf
        %v1150 = vsel %vm1132, %v897, -inf
        %v1151 = vsel %vm1132, %v899, -inf
        %v1152 = vsel %vm1132, %v950, -inf
        %v1153 = vsel %vm1132, %v952, -inf
        %v1154 = vsel %vm1132, %v1003, -inf
        %v1155 = vsel %vm1132, %v1005, -inf
        %v1156 = vsel %vm1132, %v1056, -inf
        %v1157 = vsel %vm1132, %v1058, -inf
        %v1158 = vsel %vm1133, %v901, -inf
        %v1159 = vsel %vm1133, %v903, -inf
        %v1160 = vsel %vm1133, %v954, -inf
        %v1161 = vsel %vm1133, %v956, -inf
        %v1162 = vsel %vm1133, %v1007, -inf
        %v1163 = vsel %vm1133, %v1009, -inf
        %v1164 = vsel %vm1133, %v1060, -inf
        %v1165 = vsel %vm1133, %v1062, -inf
        %v1166 = vld [vmem:[#allocation2] sm:$0xff]
        %v1167 = vld [vmem:[#allocation2 + $0x8] sm:$0xff]
        %v1168 = vld [vmem:[#allocation2 + $0x10] sm:$0xff]
        %v1169 = vld [vmem:[#allocation2 + $0x18] sm:$0xff]
        %v1170 = vld [vmem:[#allocation2 + $0x20] sm:$0xff]
        %v1171 = vld [vmem:[#allocation2 + $0x28] sm:$0xff]
        %v1172 = vld [vmem:[#allocation2 + $0x30] sm:$0xff]
        %v1173 = vld [vmem:[#allocation2 + $0x38] sm:$0xff]
        %v1174 = vmax.f32 %v1134, %v1142
        %v1175 = vmax.f32 %v1135, %v1143
        %v1176 = vmax.f32 %v1136, %v1144
        %v1177 = vmax.f32 %v1137, %v1145
        %v1178 = vmax.f32 %v1138, %v1146
        %v1179 = vmax.f32 %v1139, %v1147
        %v1180 = vmax.f32 %v1140, %v1148
        %v1181 = vmax.f32 %v1141, %v1149
        %v1182 = vmax.f32 %v1174, %v1150
        %v1183 = vmax.f32 %v1175, %v1151
        %v1184 = vmax.f32 %v1176, %v1152
        %v1185 = vmax.f32 %v1177, %v1153
        %v1186 = vmax.f32 %v1178, %v1154
        %v1187 = vmax.f32 %v1179, %v1155
        %v1188 = vmax.f32 %v1180, %v1156
        %v1189 = vmax.f32 %v1181, %v1157
        %v1190 = vmax.f32 %v1182, %v1158
        %v1191 = vmax.f32 %v1183, %v1159
        %v1192 = vmax.f32 %v1184, %v1160
        %v1193 = vmax.f32 %v1185, %v1161
        %v1194 = vmax.f32 %v1186, %v1162
        %v1195 = vmax.f32 %v1187, %v1163
        %v1196 = vmax.f32 %v1188, %v1164
        %v1197 = vmax.f32 %v1189, %v1165
        %v1198 = vmax.f32 %v1166, %v1190
        %v1199 = vmax.f32 %v1167, %v1191
        %v1200 = vmax.f32 %v1168, %v1192
        %v1201 = vmax.f32 %v1169, %v1193
        %v1202 = vmax.f32 %v1170, %v1194
        %v1203 = vmax.f32 %v1171, %v1195
        %v1204 = vmax.f32 %v1172, %v1196
        %v1205 = vmax.f32 %v1173, %v1197
        %1206 = vst [vmem:[#allocation2] sm:$0xff] %v1198
        %1207 = vst [vmem:[#allocation2 + $0x8] sm:$0xff] %v1199
        %1208 = vst [vmem:[#allocation2 + $0x10] sm:$0xff] %v1200
        %1209 = vst [vmem:[#allocation2 + $0x18] sm:$0xff] %v1201
        %1210 = vst [vmem:[#allocation2 + $0x20] sm:$0xff] %v1202
        %1211 = vst [vmem:[#allocation2 + $0x28] sm:$0xff] %v1203
        %1212 = vst [vmem:[#allocation2 + $0x30] sm:$0xff] %v1204
        %1213 = vst [vmem:[#allocation2 + $0x38] sm:$0xff] %v1205
        %v1214 = vld [vmem:[#allocation2] sm:$0xff]
        %v1215 = vld [vmem:[#allocation2 + $0x8] sm:$0xff]
        %v1216 = vld [vmem:[#allocation2 + $0x10] sm:$0xff]
        %v1217 = vld [vmem:[#allocation2 + $0x18] sm:$0xff]
        %v1218 = vld [vmem:[#allocation2 + $0x20] sm:$0xff]
        %v1219 = vld [vmem:[#allocation2 + $0x28] sm:$0xff]
        %v1220 = vld [vmem:[#allocation2 + $0x30] sm:$0xff]
        %v1221 = vld [vmem:[#allocation2 + $0x38] sm:$0xff]
        %v1222 = vrot.slane %v1214, 4
        %v1223 = vmax.f32 %v1214, %v1222
        %v1224 = vrot.slane %v1223, 2
        %v1225 = vmax.f32 %v1223, %v1224
        %v1226 = vrot.slane %v1225, 1
        %v1227 = vmax.f32 %v1225, %v1226
        %v1228 = vrot.slane %v1215, 4
        %v1229 = vmax.f32 %v1215, %v1228
        %v1230 = vrot.slane %v1229, 2
        %v1231 = vmax.f32 %v1229, %v1230
        %v1232 = vrot.slane %v1231, 1
        %v1233 = vmax.f32 %v1231, %v1232
        %v1234 = vrot.slane %v1216, 4
        %v1235 = vmax.f32 %v1216, %v1234
        %v1236 = vrot.slane %v1235, 2
        %v1237 = vmax.f32 %v1235, %v1236
        %v1238 = vrot.slane %v1237, 1
        %v1239 = vmax.f32 %v1237, %v1238
        %v1240 = vrot.slane %v1217, 4
        %v1241 = vmax.f32 %v1217, %v1240
        %v1242 = vrot.slane %v1241, 2
        %v1243 = vmax.f32 %v1241, %v1242
        %v1244 = vrot.slane %v1243, 1
        %v1245 = vmax.f32 %v1243, %v1244
        %v1246 = vrot.slane %v1218, 4
        %v1247 = vmax.f32 %v1218, %v1246
        %v1248 = vrot.slane %v1247, 2
        %v1249 = vmax.f32 %v1247, %v1248
        %v1250 = vrot.slane %v1249, 1
        %v1251 = vmax.f32 %v1249, %v1250
        %v1252 = vrot.slane %v1219, 4
        %v1253 = vmax.f32 %v1219, %v1252
        %v1254 = vrot.slane %v1253, 2
        %v1255 = vmax.f32 %v1253, %v1254
        %v1256 = vrot.slane %v1255, 1
        %v1257 = vmax.f32 %v1255, %v1256
        %v1258 = vrot.slane %v1220, 4
        %v1259 = vmax.f32 %v1220, %v1258
        %v1260 = vrot.slane %v1259, 2
        %v1261 = vmax.f32 %v1259, %v1260
        %v1262 = vrot.slane %v1261, 1
        %v1263 = vmax.f32 %v1261, %v1262
        %v1264 = vrot.slane %v1221, 4
        %v1265 = vmax.f32 %v1221, %v1264
        %v1266 = vrot.slane %v1265, 2
        %v1267 = vmax.f32 %v1265, %v1266
        %v1268 = vrot.slane %v1267, 1
        %v1269 = vmax.f32 %v1267, %v1268
        %v1278 = vcombine.low %v1227, %v1233
        %v1279 = vcombine.low %v1239, %v1245
        %v1280 = vcombine.low %v1251, %v1257
        %v1281 = vcombine.low %v1263, %v1269
        %v1283 = vunpack.c.l.s4 1966171168
        %v1284 = vunpack.c.0.s8 %v1283
        %v1285 = vlaneseq
        %v1286 = vshrl.u32 %v1285, 7
        %v1287 = vsub.s32 %v1284, %v1286
        %v1288 = vrot.slane %v1278, %v1287
        %v1290 = vunpack.c.l.s4 1966171168
        %v1291 = vunpack.c.0.s8 %v1290
        %v1292 = vlaneseq
        %v1293 = vshrl.u32 %v1292, 7
        %v1294 = vsub.s32 %v1291, %v1293
        %v1295 = vrot.slane %v1279, %v1294
        %v1297 = vunpack.c.l.s4 1966171168
        %v1298 = vunpack.c.0.s8 %v1297
        %v1299 = vlaneseq
        %v1300 = vshrl.u32 %v1299, 7
        %v1301 = vsub.s32 %v1298, %v1300
        %v1302 = vrot.slane %v1280, %v1301
        %v1304 = vunpack.c.l.s4 1966171168
        %v1305 = vunpack.c.0.s8 %v1304
        %v1306 = vlaneseq
        %v1307 = vshrl.u32 %v1306, 7
        %v1308 = vsub.s32 %v1305, %v1307
        %v1309 = vrot.slane %v1281, %v1308
        %v1310 = vcombine.low %v1288, %v1295
        %v1311 = vcombine.low %v1302, %v1309
        %v1313 = vunpack.c.l.s4 1966171168
        %v1314 = vunpack.c.0.s8 %v1313
        %v1315 = vlaneseq
        %v1316 = vshrl.u32 %v1315, 7
        %v1317 = vsub.s32 %v1314, %v1316
        %v1318 = vrot.slane %v1310, %v1317
        %v1320 = vunpack.c.l.s4 1966171168
        %v1321 = vunpack.c.0.s8 %v1320
        %v1322 = vlaneseq
        %v1323 = vshrl.u32 %v1322, 7
        %v1324 = vsub.s32 %v1321, %v1323
        %v1325 = vrot.slane %v1311, %v1324
        %v1326 = vcombine.low %v1318, %v1325
        %1328 = vst [vmem:[%s270] sm:$0xff] %v1326
      $region52: #{get_model_forward.7} parent=39 // pred_fallthru
        _
      %p1329 = scmp.lt.s32.totalorder %s20, 1
      %s1330 = scalar_select %p1329, %s20, 1
      %s1331 = smul.addr %s1330, 8
      %s1332 = scalar_lea.vmem %s5, %s1331
      // Predicated region
      $region53: #{get_model_forward.7} parent=39 // pred_check
        %p1333 = pneg %p163
      $region54: #{get_model_forward.7} parent=39 // pred_check_branch
        %1335 = sbr.rel (%p1333) target = $region56
      $region55: #{get_model_forward.7} parent=39 // pred_region
        _
      $region56: #{get_model_forward.7} parent=39 // pred_fallthru
        _
    $region40: #{get_model_forward.7} parent=5 // pred_fallthru
      _
    %p1336 = scmp.le.s32.totalorder 2, %s11
    // Predicated region
    $region57: #{get_model_forward.7} parent=5 // pred_check
      %p1337 = pneg %p1336
    $region58: #{get_model_forward.7} parent=5 // pred_check_branch
      %1339 = sbr.rel (%p1337) target = $region60
    $region59: #{get_model_forward.7} parent=5 // pred_region
      %s1340 = ssub.s32 %s11, 2
      // Predicated region
      $region61: #{get_model_forward.7} parent=59 // pred_check
        %p1341 = pneg %p169
      $region62: #{get_model_forward.7} parent=59 // pred_check_branch
        %1343 = sbr.rel (%p1341) target = $region64
      $region63: #{get_model_forward.7} parent=59 // pred_region
        %p1344 = scmp.lt.s32.totalorder %s22, 1
        %s1345 = scalar_select %p1344, %s22, 1
        %s1346 = smul.addr %s1345, 8
        %s1347 = scalar_lea.vmem %s5, %s1346
      $region64: #{get_model_forward.7} parent=59 // pred_fallthru
        _
    $region60: #{get_model_forward.7} parent=5 // pred_fallthru
      _
  $region6: #{get_model_forward.7} parent=0 // loop_footer
    %s15 = sadd.s32 1, %s11
  $region7: #{get_model_forward.7} parent=0 // loop_footer_branch
    %10 = sbr.rel target = $region3
  $region8: #{get_model_forward.7} parent=0 // loop_exit
    _

</llo_original>
